<compile_context>
chip_gen: v7x
topology: tpu7x:2x2x1
jax: 0.10.0
libtpu: 0.0.40
codegen_flags: <defaults>
</compile_context>

<pallas_src>
import functools

import jax
import jax.numpy as jnp
from jax import lax
from jax.experimental import pallas as pl
from jax.experimental.pallas import tpu as pltpu


def _round_up(x, m):
    return ((x + m - 1) // m) * m


def _cdiv(a, b):
    return -(-a // b)


# ----------------------------------------------------------------------------
# Plain-JAX glue
# ----------------------------------------------------------------------------
def upsample_bilinear_align_corners(x_nhwc, out_h, out_w):
    """Bilinear upsample, align_corners=True (matches nn.Upsample semantics)."""
    n, h, w, c = x_nhwc.shape

    def coords(out_size, in_size):
        if out_size == 1:
            return jnp.zeros((out_size,), jnp.float32)
        return jnp.arange(out_size, dtype=jnp.float32) * ((in_size - 1) / (out_size - 1))

    ys = coords(out_h, h)
    xs = coords(out_w, w)
    y0 = jnp.clip(jnp.floor(ys).astype(jnp.int32), 0, h - 1)
    y1 = jnp.minimum(y0 + 1, h - 1)
    wy = (ys - y0.astype(jnp.float32))[None, :, None, None]
    x0 = jnp.clip(jnp.floor(xs).astype(jnp.int32), 0, w - 1)
    x1 = jnp.minimum(x0 + 1, w - 1)
    wx = (xs - x0.astype(jnp.float32))[None, None, :, None]

    rows0 = x_nhwc[:, y0]          # (N, out_h, W, C)
    rows1 = x_nhwc[:, y1]
    top = rows0[:, :, x0] * (1.0 - wx) + rows0[:, :, x1] * wx
    bot = rows1[:, :, x0] * (1.0 - wx) + rows1[:, :, x1] * wx
    return top * (1.0 - wy) + bot * wy


# ----------------------------------------------------------------------------
# Pallas kernels
# ----------------------------------------------------------------------------
def _conv_stats_kernel(a_ref, w_ref, s_ref, ss_ref, *, th, wrow, wout, hout,
                       need_mask):
    """One packed-K MXU matmul + masked BN partial statistics (no big output).

    a_ref: (th*wrow, 9*Cin)   - 3x3 taps pre-packed along K for this row tile
    w_ref: (9*Cin, Cout_p)    - packed weights, zero-padded to lane-dense Cout_p
    s_ref/ss_ref: (8, Cout_p) - per-tile masked sum / sum-of-squares
    """
    acc = jnp.dot(a_ref[...], w_ref[...], preferred_element_type=jnp.float32)
    if need_mask:
        m = acc.shape[0]
        p = lax.broadcasted_iota(jnp.int32, (m, 1), 0)
        row = pl.program_id(1) * th + p // wrow
        col = p % wrow
        mask = ((row < hout) & (col < wout)).astype(jnp.float32)
        acc = acc * mask                     # mask-multiply (no jnp.where)
    s_ref[...] = jnp.broadcast_to(jnp.sum(acc, axis=0, keepdims=True), s_ref.shape)
    ss_ref[...] = jnp.broadcast_to(jnp.sum(acc * acc, axis=0, keepdims=True),
                                   ss_ref.shape)


def _conv_bn_relu_kernel(a_ref, w_ref, scale_ref, shift_ref, o_ref, *, th, wrow,
                         wout, cout):
    """Recompute the conv for this tile, apply BN affine + ReLU, and store the
    unpadded (th, W_out, C_out) output block directly (no separate un-pad pass).
    """
    acc = jnp.dot(a_ref[...], w_ref[...], preferred_element_type=jnp.float32)
    y = jnp.maximum(acc * scale_ref[...] + shift_ref[...], 0.0)
    cout_p = y.shape[-1]
    if cout != cout_p:
        y = y[:, :cout]                      # drop lane-pad channels
    y = y.reshape(th, wrow, cout)
    if wout != wrow:
        y = y[:, :wout, :]                   # drop width-pad columns
    o_ref[...] = y.astype(o_ref.dtype)


# ----------------------------------------------------------------------------
# Generation-aware VMEM budget + tile-size selection
# ----------------------------------------------------------------------------
def _vmem_limits():
    """Returns (tile_budget_bytes, vmem_limit_bytes) for the current chip."""
    phys = 128 << 20
    try:
        phys = int(getattr(pltpu.get_tpu_info(), "vmem_capacity_bytes", phys))
    except Exception:
        pass
    if phys <= (64 << 20):          # v7x-class: 64 MiB physical per TensorCore
        return 20 << 20, 48 << 20
    return 32 << 20, 96 << 20       # v5e / v6e: 128 MiB physical


def _choose_tile_rows(out_h, out_w, wrow, kpack, cout_p, cout, n, budget):
    """Largest row tile (th) whose per-step working set fits the VMEM budget."""
    per_row = (wrow * (2 * 2 * kpack         # packed-A block, bf16, 2x buffers
                       + 4 * cout_p          # f32 matmul accumulator
                       + 4 * cout_p)         # epilogue temporaries / relayout
               + out_w * 4 * cout * 3)       # sliced value + 2x output buffers
    fixed = 2 * 2 * kpack * cout_p + (2 << 20)   # weights (2x buf) + headroom
    th = max(min((budget - fixed) // per_row, out_h), 1)
    if n == 1:                 # keep >= 2 grid steps so both v7x cores get work
        th = min(th, max(_cdiv(out_h, 2), 1))
    num_tiles = _cdiv(out_h, th)
    return int(th), int(num_tiles)


# ----------------------------------------------------------------------------
# up_conv forward
# ----------------------------------------------------------------------------
@functools.partial(jax.jit, static_argnames=("target_size", "compute_dtype"))
def up_conv_forward(x_nchw, conv_w, conv_b, gamma, beta, *, target_size=None,
                    eps=1e-5, compute_dtype=jnp.bfloat16):
    """x_nchw: (N, C_in, H, W).  Returns (N, C_out, H_out, W_out) float32."""
    del conv_b  # exactly cancelled by training-mode BatchNorm (pure mean shift)
    n, cin, h, w = x_nchw.shape
    cout = conv_w.shape[0]
    out_h, out_w = (2 * h, 2 * w) if target_size is None else target_size

    cout_p = _round_up(cout, 128)          # lane-dense channels for the MXU
    kpack = 9 * cin                        # 3x3 taps folded into K
    wrow = _round_up(out_w, 8)             # sublane-aligned output row width
    budget, vmem_limit = _vmem_limits()
    th, num_tiles = _choose_tile_rows(out_h, out_w, wrow, kpack, cout_p, cout,
                                      n, budget)
    hp = num_tiles * th
    m_tile = th * wrow
    need_mask = (wrow != out_w) or (hp != out_h)

    # 1) bilinear upsample (align_corners=True), NHWC, cast to bf16 before pad.
    # TODO(synk): fuse the 2x upsample + tap packing into the conv kernel (VPU
    # interp on a pre-upsample halo tile) to drop the remaining XLA prep passes.
    x_nhwc = jnp.transpose(x_nchw, (0, 2, 3, 1)).astype(jnp.float32)
    up = upsample_bilinear_align_corners(x_nhwc, out_h, out_w).astype(compute_dtype)

    # 2) zero-pad (conv pad=1 + tiling pad) and pre-pack the 3x3 taps along K:
    #    a_packed[b, r*wrow + c, (kh*3+kw)*cin : ...] = up_pad[b, r+kh, c+kw, :]
    # TODO(synk): for large ch_in (9*ch_in*2B comparable to ch_out*4B) switch to
    # a halo-tiled 9-tap kernel + bf16 conv intermediate instead of the 9x
    # packed-A blowup and duplicated conv FLOPs; packing wins only for small ch_in.
    up_pad = jnp.pad(up, ((0, 0), (1, hp + 1 - out_h), (1, wrow + 1 - out_w), (0, 0)))
    taps = [up_pad[:, kh:kh + hp, kw:kw + wrow, :]
            for kh in range(3) for kw in range(3)]
    a_packed = jnp.concatenate(taps, axis=-1).reshape(n, hp * wrow, kpack)

    # 3) weights: (Cout, Cin, 3, 3) -> (9*Cin, Cout_p), bf16, lane-dense Cout.
    w_packed = jnp.transpose(conv_w, (2, 3, 1, 0)).reshape(kpack, cout)
    w_packed = jnp.pad(w_packed, ((0, 0), (0, cout_p - cout))).astype(compute_dtype)

    grid = (n, num_tiles)
    a_spec = pl.BlockSpec((None, m_tile, kpack), lambda b, i: (b, i, 0))
    w_spec = pl.BlockSpec((kpack, cout_p), lambda b, i: (0, 0))
    mm_flops = 2 * n * num_tiles * m_tile * kpack * cout_p
    a_bytes = a_packed.size * a_packed.dtype.itemsize
    w_bytes = w_packed.size * w_packed.dtype.itemsize

    # 4) pass 1: conv (one packed-K matmul per tile) + masked BN partial stats.
    #    Only the tiny per-tile statistics hit HBM - no conv intermediate.
    s_part, ss_part = pl.pallas_call(
        functools.partial(_conv_stats_kernel, th=th, wrow=wrow, wout=out_w,
                          hout=out_h, need_mask=need_mask),
        out_shape=(
            jax.ShapeDtypeStruct((n, num_tiles, 8, cout_p), jnp.float32),
            jax.ShapeDtypeStruct((n, num_tiles, 8, cout_p), jnp.float32),
        ),
        grid=grid,
        in_specs=[a_spec, w_spec],
        out_specs=(
            pl.BlockSpec((None, None, 8, cout_p), lambda b, i: (b, i, 0, 0)),
            pl.BlockSpec((None, None, 8, cout_p), lambda b, i: (b, i, 0, 0)),
        ),
        compiler_params=pltpu.CompilerParams(
            dimension_semantics=("parallel", "parallel"),
            vmem_limit_bytes=vmem_limit),
        cost_estimate=pl.CostEstimate(
            flops=int(mm_flops), transcendentals=0,
            bytes_accessed=int(a_bytes + w_bytes
                               + 2 * n * num_tiles * 8 * cout_p * 4)),
    )(a_packed, w_packed)

    # 5) finalize BatchNorm statistics (training mode: batch stats, biased var).
    #    NOTE: E[x^2]-E[x]^2 in f32 is fine at this tolerance; switch to a
    #    shifted/Welford accumulation if it ever needs tightening.
    m_valid = jnp.float32(n * out_h * out_w)
    mean = jnp.sum(s_part[:, :, 0, :], axis=(0, 1)) / m_valid
    var = jnp.maximum(jnp.sum(ss_part[:, :, 0, :], axis=(0, 1)) / m_valid
                      - mean * mean, 0.0)
    gamma_p = jnp.pad(gamma.astype(jnp.float32), (0, cout_p - cout))
    beta_p = jnp.pad(beta.astype(jnp.float32), (0, cout_p - cout))
    scale = gamma_p * lax.rsqrt(var + eps)
    shift = beta_p - mean * scale

    # 6) pass 2: recompute the conv, apply BN affine + ReLU, and write the
    #    unpadded (N, hp, W_out, C_out) slab straight from the kernel.
    out_bytes = n * hp * out_w * cout * 4
    y = pl.pallas_call(
        functools.partial(_conv_bn_relu_kernel, th=th, wrow=wrow, wout=out_w,
                          cout=cout),
        out_shape=jax.ShapeDtypeStruct((n, hp, out_w, cout), jnp.float32),
        grid=grid,
        in_specs=[a_spec, w_spec,
                  pl.BlockSpec((1, cout_p), lambda b, i: (0, 0)),
                  pl.BlockSpec((1, cout_p), lambda b, i: (0, 0))],
        out_specs=pl.BlockSpec((None, th, out_w, cout), lambda b, i: (b, i, 0, 0)),
        compiler_params=pltpu.CompilerParams(
            dimension_semantics=("parallel", "parallel"),
            vmem_limit_bytes=vmem_limit),
        cost_estimate=pl.CostEstimate(
            flops=int(mm_flops + 3 * n * hp * wrow * cout_p),
            transcendentals=0,
            bytes_accessed=int(a_bytes + w_bytes + out_bytes)),
    )(a_packed, w_packed, scale.reshape(1, cout_p), shift.reshape(1, cout_p))

    # 7) drop the row-tiling pad (usually a no-op) and go NHWC -> NCHW.
    # TODO(synk): emit NCHW directly from the kernel (in-kernel XLU transpose)
    # to remove this last XLA transpose pass as well.
    if hp != out_h:
        y = y[:, :out_h]
    return jnp.transpose(y, (0, 3, 1, 2))


# ----------------------------------------------------------------------------
# pure-XLA reference (for a loose self-check)
# ----------------------------------------------------------------------------
def _reference_up_conv(x_nchw, conv_w, conv_b, gamma, beta, target_size, eps=1e-5):
    n, cin, h, w = x_nchw.shape
    out_h, out_w = (2 * h, 2 * w) if target_size is None else target_size
    x_nhwc = jnp.transpose(x_nchw, (0, 2, 3, 1)).astype(jnp.float32)
    up = upsample_bilinear_align_corners(x_nhwc, out_h, out_w)
    w_hwio = jnp.transpose(conv_w, (2, 3, 1, 0))
    conv = lax.conv_general_dilated(
        up, w_hwio, window_strides=(1, 1), padding=((1, 1), (1, 1)),
        dimension_numbers=("NHWC", "HWIO", "NHWC")) + conv_b
    mean = jnp.mean(conv, axis=(0, 1, 2))
    var = jnp.var(conv, axis=(0, 1, 2))
    y = (conv - mean) * lax.rsqrt(var + eps) * gamma + beta
    y = jnp.maximum(y, 0.0)
    return jnp.transpose(y, (0, 3, 1, 2))


if __name__ == "__main__":
    key = jax.random.PRNGKey(0)
    k_x, k_w, k_b, k_g, k_be = jax.random.split(key, 5)

    N, CH_IN, CH_OUT, H, W = 2, 4, 8, 16, 16
    x = jax.random.normal(k_x, (N, CH_IN, H, W), dtype=jnp.float32)

    fan_in = CH_IN * 3 * 3
    conv_w = jax.random.normal(k_w, (CH_OUT, CH_IN, 3, 3), dtype=jnp.float32) / jnp.sqrt(fan_in)
    conv_b = 0.1 * jax.random.normal(k_b, (CH_OUT,), dtype=jnp.float32)
    gamma = 1.0 + 0.1 * jax.random.normal(k_g, (CH_OUT,), dtype=jnp.float32)
    beta = 0.1 * jax.random.normal(k_be, (CH_OUT,), dtype=jnp.float32)

    out = up_conv_forward(x, conv_w, conv_b, gamma, beta, target_size=None)
    out = jax.block_until_ready(out)

    assert out.shape == (N, CH_OUT, 2 * H, 2 * W), out.shape
    assert bool(jnp.all(jnp.isfinite(out)))
    assert bool(jnp.all(out >= 0.0))  # ReLU

    # loose numerical check vs. pure-XLA f32 reference (bf16 matmul operands)
    ref = _reference_up_conv(x, conv_w, conv_b, gamma, beta, None)
    max_err = float(jnp.max(jnp.abs(out - ref)))
    assert max_err < 0.1, max_err

    print("KERNEL_OK")
</pallas_src>

<mosaic_0001>
module attributes {stable_mosaic.version = 11 : i64} {
  func.func @_conv_stats_kernel(%arg0: i32, %arg1: i32, %arg2: memref<1x1024x36xbf16, #tpu.memory_space<vmem>>, %arg3: memref<36x128xbf16, #tpu.memory_space<vmem>>, %arg4: memref<1x1x8x128xf32, #tpu.memory_space<vmem>>, %arg5: memref<1x1x8x128xf32, #tpu.memory_space<vmem>>) attributes {dimension_semantics = [#tpu.dimension_semantics<parallel>, #tpu.dimension_semantics<parallel>], iteration_bounds = array<i64: 2, 1>, scalar_prefetch = 0 : i64, scratch_operands = 0 : i64, tpu.core_type = #tpu.core_type<tc>, window_params = [{transform_indices = @transform_0, window_bounds = array<i64: 1, 1024, 36>}, {pipeline_mode = #tpu.pipeline_mode<synchronous>, transform_indices = @transform_1, window_bounds = array<i64: 36, 128>}, {transform_indices = @transform_2, window_bounds = array<i64: 1, 1, 8, 128>}, {transform_indices = @transform_3, window_bounds = array<i64: 1, 1, 8, 128>}]} {
    %c0 = arith.constant 0 : index
    %c0_0 = arith.constant 0 : index
    %c0_1 = arith.constant 0 : index
    %0 = vector.load %arg2[%c0, %c0_0, %c0_1] : memref<1x1024x36xbf16, #tpu.memory_space<vmem>>, vector<1x1024x36xbf16>
    %1 = vector.shape_cast %0 : vector<1x1024x36xbf16> to vector<1024x36xbf16>
    %c0_2 = arith.constant 0 : index
    %c0_3 = arith.constant 0 : index
    %2 = vector.load %arg3[%c0_2, %c0_3] : memref<36x128xbf16, #tpu.memory_space<vmem>>, vector<36x128xbf16>
    %cst = arith.constant dense<0.000000e+00> : vector<1024x128xf32>
    %3 = tpu.matmul %1, %2, %cst {dimension_numbers = #tpu.dot_dimension_numbers<[1], [0], [0], [1], [0, 0, 1, 1], [], []>} : vector<1024x36xbf16>, vector<36x128xbf16>, vector<1024x128xf32> -> vector<1024x128xf32>
    %cst_4 = arith.constant dense<0.000000e+00> : vector<128xf32>
    %4 = vector.multi_reduction <add>, %3, %cst_4 [0] : vector<1024x128xf32> to vector<128xf32>
    %5 = vector.shape_cast %4 : vector<128xf32> to vector<1x128xf32>
    %6 = vector.shape_cast %5 : vector<1x128xf32> to vector<1x128xf32>
    %7 = vector.broadcast %6 : vector<1x128xf32> to vector<8x128xf32>
    %c0_5 = arith.constant 0 : index
    %c0_6 = arith.constant 0 : index
    %c0_7 = arith.constant 0 : index
    %c0_8 = arith.constant 0 : index
    %8 = vector.load %arg4[%c0_5, %c0_6, %c0_7, %c0_8] : memref<1x1x8x128xf32, #tpu.memory_space<vmem>>, vector<1x1x8x128xf32>
    %9 = vector.shape_cast %8 : vector<1x1x8x128xf32> to vector<8x128xf32>
    %10 = vector.shape_cast %7 : vector<8x128xf32> to vector<1x1x8x128xf32>
    tpu.vector_store %arg4[%c0_5, %c0_6, %c0_7, %c0_8], %10 {strides = array<i32>} : memref<1x1x8x128xf32, #tpu.memory_space<vmem>>, vector<1x1x8x128xf32>,
    %11 = arith.mulf %3, %3 : vector<1024x128xf32>
    %cst_9 = arith.constant dense<0.000000e+00> : vector<128xf32>
    %12 = vector.multi_reduction <add>, %11, %cst_9 [0] : vector<1024x128xf32> to vector<128xf32>
    %13 = vector.shape_cast %12 : vector<128xf32> to vector<1x128xf32>
    %14 = vector.shape_cast %13 : vector<1x128xf32> to vector<1x128xf32>
    %15 = vector.broadcast %14 : vector<1x128xf32> to vector<8x128xf32>
    %c0_10 = arith.constant 0 : index
    %c0_11 = arith.constant 0 : index
    %c0_12 = arith.constant 0 : index
    %c0_13 = arith.constant 0 : index
    %16 = vector.load %arg5[%c0_10, %c0_11, %c0_12, %c0_13] : memref<1x1x8x128xf32, #tpu.memory_space<vmem>>, vector<1x1x8x128xf32>
    %17 = vector.shape_cast %16 : vector<1x1x8x128xf32> to vector<8x128xf32>
    %18 = vector.shape_cast %15 : vector<8x128xf32> to vector<1x1x8x128xf32>
    tpu.vector_store %arg5[%c0_10, %c0_11, %c0_12, %c0_13], %18 {strides = array<i32>} : memref<1x1x8x128xf32, #tpu.memory_space<vmem>>, vector<1x1x8x128xf32>,
    return
  }
  func.func @transform_0(%arg0: i32, %arg1: i32) -> (i32, i32, i32) {
    %c0_i32 = arith.constant 0 : i32
    %c0_i32_0 = arith.constant 0 : i32
    return %arg0, %arg1, %c0_i32 : i32, i32, i32
  }
  func.func @transform_1(%arg0: i32, %arg1: i32) -> (i32, i32) {
    %c0_i32 = arith.constant 0 : i32
    %c0_i32_0 = arith.constant 0 : i32
    %c0_i32_1 = arith.constant 0 : i32
    return %c0_i32, %c0_i32_0 : i32, i32
  }
  func.func @transform_2(%arg0: i32, %arg1: i32) -> (i32, i32, i32, i32) {
    %c0_i32 = arith.constant 0 : i32
    %c0_i32_0 = arith.constant 0 : i32
    %c0_i32_1 = arith.constant 0 : i32
    return %arg0, %arg1, %c0_i32, %c0_i32_0 : i32, i32, i32, i32
  }
  func.func @transform_3(%arg0: i32, %arg1: i32) -> (i32, i32, i32, i32) {
    %c0_i32 = arith.constant 0 : i32
    %c0_i32_0 = arith.constant 0 : i32
    %c0_i32_1 = arith.constant 0 : i32
    return %arg0, %arg1, %c0_i32, %c0_i32_0 : i32, i32, i32, i32
  }
}

module attributes {stable_mosaic.version = 11 : i64} {
  func.func @_conv_bn_relu_kernel(%arg0: i32, %arg1: i32, %arg2: memref<1x1024x36xbf16, #tpu.memory_space<vmem>>, %arg3: memref<36x128xbf16, #tpu.memory_space<vmem>>, %arg4: memref<1x128xf32, #tpu.memory_space<vmem>>, %arg5: memref<1x128xf32, #tpu.memory_space<vmem>>, %arg6: memref<1x32x32x8xf32, #tpu.memory_space<vmem>>) attributes {dimension_semantics = [#tpu.dimension_semantics<parallel>, #tpu.dimension_semantics<parallel>], iteration_bounds = array<i64: 2, 1>, scalar_prefetch = 0 : i64, scratch_operands = 0 : i64, tpu.core_type = #tpu.core_type<tc>, window_params = [{transform_indices = @transform_0, window_bounds = array<i64: 1, 1024, 36>}, {pipeline_mode = #tpu.pipeline_mode<synchronous>, transform_indices = @transform_1, window_bounds = array<i64: 36, 128>}, {pipeline_mode = #tpu.pipeline_mode<synchronous>, transform_indices = @transform_2, window_bounds = array<i64: 1, 128>}, {pipeline_mode = #tpu.pipeline_mode<synchronous>, transform_indices = @transform_3, window_bounds = array<i64: 1, 128>}, {transform_indices = @transform_4, window_bounds = array<i64: 1, 32, 32, 8>}]} {
    %c0 = arith.constant 0 : index
    %c0_0 = arith.constant 0 : index
    %c0_1 = arith.constant 0 : index
    %0 = vector.load %arg2[%c0, %c0_0, %c0_1] : memref<1x1024x36xbf16, #tpu.memory_space<vmem>>, vector<1x1024x36xbf16>
    %1 = vector.shape_cast %0 : vector<1x1024x36xbf16> to vector<1024x36xbf16>
    %c0_2 = arith.constant 0 : index
    %c0_3 = arith.constant 0 : index
    %2 = vector.load %arg3[%c0_2, %c0_3] : memref<36x128xbf16, #tpu.memory_space<vmem>>, vector<36x128xbf16>
    %cst = arith.constant dense<0.000000e+00> : vector<1024x128xf32>
    %3 = tpu.matmul %1, %2, %cst {dimension_numbers = #tpu.dot_dimension_numbers<[1], [0], [0], [1], [0, 0, 1, 1], [], []>} : vector<1024x36xbf16>, vector<36x128xbf16>, vector<1024x128xf32> -> vector<1024x128xf32>
    %c0_4 = arith.constant 0 : index
    %c0_5 = arith.constant 0 : index
    %4 = vector.load %arg4[%c0_4, %c0_5] : memref<1x128xf32, #tpu.memory_space<vmem>>, vector<1x128xf32>
    %5 = vector.broadcast %4 : vector<1x128xf32> to vector<1024x128xf32>
    %6 = arith.mulf %3, %5 : vector<1024x128xf32>
    %c0_6 = arith.constant 0 : index
    %c0_7 = arith.constant 0 : index
    %7 = vector.load %arg5[%c0_6, %c0_7] : memref<1x128xf32, #tpu.memory_space<vmem>>, vector<1x128xf32>
    %8 = vector.broadcast %7 : vector<1x128xf32> to vector<1024x128xf32>
    %9 = arith.addf %6, %8 : vector<1024x128xf32>
    %cst_8 = arith.constant 0.000000e+00 : f32
    %10 = vector.broadcast %cst_8 : f32 to vector<1024x128xf32>
    %11 = arith.maximumf %9, %10 : vector<1024x128xf32>
    %12 = vector.extract_strided_slice %11 {offsets = [0, 0], sizes = [1024, 8], strides = [1, 1]} : vector<1024x128xf32> to vector<1024x8xf32>
    %13 = vector.shape_cast %12 : vector<1024x8xf32> to vector<32x32x8xf32>
    %c0_9 = arith.constant 0 : index
    %c0_10 = arith.constant 0 : index
    %c0_11 = arith.constant 0 : index
    %c0_12 = arith.constant 0 : index
    %14 = vector.load %arg6[%c0_9, %c0_10, %c0_11, %c0_12] : memref<1x32x32x8xf32, #tpu.memory_space<vmem>>, vector<1x32x32x8xf32>
    %15 = vector.shape_cast %14 : vector<1x32x32x8xf32> to vector<32x32x8xf32>
    %16 = vector.shape_cast %13 : vector<32x32x8xf32> to vector<1x32x32x8xf32>
    tpu.vector_store %arg6[%c0_9, %c0_10, %c0_11, %c0_12], %16 {strides = array<i32>} : memref<1x32x32x8xf32, #tpu.memory_space<vmem>>, vector<1x32x32x8xf32>,
    return
  }
  func.func @transform_0(%arg0: i32, %arg1: i32) -> (i32, i32, i32) {
    %c0_i32 = arith.constant 0 : i32
    %c0_i32_0 = arith.constant 0 : i32
    return %arg0, %arg1, %c0_i32 : i32, i32, i32
  }
  func.func @transform_1(%arg0: i32, %arg1: i32) -> (i32, i32) {
    %c0_i32 = arith.constant 0 : i32
    %c0_i32_0 = arith.constant 0 : i32
    %c0_i32_1 = arith.constant 0 : i32
    return %c0_i32, %c0_i32_0 : i32, i32
  }
  func.func @transform_2(%arg0: i32, %arg1: i32) -> (i32, i32) {
    %c0_i32 = arith.constant 0 : i32
    %c0_i32_0 = arith.constant 0 : i32
    %c0_i32_1 = arith.constant 0 : i32
    return %c0_i32, %c0_i32_0 : i32, i32
  }
  func.func @transform_3(%arg0: i32, %arg1: i32) -> (i32, i32) {
    %c0_i32 = arith.constant 0 : i32
    %c0_i32_0 = arith.constant 0 : i32
    %c0_i32_1 = arith.constant 0 : i32
    return %c0_i32, %c0_i32_0 : i32, i32
  }
  func.func @transform_4(%arg0: i32, %arg1: i32) -> (i32, i32, i32, i32) {
    %c0_i32 = arith.constant 0 : i32
    %c0_i32_0 = arith.constant 0 : i32
    %c0_i32_1 = arith.constant 0 : i32
    return %arg0, %arg1, %c0_i32, %c0_i32_0 : i32, i32, i32, i32
  }
}

</mosaic_0001>

<llo_original>
// kernel: up_conv_forward.2
$region0: #{up_conv_forward.2}
  #allocation0 [shape = 'u32[]', space=smem, size = 0x4, offset = 0x4, fixed_abs, tag = 'smem constant byte address 0x4 - core index']
  #allocation1 [shape = 'u32[144,128]{1,0:T(1,128)}', space=vmem, size = 0x12000, scoped, tag = 'internal scratch']
  %s0 = inlined_call_operand.hbm [shape: bf16[2,1024,36], index: 0, kind: input, shape index: {}]
  %s1 = inlined_call_operand.hbm [shape: bf16[36,128], index: 1, kind: input, shape index: {}]
  %s2 = inlined_call_operand.hbm [shape: f32[2,1,8,128], index: 2, kind: output, shape index: {0}]
  %s3 = inlined_call_operand.hbm [shape: f32[2,1,8,128], index: 3, kind: output, shape index: {1}]
  %4 = xla_tuple %s2, %s3
  %s5 = sld [smem:[#allocation0]]
  $region57: #{up_conv_forward.2} parent=0
    _
  %s7 = ssub.s32 1, %s5
  %s8 = scalar_select 0, %s7, %s5
  $region1: #{up_conv_forward.2} parent=0
    #allocation2 [shape = 'u8[524288]{0}', space=vmem, size = 0x80000, scoped, tag = 'input window, operand 0']
    #allocation3 [shape = 's32[2]{0}', space=sflag, size = 0x8, scoped, tag = 'scoped memory for up_conv_forward.2']
    #allocation4 [shape = 's32[2]{0}', space=sflag, size = 0x8, scoped, tag = 'scoped memory for up_conv_forward.2']
    #allocation5 [shape = 'u8[10240]{0}', space=vmem, size = 0x2800, scoped, tag = 'input window, operand 1, single buffered']
    #allocation6 [shape = 's32[1]{0}', space=sflag, size = 0x4, scoped, tag = 'scoped memory for up_conv_forward.2']
    #allocation7 [shape = 'u8[8192]{0}', space=vmem, size = 0x2000, scoped, tag = 'output window, operand 0']
    #allocation8 [shape = 'u8[8192]{0}', space=vmem, size = 0x2000, scoped, tag = 'output window, operand 1']
    #allocation9 [shape = 's32[2]{0}', space=sflag, size = 0x8, scoped, tag = 'scoped memory for up_conv_forward.2']
    %9 = vsyncpa [#allocation3], 0
    %s10 = scalar_lea.sflag [#allocation3], 1
    %11 = vsyncpa %s10, 0
    %12 = vsyncpa [#allocation6], 0
    %13 = vsyncpa [#allocation4], 0
    %s14 = scalar_lea.sflag [#allocation4], 1
    %15 = vsyncpa %s14, 0
    %16 = vsyncpa [#allocation9], 0
    %s17 = scalar_lea.sflag [#allocation9], 1
    %18 = vsyncpa %s17, 0
    loop: start=0, step=1, limit=4
    $region2: #{up_conv_forward.2} parent=1 // loop_pre_header
      _
    $region3: #{up_conv_forward.2} parent=1 // loop_header
      %s20 = sphi 0, %s24
      %p21 = scmp.ge.s32.totalorder %s20, 4
      %s27 = sphi 0, %s39
      %s28 = sphi 0, %s35
      %s29 = sphi 0, %s27
      %s30 = sphi 0, %s28
      %s31 = sphi 0, %s29
      %s32 = sphi 0, %s30
      %s44 = sphi 0, %s46
      %s47 = sphi 0, %s44
      %s48 = sphi 0, %s47
      %s64 = sphi 0, %s48
      %s68 = sphi 0, %s68
      %s70 = sphi 0, %s68
      %s71 = sphi 0, %s70
      %s85 = sphi 0, %s71
      %s93 = sphi 0, %s95
      %s96 = sphi 0, %s93
      %s97 = sphi 0, %s96
      %s113 = sphi 0, %s97
      %s121 = sphi 0, %s123
      %s124 = sphi 0, %s121
      %s125 = sphi 0, %s124
      %s141 = sphi 0, %s125
    $region4: #{up_conv_forward.2} parent=1 // loop_header_branch
      %23 = sbr.rel (%p21) target = $region8
    $region5: #{up_conv_forward.2} parent=1 // loop_body
      %s25 = ssub.s32 %s20, 1
      %s26 = ssub.s32 %s20, 2
      %s33 = sadd.s32 1, %s28
      %p34 = scmp.ge.s32.totalorder %s33, 1
      %s35 = scalar_select %p34, 0, %s33
      %s36 = sadd.s32 1, %s27
      %s37 = scalar_select %p34, %s36, %s27
      %p38 = scmp.ge.s32.totalorder %s37, 2
      %s39 = scalar_select %p38, 0, %s37
      %s40 = ssub.s32 %s27, %s39
      %s41 = ssub.s32 %s28, %s35
      %s42 = sor.u32 %s40, %s41
      %p43 = scmp.eq.s32.totalorder %s42, 0
      %s45 = sadd.s32 %s44, 1
      %s46 = scalar_select %p43, %s44, %s45
      %p49 = pneg %p43
      %p50 = scmp.eq.s32.totalorder %s20, 1
      %p51 = por %p49, %p50
      %p52 = scmp.ne.s32.totalorder %s44, %s47
      %p53 = scmp.eq.s32.totalorder %s20, 0
      %p54 = por %p52, %p53
      %p55 = scmp.ne.s32.totalorder %s44, %s47
      %p56 = scmp.eq.s32.totalorder %s25, 1
      %p57 = por %p55, %p56
      %p58 = scmp.ne.s32.totalorder %s47, %s48
      %p59 = scmp.eq.s32.totalorder %s25, 0
      %p60 = por %p58, %p59
      %p61 = scmp.ne.s32.totalorder %s47, %s48
      %p62 = scmp.eq.s32.totalorder %s26, 1
      %p63 = por %p61, %p62
      %p65 = scmp.ne.s32.totalorder %s48, %s64
      %p66 = scmp.eq.s32.totalorder %s26, 0
      %p67 = por %p65, %p66
      %s69 = sadd.s32 %s68, 1
      %p72 = scmp.eq.s32.totalorder %s20, 1
      %p73 = scmp.ne.s32.totalorder %s68, %s70
      %p74 = scmp.eq.s32.totalorder %s20, 0
      %p75 = por %p73, %p74
      %p76 = scmp.ne.s32.totalorder %s68, %s70
      %p77 = scmp.eq.s32.totalorder %s25, 1
      %p78 = por %p76, %p77
      %p79 = scmp.ne.s32.totalorder %s70, %s71
      %p80 = scmp.eq.s32.totalorder %s25, 0
      %p81 = por %p79, %p80
      %p82 = scmp.ne.s32.totalorder %s70, %s71
      %p83 = scmp.eq.s32.totalorder %s26, 1
      %p84 = por %p82, %p83
      %p86 = scmp.ne.s32.totalorder %s71, %s85
      %p87 = scmp.eq.s32.totalorder %s26, 0
      %p88 = por %p86, %p87
      %s89 = ssub.s32 %s27, %s39
      %s90 = ssub.s32 %s28, %s35
      %s91 = sor.u32 %s89, %s90
      %p92 = scmp.eq.s32.totalorder %s91, 0
      %s94 = sadd.s32 %s93, 1
      %s95 = scalar_select %p92, %s93, %s94
      %p98 = pneg %p92
      %p99 = scmp.eq.s32.totalorder %s20, 1
      %p100 = por %p98, %p99
      %p101 = scmp.ne.s32.totalorder %s93, %s96
      %p102 = scmp.eq.s32.totalorder %s20, 0
      %p103 = por %p101, %p102
      %p104 = scmp.ne.s32.totalorder %s93, %s96
      %p105 = scmp.eq.s32.totalorder %s25, 1
      %p106 = por %p104, %p105
      %p107 = scmp.ne.s32.totalorder %s96, %s97
      %p108 = scmp.eq.s32.totalorder %s25, 0
      %p109 = por %p107, %p108
      %p110 = scmp.ne.s32.totalorder %s96, %s97
      %p111 = scmp.eq.s32.totalorder %s26, 1
      %p112 = por %p110, %p111
      %p114 = scmp.ne.s32.totalorder %s97, %s113
      %p115 = scmp.eq.s32.totalorder %s26, 0
      %p116 = por %p114, %p115
      %s117 = ssub.s32 %s27, %s39
      %s118 = ssub.s32 %s28, %s35
      %s119 = sor.u32 %s117, %s118
      %p120 = scmp.eq.s32.totalorder %s119, 0
      %s122 = sadd.s32 %s121, 1
      %s123 = scalar_select %p120, %s121, %s122
      %p126 = pneg %p120
      %p127 = scmp.eq.s32.totalorder %s20, 1
      %p128 = por %p126, %p127
      %p129 = scmp.ne.s32.totalorder %s121, %s124
      %p130 = scmp.eq.s32.totalorder %s20, 0
      %p131 = por %p129, %p130
      %p132 = scmp.ne.s32.totalorder %s121, %s124
      %p133 = scmp.eq.s32.totalorder %s25, 1
      %p134 = por %p132, %p133
      %p135 = scmp.ne.s32.totalorder %s124, %s125
      %p136 = scmp.eq.s32.totalorder %s25, 0
      %p137 = por %p135, %p136
      %p138 = scmp.ne.s32.totalorder %s124, %s125
      %p139 = scmp.eq.s32.totalorder %s26, 1
      %p140 = por %p138, %p139
      %p142 = scmp.ne.s32.totalorder %s125, %s141
      %p143 = scmp.eq.s32.totalorder %s26, 0
      %p144 = por %p142, %p143
      %p145 = scmp.le.s32.totalorder 1, %s20
      %p146 = scmp.lt.s32.totalorder %s20, 3
      %p147 = pnand %p145, %p146
      %p148 = pneg %p147
      // Predicated region
      $region9: #{up_conv_forward.2} parent=5 // pred_check
        _
      $region10: #{up_conv_forward.2} parent=5 // pred_check_branch
        %150 = sbr.rel (%p147) target = $region12
      $region11: #{up_conv_forward.2} parent=5 // pred_region
        %s151 = ssub.s32 %s20, 1
        // Predicated region
        $region13: #{up_conv_forward.2} parent=11 // pred_check
          %p152 = pneg %p81
        $region14: #{up_conv_forward.2} parent=11 // pred_check_branch
          %154 = sbr.rel (%p152) target = $region16
        $region15: #{up_conv_forward.2} parent=11 // pred_region
          %s156 = ssub.s32 320, 320
          %157 = vsyncadd [#allocation6], %s156
          %s158 = sshll.u32 [#allocation5], 4
          %s159 = int_to_ptr.vmem [resolvable:$true] %s158
          %164 = dma.hbm_to_vmem [thread:$0]  %s1, 320, %s159, [#allocation6], 64, 64, 4
        $region16: #{up_conv_forward.2} parent=11 // pred_fallthru
          _
      $region12: #{up_conv_forward.2} parent=5 // pred_fallthru
        _
      %p165 = scmp.lt.s32.totalorder %s20, 2
      // Predicated region
      $region17: #{up_conv_forward.2} parent=5 // pred_check
        %p166 = pneg %p165
      $region18: #{up_conv_forward.2} parent=5 // pred_check_branch
        %168 = sbr.rel (%p166) target = $region20
      $region19: #{up_conv_forward.2} parent=5 // pred_region
        // Predicated region
        $region21: #{up_conv_forward.2} parent=19 // pred_check
          %p169 = pneg %p54
        $region22: #{up_conv_forward.2} parent=19 // pred_check_branch
          %171 = sbr.rel (%p169) target = $region24
        $region23: #{up_conv_forward.2} parent=19 // pred_region
          %s172 = sand.u32 %s44, 1
          %s173 = scalar_lea.sflag [#allocation3], %s172
          %s174 = sand.u32 %s44, 1
          %s175 = smul.addr %s174, 512
          %s176 = scalar_lea.vmem [#allocation2], %s175
          %s177 = smul.u32 128, %s28
          %s179 = ssub.s32 8192, 8192
          %180 = vsyncadd %s173, %s179
          %s181 = smul.addr %s27, 128
          %s182 = sadd.s32 %s177, %s181
          %s183 = smul.addr %s182, 64
          %s184 = scalar_lea.hbm %s0, %s183
          %s185 = sshll.u32 %s176, 4
          %s186 = int_to_ptr.vmem [resolvable:$true] %s185
          %191 = dma.hbm_to_vmem [thread:$0]  %s184, 8192, %s186, %s173, 64, 64, 4
        $region24: #{up_conv_forward.2} parent=19 // pred_fallthru
          _
      $region20: #{up_conv_forward.2} parent=5 // pred_fallthru
        _
      %p192 = scmp.le.s32.totalorder 1, %s20
      %p193 = scmp.lt.s32.totalorder %s20, 3
      %p194 = pnand %p192, %p193
      %p195 = pneg %p194
      // Predicated region
      $region25: #{up_conv_forward.2} parent=5 // pred_check
        _
      $region26: #{up_conv_forward.2} parent=5 // pred_check_branch
        %197 = sbr.rel (%p194) target = $region28
      $region27: #{up_conv_forward.2} parent=5 // pred_region
        %s198 = ssub.s32 %s20, 1
        %s199 = sand.u32 %s47, 1
        %s200 = scalar_lea.sflag [#allocation3], %s199
        %s201 = sand.u32 %s47, 1
        %s202 = smul.addr %s201, 512
        %s203 = scalar_lea.vmem [#allocation2], %s202
        // Predicated region
        $region29: #{up_conv_forward.2} parent=27 // pred_check
          %p204 = pneg %p60
        $region30: #{up_conv_forward.2} parent=27 // pred_check_branch
          %206 = sbr.rel (%p204) target = $region32
        $region31: #{up_conv_forward.2} parent=27 // pred_region
          %207 = dma.done %s200, 8192
        $region32: #{up_conv_forward.2} parent=27 // pred_fallthru
          _
        // Predicated region
        $region33: #{up_conv_forward.2} parent=27 // pred_check
          %p208 = pneg %p81
        $region34: #{up_conv_forward.2} parent=27 // pred_check_branch
          %210 = sbr.rel (%p208) target = $region36
        $region35: #{up_conv_forward.2} parent=27 // pred_region
          %211 = dma.done [#allocation6], 320
        $region36: #{up_conv_forward.2} parent=27 // pred_fallthru
          _
        %s212 = sand.u32 %s47, 1
        %s213 = scalar_lea.sflag [#allocation3], %s212
        %s214 = sand.u32 %s47, 1
        %s215 = smul.addr %s214, 512
        %s216 = scalar_lea.vmem [#allocation2], %s215
        %p217 = pneg %p60
        %p218 = pneg %p57
        %p219 = pneg %p81
        %p220 = pneg %p78
        %p221 = pneg %p109
        %p222 = pneg %p106
        %s223 = sand.u32 %s96, 1
        %s224 = scalar_lea.sflag [#allocation4], %s223
        %s225 = sand.u32 %s96, 1
        %s226 = smul.addr %s225, 8
        %s227 = scalar_lea.vmem [#allocation7], %s226
        %p228 = pneg %p137
        %p229 = pneg %p134
        %s230 = sand.u32 %s124, 1
        %s231 = scalar_lea.sflag [#allocation9], %s230
        %s232 = sand.u32 %s124, 1
        %s233 = smul.addr %s232, 8
        %s234 = scalar_lea.vmem [#allocation8], %s233
        %s235 = smul.u32 128, %s30
        %v237 = vld [vmem:[%s203] sm:$0xf]
        %v238 = vld [vmem:[%s203 + $0x4] sm:$0xf]
        %v239 = vld [vmem:[%s203 + $0x8] sm:$0xf]
        %v240 = vld [vmem:[%s203 + $0xc] sm:$0xf]
        %v241 = vld [vmem:[%s203 + $0x10] sm:$0xf]
        %v242 = vld [vmem:[%s203 + $0x14] sm:$0xf]
        %v243 = vld [vmem:[%s203 + $0x18] sm:$0xf]
        %v244 = vld [vmem:[%s203 + $0x1c] sm:$0xf]
        %v245 = vld [vmem:[%s203 + $0x20] sm:$0xf]
        %v246 = vld [vmem:[%s203 + $0x24] sm:$0xf]
        %v247 = vld [vmem:[%s203 + $0x28] sm:$0xf]
        %v248 = vld [vmem:[%s203 + $0x2c] sm:$0xf]
        %v249 = vld [vmem:[%s203 + $0x30] sm:$0xf]
        %v250 = vld [vmem:[%s203 + $0x34] sm:$0xf]
        %v251 = vld [vmem:[%s203 + $0x38] sm:$0xf]
        %v252 = vld [vmem:[%s203 + $0x3c] sm:$0xf]
        %v253 = vld [vmem:[%s203 + $0x40] sm:$0xf]
        %v254 = vld [vmem:[%s203 + $0x44] sm:$0xf]
        %v255 = vld [vmem:[%s203 + $0x48] sm:$0xf]
        %v256 = vld [vmem:[%s203 + $0x4c] sm:$0xf]
        %v257 = vld [vmem:[%s203 + $0x50] sm:$0xf]
        %v258 = vld [vmem:[%s203 + $0x54] sm:$0xf]
        %v259 = vld [vmem:[%s203 + $0x58] sm:$0xf]
        %v260 = vld [vmem:[%s203 + $0x5c] sm:$0xf]
        %v261 = vld [vmem:[%s203 + $0x60] sm:$0xf]
        %v262 = vld [vmem:[%s203 + $0x64] sm:$0xf]
        %v263 = vld [vmem:[%s203 + $0x68] sm:$0xf]
        %v264 = vld [vmem:[%s203 + $0x6c] sm:$0xf]
        %v265 = vld [vmem:[%s203 + $0x70] sm:$0xf]
        %v266 = vld [vmem:[%s203 + $0x74] sm:$0xf]
        %v267 = vld [vmem:[%s203 + $0x78] sm:$0xf]
        %v268 = vld [vmem:[%s203 + $0x7c] sm:$0xf]
        %v269 = vld [vmem:[%s203 + $0x80] sm:$0xf]
        %v270 = vld [vmem:[%s203 + $0x84] sm:$0xf]
        %v271 = vld [vmem:[%s203 + $0x88] sm:$0xf]
        %v272 = vld [vmem:[%s203 + $0x8c] sm:$0xf]
        %v273 = vld [vmem:[%s203 + $0x90] sm:$0xf]
        %v274 = vld [vmem:[%s203 + $0x94] sm:$0xf]
        %v275 = vld [vmem:[%s203 + $0x98] sm:$0xf]
        %v276 = vld [vmem:[%s203 + $0x9c] sm:$0xf]
        %v277 = vld [vmem:[%s203 + $0xa0] sm:$0xf]
        %v278 = vld [vmem:[%s203 + $0xa4] sm:$0xf]
        %v279 = vld [vmem:[%s203 + $0xa8] sm:$0xf]
        %v280 = vld [vmem:[%s203 + $0xac] sm:$0xf]
        %v281 = vld [vmem:[%s203 + $0xb0] sm:$0xf]
        %v282 = vld [vmem:[%s203 + $0xb4] sm:$0xf]
        %v283 = vld [vmem:[%s203 + $0xb8] sm:$0xf]
        %v284 = vld [vmem:[%s203 + $0xbc] sm:$0xf]
        %v285 = vld [vmem:[%s203 + $0xc0] sm:$0xf]
        %v286 = vld [vmem:[%s203 + $0xc4] sm:$0xf]
        %v287 = vld [vmem:[%s203 + $0xc8] sm:$0xf]
        %v288 = vld [vmem:[%s203 + $0xcc] sm:$0xf]
        %v289 = vld [vmem:[%s203 + $0xd0] sm:$0xf]
        %v290 = vld [vmem:[%s203 + $0xd4] sm:$0xf]
        %v291 = vld [vmem:[%s203 + $0xd8] sm:$0xf]
        %v292 = vld [vmem:[%s203 + $0xdc] sm:$0xf]
        %v293 = vld [vmem:[%s203 + $0xe0] sm:$0xf]
        %v294 = vld [vmem:[%s203 + $0xe4] sm:$0xf]
        %v295 = vld [vmem:[%s203 + $0xe8] sm:$0xf]
        %v296 = vld [vmem:[%s203 + $0xec] sm:$0xf]
        %v297 = vld [vmem:[%s203 + $0xf0] sm:$0xf]
        %v298 = vld [vmem:[%s203 + $0xf4] sm:$0xf]
        %v299 = vld [vmem:[%s203 + $0xf8] sm:$0xf]
        %v300 = vld [vmem:[%s203 + $0xfc] sm:$0xf]
        %v301 = vld [vmem:[%s203 + $0x100] sm:$0xf]
        %v302 = vld [vmem:[%s203 + $0x104] sm:$0xf]
        %v303 = vld [vmem:[%s203 + $0x108] sm:$0xf]
        %v304 = vld [vmem:[%s203 + $0x10c] sm:$0xf]
        %v305 = vld [vmem:[%s203 + $0x110] sm:$0xf]
        %v306 = vld [vmem:[%s203 + $0x114] sm:$0xf]
        %v307 = vld [vmem:[%s203 + $0x118] sm:$0xf]
        %v308 = vld [vmem:[%s203 + $0x11c] sm:$0xf]
        %v309 = vld [vmem:[%s203 + $0x120] sm:$0xf]
        %v310 = vld [vmem:[%s203 + $0x124] sm:$0xf]
        %v311 = vld [vmem:[%s203 + $0x128] sm:$0xf]
        %v312 = vld [vmem:[%s203 + $0x12c] sm:$0xf]
        %v313 = vld [vmem:[%s203 + $0x130] sm:$0xf]
        %v314 = vld [vmem:[%s203 + $0x134] sm:$0xf]
        %v315 = vld [vmem:[%s203 + $0x138] sm:$0xf]
        %v316 = vld [vmem:[%s203 + $0x13c] sm:$0xf]
        %v317 = vld [vmem:[%s203 + $0x140] sm:$0xf]
        %v318 = vld [vmem:[%s203 + $0x144] sm:$0xf]
        %v319 = vld [vmem:[%s203 + $0x148] sm:$0xf]
        %v320 = vld [vmem:[%s203 + $0x14c] sm:$0xf]
        %v321 = vld [vmem:[%s203 + $0x150] sm:$0xf]
        %v322 = vld [vmem:[%s203 + $0x154] sm:$0xf]
        %v323 = vld [vmem:[%s203 + $0x158] sm:$0xf]
        %v324 = vld [vmem:[%s203 + $0x15c] sm:$0xf]
        %v325 = vld [vmem:[%s203 + $0x160] sm:$0xf]
        %v326 = vld [vmem:[%s203 + $0x164] sm:$0xf]
        %v327 = vld [vmem:[%s203 + $0x168] sm:$0xf]
        %v328 = vld [vmem:[%s203 + $0x16c] sm:$0xf]
        %v329 = vld [vmem:[%s203 + $0x170] sm:$0xf]
        %v330 = vld [vmem:[%s203 + $0x174] sm:$0xf]
        %v331 = vld [vmem:[%s203 + $0x178] sm:$0xf]
        %v332 = vld [vmem:[%s203 + $0x17c] sm:$0xf]
        %v333 = vld [vmem:[%s203 + $0x180] sm:$0xf]
        %v334 = vld [vmem:[%s203 + $0x184] sm:$0xf]
        %v335 = vld [vmem:[%s203 + $0x188] sm:$0xf]
        %v336 = vld [vmem:[%s203 + $0x18c] sm:$0xf]
        %v337 = vld [vmem:[%s203 + $0x190] sm:$0xf]
        %v338 = vld [vmem:[%s203 + $0x194] sm:$0xf]
        %v339 = vld [vmem:[%s203 + $0x198] sm:$0xf]
        %v340 = vld [vmem:[%s203 + $0x19c] sm:$0xf]
        %v341 = vld [vmem:[%s203 + $0x1a0] sm:$0xf]
        %v342 = vld [vmem:[%s203 + $0x1a4] sm:$0xf]
        %v343 = vld [vmem:[%s203 + $0x1a8] sm:$0xf]
        %v344 = vld [vmem:[%s203 + $0x1ac] sm:$0xf]
        %v345 = vld [vmem:[%s203 + $0x1b0] sm:$0xf]
        %v346 = vld [vmem:[%s203 + $0x1b4] sm:$0xf]
        %v347 = vld [vmem:[%s203 + $0x1b8] sm:$0xf]
        %v348 = vld [vmem:[%s203 + $0x1bc] sm:$0xf]
        %v349 = vld [vmem:[%s203 + $0x1c0] sm:$0xf]
        %v350 = vld [vmem:[%s203 + $0x1c4] sm:$0xf]
        %v351 = vld [vmem:[%s203 + $0x1c8] sm:$0xf]
        %v352 = vld [vmem:[%s203 + $0x1cc] sm:$0xf]
        %v353 = vld [vmem:[%s203 + $0x1d0] sm:$0xf]
        %v354 = vld [vmem:[%s203 + $0x1d4] sm:$0xf]
        %v355 = vld [vmem:[%s203 + $0x1d8] sm:$0xf]
        %v356 = vld [vmem:[%s203 + $0x1dc] sm:$0xf]
        %v357 = vld [vmem:[%s203 + $0x1e0] sm:$0xf]
        %v358 = vld [vmem:[%s203 + $0x1e4] sm:$0xf]
        %v359 = vld [vmem:[%s203 + $0x1e8] sm:$0xf]
        %v360 = vld [vmem:[%s203 + $0x1ec] sm:$0xf]
        %v361 = vld [vmem:[%s203 + $0x1f0] sm:$0xf]
        %v362 = vld [vmem:[%s203 + $0x1f4] sm:$0xf]
        %v363 = vld [vmem:[%s203 + $0x1f8] sm:$0xf]
        %v364 = vld [vmem:[%s203 + $0x1fc] sm:$0xf]
        %v365 = vld [vmem:[#allocation5] sm:$0xf]
        %v366 = vld [vmem:[#allocation5 + $0x4] sm:$0xf]
        %v367 = vld [vmem:[#allocation5 + $0x8] sm:$0xf]
        %v368 = vld [vmem:[#allocation5 + $0xc] sm:$0xf]
        %v369 = vld [vmem:[#allocation5 + $0x10] sm:$0x3]
        %v498 = vunpack.c.l.b16 %v237
        %v499 = vunpack.c.l.b16 %v238
        %v500 = vunpack.c.l.b16 %v239
        %v501 = vunpack.c.l.b16 %v240
        %v502 = vunpack.c.l.b16 %v241
        %v503 = vunpack.c.l.b16 %v242
        %v504 = vunpack.c.l.b16 %v243
        %v505 = vunpack.c.l.b16 %v244
        %v506 = vunpack.c.l.b16 %v245
        %v507 = vunpack.c.l.b16 %v246
        %v508 = vunpack.c.l.b16 %v247
        %v509 = vunpack.c.l.b16 %v248
        %v510 = vunpack.c.l.b16 %v249
        %v511 = vunpack.c.l.b16 %v250
        %v512 = vunpack.c.l.b16 %v251
        %v513 = vunpack.c.l.b16 %v252
        %v514 = vunpack.c.l.b16 %v253
        %v515 = vunpack.c.l.b16 %v254
        %v516 = vunpack.c.l.b16 %v255
        %v517 = vunpack.c.l.b16 %v256
        %v518 = vunpack.c.l.b16 %v257
        %v519 = vunpack.c.l.b16 %v258
        %v520 = vunpack.c.l.b16 %v259
        %v521 = vunpack.c.l.b16 %v260
        %v522 = vunpack.c.l.b16 %v261
        %v523 = vunpack.c.l.b16 %v262
        %v524 = vunpack.c.l.b16 %v263
        %v525 = vunpack.c.l.b16 %v264
        %v526 = vunpack.c.l.b16 %v265
        %v527 = vunpack.c.l.b16 %v266
        %v528 = vunpack.c.l.b16 %v267
        %v529 = vunpack.c.l.b16 %v268
        %v530 = vunpack.c.l.b16 %v269
        %v531 = vunpack.c.l.b16 %v270
        %v532 = vunpack.c.l.b16 %v271
        %v533 = vunpack.c.l.b16 %v272
        %v534 = vunpack.c.l.b16 %v273
        %v535 = vunpack.c.l.b16 %v274
        %v536 = vunpack.c.l.b16 %v275
        %v537 = vunpack.c.l.b16 %v276
        %v538 = vunpack.c.l.b16 %v277
        %v539 = vunpack.c.l.b16 %v278
        %v540 = vunpack.c.l.b16 %v279
        %v541 = vunpack.c.l.b16 %v280
        %v542 = vunpack.c.l.b16 %v281
        %v543 = vunpack.c.l.b16 %v282
        %v544 = vunpack.c.l.b16 %v283
        %v545 = vunpack.c.l.b16 %v284
        %v546 = vunpack.c.l.b16 %v285
        %v547 = vunpack.c.l.b16 %v286
        %v548 = vunpack.c.l.b16 %v287
        %v549 = vunpack.c.l.b16 %v288
        %v550 = vunpack.c.l.b16 %v289
        %v551 = vunpack.c.l.b16 %v290
        %v552 = vunpack.c.l.b16 %v291
        %v553 = vunpack.c.l.b16 %v292
        %v554 = vunpack.c.l.b16 %v293
        %v555 = vunpack.c.l.b16 %v294
        %v556 = vunpack.c.l.b16 %v295
        %v557 = vunpack.c.l.b16 %v296
        %v558 = vunpack.c.l.b16 %v297
        %v559 = vunpack.c.l.b16 %v298
        %v560 = vunpack.c.l.b16 %v299
        %v561 = vunpack.c.l.b16 %v300
        %v562 = vunpack.c.l.b16 %v301
        %v563 = vunpack.c.l.b16 %v302
        %v564 = vunpack.c.l.b16 %v303
        %v565 = vunpack.c.l.b16 %v304
        %v566 = vunpack.c.l.b16 %v305
        %v567 = vunpack.c.l.b16 %v306
        %v568 = vunpack.c.l.b16 %v307
        %v569 = vunpack.c.l.b16 %v308
        %v570 = vunpack.c.l.b16 %v309
        %v571 = vunpack.c.l.b16 %v310
        %v572 = vunpack.c.l.b16 %v311
        %v573 = vunpack.c.l.b16 %v312
        %v574 = vunpack.c.l.b16 %v313
        %v575 = vunpack.c.l.b16 %v314
        %v576 = vunpack.c.l.b16 %v315
        %v577 = vunpack.c.l.b16 %v316
        %v578 = vunpack.c.l.b16 %v317
        %v579 = vunpack.c.l.b16 %v318
        %v580 = vunpack.c.l.b16 %v319
        %v581 = vunpack.c.l.b16 %v320
        %v582 = vunpack.c.l.b16 %v321
        %v583 = vunpack.c.l.b16 %v322
        %v584 = vunpack.c.l.b16 %v323
        %v585 = vunpack.c.l.b16 %v324
        %v586 = vunpack.c.l.b16 %v325
        %v587 = vunpack.c.l.b16 %v326
        %v588 = vunpack.c.l.b16 %v327
        %v589 = vunpack.c.l.b16 %v328
        %v590 = vunpack.c.l.b16 %v329
        %v591 = vunpack.c.l.b16 %v330
        %v592 = vunpack.c.l.b16 %v331
        %v593 = vunpack.c.l.b16 %v332
        %v594 = vunpack.c.l.b16 %v333
        %v595 = vunpack.c.l.b16 %v334
        %v596 = vunpack.c.l.b16 %v335
        %v597 = vunpack.c.l.b16 %v336
        %v598 = vunpack.c.l.b16 %v337
        %v599 = vunpack.c.l.b16 %v338
        %v600 = vunpack.c.l.b16 %v339
        %v601 = vunpack.c.l.b16 %v340
        %v602 = vunpack.c.l.b16 %v341
        %v603 = vunpack.c.l.b16 %v342
        %v604 = vunpack.c.l.b16 %v343
        %v605 = vunpack.c.l.b16 %v344
        %v606 = vunpack.c.l.b16 %v345
        %v607 = vunpack.c.l.b16 %v346
        %v608 = vunpack.c.l.b16 %v347
        %v609 = vunpack.c.l.b16 %v348
        %v610 = vunpack.c.l.b16 %v349
        %v611 = vunpack.c.l.b16 %v350
        %v612 = vunpack.c.l.b16 %v351
        %v613 = vunpack.c.l.b16 %v352
        %v614 = vunpack.c.l.b16 %v353
        %v615 = vunpack.c.l.b16 %v354
        %v616 = vunpack.c.l.b16 %v355
        %v617 = vunpack.c.l.b16 %v356
        %v618 = vunpack.c.l.b16 %v357
        %v619 = vunpack.c.l.b16 %v358
        %v620 = vunpack.c.l.b16 %v359
        %v621 = vunpack.c.l.b16 %v360
        %v622 = vunpack.c.l.b16 %v361
        %v623 = vunpack.c.l.b16 %v362
        %v624 = vunpack.c.l.b16 %v363
        %v625 = vunpack.c.l.b16 %v364
        %v626 = vpack.c.b16 %v499, %v498
        %v627 = vpack.c.b16 %v501, %v500
        %v628 = vpack.c.b16 %v503, %v502
        %v629 = vpack.c.b16 %v505, %v504
        %v630 = vpack.c.b16 %v507, %v506
        %v631 = vpack.c.b16 %v509, %v508
        %v632 = vpack.c.b16 %v511, %v510
        %v633 = vpack.c.b16 %v513, %v512
        %v634 = vpack.c.b16 %v515, %v514
        %v635 = vpack.c.b16 %v517, %v516
        %v636 = vpack.c.b16 %v519, %v518
        %v637 = vpack.c.b16 %v521, %v520
        %v638 = vpack.c.b16 %v523, %v522
        %v639 = vpack.c.b16 %v525, %v524
        %v640 = vpack.c.b16 %v527, %v526
        %v641 = vpack.c.b16 %v529, %v528
        %v642 = vpack.c.b16 %v531, %v530
        %v643 = vpack.c.b16 %v533, %v532
        %v644 = vpack.c.b16 %v535, %v534
        %v645 = vpack.c.b16 %v537, %v536
        %v646 = vpack.c.b16 %v539, %v538
        %v647 = vpack.c.b16 %v541, %v540
        %v648 = vpack.c.b16 %v543, %v542
        %v649 = vpack.c.b16 %v545, %v544
        %v650 = vpack.c.b16 %v547, %v546
        %v651 = vpack.c.b16 %v549, %v548
        %v652 = vpack.c.b16 %v551, %v550
        %v653 = vpack.c.b16 %v553, %v552
        %v654 = vpack.c.b16 %v555, %v554
        %v655 = vpack.c.b16 %v557, %v556
        %v656 = vpack.c.b16 %v559, %v558
        %v657 = vpack.c.b16 %v561, %v560
        %v658 = vpack.c.b16 %v563, %v562
        %v659 = vpack.c.b16 %v565, %v564
        %v660 = vpack.c.b16 %v567, %v566
        %v661 = vpack.c.b16 %v569, %v568
        %v662 = vpack.c.b16 %v571, %v570
        %v663 = vpack.c.b16 %v573, %v572
        %v664 = vpack.c.b16 %v575, %v574
        %v665 = vpack.c.b16 %v577, %v576
        %v666 = vpack.c.b16 %v579, %v578
        %v667 = vpack.c.b16 %v581, %v580
        %v668 = vpack.c.b16 %v583, %v582
        %v669 = vpack.c.b16 %v585, %v584
        %v670 = vpack.c.b16 %v587, %v586
        %v671 = vpack.c.b16 %v589, %v588
        %v672 = vpack.c.b16 %v591, %v590
        %v673 = vpack.c.b16 %v593, %v592
        %v674 = vpack.c.b16 %v595, %v594
        %v675 = vpack.c.b16 %v597, %v596
        %v676 = vpack.c.b16 %v599, %v598
        %v677 = vpack.c.b16 %v601, %v600
        %v678 = vpack.c.b16 %v603, %v602
        %v679 = vpack.c.b16 %v605, %v604
        %v680 = vpack.c.b16 %v607, %v606
        %v681 = vpack.c.b16 %v609, %v608
        %v682 = vpack.c.b16 %v611, %v610
        %v683 = vpack.c.b16 %v613, %v612
        %v684 = vpack.c.b16 %v615, %v614
        %v685 = vpack.c.b16 %v617, %v616
        %v686 = vpack.c.b16 %v619, %v618
        %v687 = vpack.c.b16 %v621, %v620
        %v688 = vpack.c.b16 %v623, %v622
        %v689 = vpack.c.b16 %v625, %v624
        %v695 = vunpack.c.l.b16 %v365
        %v696 = vunpack.c.l.b16 %v366
        %v697 = vunpack.c.l.b16 %v367
        %v698 = vunpack.c.l.b16 %v368
        %v699 = vunpack.c.l.b16 %v369
        %v700 = vpack.c.b16 %v696, %v695
        %v701 = vpack.c.b16 %v698, %v697
        %v702 = vpack.c.b16 %v699, %v699
        %vm705 = vcmask 293888
        %v707 = vsel %vm705, %v626, 0
        %v710 = vsel %vm705, %v627, 0
        %v713 = vsel %vm705, %v628, 0
        %v716 = vsel %vm705, %v629, 0
        %v719 = vsel %vm705, %v630, 0
        %v722 = vsel %vm705, %v631, 0
        %v725 = vsel %vm705, %v632, 0
        %v728 = vsel %vm705, %v633, 0
        %v731 = vsel %vm705, %v634, 0
        %v734 = vsel %vm705, %v635, 0
        %v737 = vsel %vm705, %v636, 0
        %v740 = vsel %vm705, %v637, 0
        %v743 = vsel %vm705, %v638, 0
        %v746 = vsel %vm705, %v639, 0
        %v749 = vsel %vm705, %v640, 0
        %v752 = vsel %vm705, %v641, 0
        %v755 = vsel %vm705, %v642, 0
        %v758 = vsel %vm705, %v643, 0
        %v761 = vsel %vm705, %v644, 0
        %v764 = vsel %vm705, %v645, 0
        %v767 = vsel %vm705, %v646, 0
        %v770 = vsel %vm705, %v647, 0
        %v773 = vsel %vm705, %v648, 0
        %v776 = vsel %vm705, %v649, 0
        %v779 = vsel %vm705, %v650, 0
        %v782 = vsel %vm705, %v651, 0
        %v785 = vsel %vm705, %v652, 0
        %v788 = vsel %vm705, %v653, 0
        %v791 = vsel %vm705, %v654, 0
        %v794 = vsel %vm705, %v655, 0
        %v797 = vsel %vm705, %v656, 0
        %v800 = vsel %vm705, %v657, 0
        %v803 = vsel %vm705, %v658, 0
        %v806 = vsel %vm705, %v659, 0
        %v809 = vsel %vm705, %v660, 0
        %v812 = vsel %vm705, %v661, 0
        %v815 = vsel %vm705, %v662, 0
        %v818 = vsel %vm705, %v663, 0
        %v821 = vsel %vm705, %v664, 0
        %v824 = vsel %vm705, %v665, 0
        %v827 = vsel %vm705, %v666, 0
        %v830 = vsel %vm705, %v667, 0
        %v833 = vsel %vm705, %v668, 0
        %v836 = vsel %vm705, %v669, 0
        %v839 = vsel %vm705, %v670, 0
        %v842 = vsel %vm705, %v671, 0
        %v845 = vsel %vm705, %v672, 0
        %v848 = vsel %vm705, %v673, 0
        %v851 = vsel %vm705, %v674, 0
        %v854 = vsel %vm705, %v675, 0
        %v857 = vsel %vm705, %v676, 0
        %v860 = vsel %vm705, %v677, 0
        %v863 = vsel %vm705, %v678, 0
        %v866 = vsel %vm705, %v679, 0
        %v869 = vsel %vm705, %v680, 0
        %v872 = vsel %vm705, %v681, 0
        %v875 = vsel %vm705, %v682, 0
        %v878 = vsel %vm705, %v683, 0
        %v881 = vsel %vm705, %v684, 0
        %v884 = vsel %vm705, %v685, 0
        %v887 = vsel %vm705, %v686, 0
        %v890 = vsel %vm705, %v687, 0
        %v893 = vsel %vm705, %v688, 0
        %v896 = vsel %vm705, %v689, 0
        %vm898 = vcmask 1041408
        %v900 = vsel %vm898, %v702, 0
        %902 = vmatprep.subr.bf16.mxu0 0
        %903 = vmatpush1.bf16.msra.mxu0 %v700
        %904 = vmatprep.subr.bf16.mxu0 0
        %905 = vmatpush1.bf16.msra.mxu0 %v701
        %906 = vmatprep.subr.bf16.mxu0 0
        %907 = vmatpush1.bf16.msra.mxu0 %v900
        %908 = vmatprep.subr.bf16.mxu0 0
        %909 = vmatpush1.bf16.msra.mxu0 0
        %910 = vmatprep.subr.bf16.mxu0 0
        %911 = vmatpush1.bf16.msra.mxu0 0
        %912 = vmatprep.subr.bf16.mxu0 0
        %913 = vmatpush1.bf16.msra.mxu0 0
        %914 = vmatprep.subr.bf16.mxu0 0
        %915 = vmatpush1.bf16.msra.mxu0 0
        %916 = vmatprep.subr.bf16.mxu0 0
        %917 = vmatpush1.bf16.msra.mxu0 0
        %918 = vmatprep.subr.bf16.mxu0 0
        %919 = vmatpush1.bf16.msra.mxu0 0
        %920 = vmatprep.subr.bf16.mxu0 0
        %921 = vmatpush1.bf16.msra.mxu0 0
        %922 = vmatprep.subr.bf16.mxu0 0
        %923 = vmatpush1.bf16.msra.mxu0 0
        %924 = vmatprep.subr.bf16.mxu0 0
        %925 = vmatpush1.bf16.msra.mxu0 0
        %926 = vmatprep.subr.bf16.mxu0 0
        %927 = vmatpush1.bf16.msra.mxu0 0
        %928 = vmatprep.subr.bf16.mxu0 0
        %929 = vmatpush1.bf16.msra.mxu0 0
        %930 = vmatprep.subr.bf16.mxu0 0
        %931 = vmatpush1.bf16.msra.mxu0 0
        %932 = vmatprep.subr.bf16.mxu0 0
        %933 = vmatpush1.bf16.msra.mxu0 0
        %934 = vmatprep.mubr.bf16.mxu0 0
        %935 = vmatmul.mubr.bf16.gmra.mrb[0].mxu0 %v707
        %v936 = vpop.f32.mrb[0].mxu0
        %v937 = vadd.f32 0.0, %v936
        %v938 = vpop.f32.mrb[0].mxu0
        %v939 = vpop.f32.mrb[0].mxu0
        %v940 = vadd.f32 0.0, %v939
        %v941 = vpop.f32.mrb[0].mxu0
        %942 = vmatprep.mubr.bf16.mxu0 0
        %943 = vmatmul.mubr.bf16.gmra.mrb[0].mxu0 %v710
        %v944 = vpop.f32.mrb[0].mxu0
        %v945 = vadd.f32 0.0, %v944
        %v946 = vpop.f32.mrb[0].mxu0
        %v947 = vpop.f32.mrb[0].mxu0
        %v948 = vadd.f32 0.0, %v947
        %v949 = vpop.f32.mrb[0].mxu0
        %950 = vmatprep.mubr.bf16.mxu0 0
        %951 = vmatmul.mubr.bf16.gmra.mrb[0].mxu0 %v713
        %v952 = vpop.f32.mrb[0].mxu0
        %v953 = vadd.f32 0.0, %v952
        %v954 = vpop.f32.mrb[0].mxu0
        %v955 = vpop.f32.mrb[0].mxu0
        %v956 = vadd.f32 0.0, %v955
        %v957 = vpop.f32.mrb[0].mxu0
        %958 = vmatprep.mubr.bf16.mxu0 0
        %959 = vmatmul.mubr.bf16.gmra.mrb[0].mxu0 %v716
        %v960 = vpop.f32.mrb[0].mxu0
        %v961 = vadd.f32 0.0, %v960
        %v962 = vpop.f32.mrb[0].mxu0
        %v963 = vpop.f32.mrb[0].mxu0
        %v964 = vadd.f32 0.0, %v963
        %v965 = vpop.f32.mrb[0].mxu0
        %966 = vmatprep.mubr.bf16.mxu0 0
        %967 = vmatmul.mubr.bf16.gmra.mrb[0].mxu0 %v719
        %v968 = vpop.f32.mrb[0].mxu0
        %v969 = vadd.f32 0.0, %v968
        %v970 = vpop.f32.mrb[0].mxu0
        %v971 = vpop.f32.mrb[0].mxu0
        %v972 = vadd.f32 0.0, %v971
        %v973 = vpop.f32.mrb[0].mxu0
        %974 = vmatprep.mubr.bf16.mxu0 0
        %975 = vmatmul.mubr.bf16.gmra.mrb[0].mxu0 %v722
        %v976 = vpop.f32.mrb[0].mxu0
        %v977 = vadd.f32 0.0, %v976
        %v978 = vpop.f32.mrb[0].mxu0
        %v979 = vpop.f32.mrb[0].mxu0
        %v980 = vadd.f32 0.0, %v979
        %v981 = vpop.f32.mrb[0].mxu0
        %982 = vmatprep.mubr.bf16.mxu0 0
        %983 = vmatmul.mubr.bf16.gmra.mrb[0].mxu0 %v725
        %v984 = vpop.f32.mrb[0].mxu0
        %v985 = vadd.f32 0.0, %v984
        %v986 = vpop.f32.mrb[0].mxu0
        %v987 = vpop.f32.mrb[0].mxu0
        %v988 = vadd.f32 0.0, %v987
        %v989 = vpop.f32.mrb[0].mxu0
        %990 = vmatprep.mubr.bf16.mxu0 0
        %991 = vmatmul.mubr.bf16.gmra.mrb[0].mxu0 %v728
        %v992 = vpop.f32.mrb[0].mxu0
        %v993 = vadd.f32 0.0, %v992
        %v994 = vpop.f32.mrb[0].mxu0
        %v995 = vpop.f32.mrb[0].mxu0
        %v996 = vadd.f32 0.0, %v995
        %v997 = vpop.f32.mrb[0].mxu0
        %998 = vmatprep.mubr.bf16.mxu0 0
        %999 = vmatmul.mubr.bf16.gmra.mrb[0].mxu0 %v731
        %v1000 = vpop.f32.mrb[0].mxu0
        %v1001 = vadd.f32 0.0, %v1000
        %v1002 = vpop.f32.mrb[0].mxu0
        %v1003 = vpop.f32.mrb[0].mxu0
        %v1004 = vadd.f32 0.0, %v1003
        %v1005 = vpop.f32.mrb[0].mxu0
        %1006 = vmatprep.mubr.bf16.mxu0 0
        %1007 = vmatmul.mubr.bf16.gmra.mrb[0].mxu0 %v734
        %v1008 = vpop.f32.mrb[0].mxu0
        %v1009 = vadd.f32 0.0, %v1008
        %v1010 = vpop.f32.mrb[0].mxu0
        %v1011 = vpop.f32.mrb[0].mxu0
        %v1012 = vadd.f32 0.0, %v1011
        %v1013 = vpop.f32.mrb[0].mxu0
        %1014 = vmatprep.mubr.bf16.mxu0 0
        %1015 = vmatmul.mubr.bf16.gmra.mrb[0].mxu0 %v737
        %v1016 = vpop.f32.mrb[0].mxu0
        %v1017 = vadd.f32 0.0, %v1016
        %v1018 = vpop.f32.mrb[0].mxu0
        %v1019 = vpop.f32.mrb[0].mxu0
        %v1020 = vadd.f32 0.0, %v1019
        %v1021 = vpop.f32.mrb[0].mxu0
        %1022 = vmatprep.mubr.bf16.mxu0 0
        %1023 = vmatmul.mubr.bf16.gmra.mrb[0].mxu0 %v740
        %v1024 = vpop.f32.mrb[0].mxu0
        %v1025 = vadd.f32 0.0, %v1024
        %v1026 = vpop.f32.mrb[0].mxu0
        %v1027 = vpop.f32.mrb[0].mxu0
        %v1028 = vadd.f32 0.0, %v1027
        %v1029 = vpop.f32.mrb[0].mxu0
        %1030 = vmatprep.mubr.bf16.mxu0 0
        %1031 = vmatmul.mubr.bf16.gmra.mrb[0].mxu0 %v743
        %v1032 = vpop.f32.mrb[0].mxu0
        %v1033 = vadd.f32 0.0, %v1032
        %v1034 = vpop.f32.mrb[0].mxu0
        %v1035 = vpop.f32.mrb[0].mxu0
        %v1036 = vadd.f32 0.0, %v1035
        %v1037 = vpop.f32.mrb[0].mxu0
        %1038 = vmatprep.mubr.bf16.mxu0 0
        %1039 = vmatmul.mubr.bf16.gmra.mrb[0].mxu0 %v746
        %v1040 = vpop.f32.mrb[0].mxu0
        %v1041 = vadd.f32 0.0, %v1040
        %v1042 = vpop.f32.mrb[0].mxu0
        %v1043 = vpop.f32.mrb[0].mxu0
        %v1044 = vadd.f32 0.0, %v1043
        %v1045 = vpop.f32.mrb[0].mxu0
        %1046 = vmatprep.mubr.bf16.mxu0 0
        %1047 = vmatmul.mubr.bf16.gmra.mrb[0].mxu0 %v749
        %v1048 = vpop.f32.mrb[0].mxu0
        %v1049 = vadd.f32 0.0, %v1048
        %v1050 = vpop.f32.mrb[0].mxu0
        %v1051 = vpop.f32.mrb[0].mxu0
        %v1052 = vadd.f32 0.0, %v1051
        %v1053 = vpop.f32.mrb[0].mxu0
        %1054 = vmatprep.mubr.bf16.mxu0 0
        %1055 = vmatmul.mubr.bf16.gmra.mrb[0].mxu0 %v752
        %v1056 = vpop.f32.mrb[0].mxu0
        %v1057 = vadd.f32 0.0, %v1056
        %v1058 = vpop.f32.mrb[0].mxu0
        %v1059 = vpop.f32.mrb[0].mxu0
        %v1060 = vadd.f32 0.0, %v1059
        %v1061 = vpop.f32.mrb[0].mxu0
        %1062 = vmatprep.mubr.bf16.mxu0 0
        %1063 = vmatmul.mubr.bf16.gmra.mrb[0].mxu0 %v755
        %v1064 = vpop.f32.mrb[0].mxu0
        %v1065 = vadd.f32 0.0, %v1064
        %v1066 = vpop.f32.mrb[0].mxu0
        %v1067 = vpop.f32.mrb[0].mxu0
        %v1068 = vadd.f32 0.0, %v1067
        %v1069 = vpop.f32.mrb[0].mxu0
        %1070 = vmatprep.mubr.bf16.mxu0 0
        %1071 = vmatmul.mubr.bf16.gmra.mrb[0].mxu0 %v758
        %v1072 = vpop.f32.mrb[0].mxu0
        %v1073 = vadd.f32 0.0, %v1072
        %v1074 = vpop.f32.mrb[0].mxu0
        %v1075 = vpop.f32.mrb[0].mxu0
        %v1076 = vadd.f32 0.0, %v1075
        %v1077 = vpop.f32.mrb[0].mxu0
        %1078 = vmatprep.mubr.bf16.mxu0 0
        %1079 = vmatmul.mubr.bf16.gmra.mrb[0].mxu0 %v761
        %v1080 = vpop.f32.mrb[0].mxu0
        %v1081 = vadd.f32 0.0, %v1080
        %v1082 = vpop.f32.mrb[0].mxu0
        %v1083 = vpop.f32.mrb[0].mxu0
        %v1084 = vadd.f32 0.0, %v1083
        %v1085 = vpop.f32.mrb[0].mxu0
        %1086 = vmatprep.mubr.bf16.mxu0 0
        %1087 = vmatmul.mubr.bf16.gmra.mrb[0].mxu0 %v764
        %v1088 = vpop.f32.mrb[0].mxu0
        %v1089 = vadd.f32 0.0, %v1088
        %v1090 = vpop.f32.mrb[0].mxu0
        %v1091 = vpop.f32.mrb[0].mxu0
        %v1092 = vadd.f32 0.0, %v1091
        %v1093 = vpop.f32.mrb[0].mxu0
        %1094 = vmatprep.mubr.bf16.mxu0 0
        %1095 = vmatmul.mubr.bf16.gmra.mrb[0].mxu0 %v767
        %v1096 = vpop.f32.mrb[0].mxu0
        %v1097 = vadd.f32 0.0, %v1096
        %v1098 = vpop.f32.mrb[0].mxu0
        %v1099 = vpop.f32.mrb[0].mxu0
        %v1100 = vadd.f32 0.0, %v1099
        %v1101 = vpop.f32.mrb[0].mxu0
        %1102 = vmatprep.mubr.bf16.mxu0 0
        %1103 = vmatmul.mubr.bf16.gmra.mrb[0].mxu0 %v770
        %v1104 = vpop.f32.mrb[0].mxu0
        %v1105 = vadd.f32 0.0, %v1104
        %v1106 = vpop.f32.mrb[0].mxu0
        %v1107 = vpop.f32.mrb[0].mxu0
        %v1108 = vadd.f32 0.0, %v1107
        %v1109 = vpop.f32.mrb[0].mxu0
        %1110 = vmatprep.mubr.bf16.mxu0 0
        %1111 = vmatmul.mubr.bf16.gmra.mrb[0].mxu0 %v773
        %v1112 = vpop.f32.mrb[0].mxu0
        %v1113 = vadd.f32 0.0, %v1112
        %v1114 = vpop.f32.mrb[0].mxu0
        %v1115 = vpop.f32.mrb[0].mxu0
        %v1116 = vadd.f32 0.0, %v1115
        %v1117 = vpop.f32.mrb[0].mxu0
        %1118 = vmatprep.mubr.bf16.mxu0 0
        %1119 = vmatmul.mubr.bf16.gmra.mrb[0].mxu0 %v776
        %v1120 = vpop.f32.mrb[0].mxu0
        %v1121 = vadd.f32 0.0, %v1120
        %v1122 = vpop.f32.mrb[0].mxu0
        %v1123 = vpop.f32.mrb[0].mxu0
        %v1124 = vadd.f32 0.0, %v1123
        %v1125 = vpop.f32.mrb[0].mxu0
        %1126 = vmatprep.mubr.bf16.mxu0 0
        %1127 = vmatmul.mubr.bf16.gmra.mrb[0].mxu0 %v779
        %v1128 = vpop.f32.mrb[0].mxu0
        %v1129 = vadd.f32 0.0, %v1128
        %v1130 = vpop.f32.mrb[0].mxu0
        %v1131 = vpop.f32.mrb[0].mxu0
        %v1132 = vadd.f32 0.0, %v1131
        %v1133 = vpop.f32.mrb[0].mxu0
        %1134 = vmatprep.mubr.bf16.mxu0 0
        %1135 = vmatmul.mubr.bf16.gmra.mrb[0].mxu0 %v782
        %v1136 = vpop.f32.mrb[0].mxu0
        %v1137 = vadd.f32 0.0, %v1136
        %v1138 = vpop.f32.mrb[0].mxu0
        %v1139 = vpop.f32.mrb[0].mxu0
        %v1140 = vadd.f32 0.0, %v1139
        %v1141 = vpop.f32.mrb[0].mxu0
        %1142 = vmatprep.mubr.bf16.mxu0 0
        %1143 = vmatmul.mubr.bf16.gmra.mrb[0].mxu0 %v785
        %v1144 = vpop.f32.mrb[0].mxu0
        %v1145 = vadd.f32 0.0, %v1144
        %v1146 = vpop.f32.mrb[0].mxu0
        %v1147 = vpop.f32.mrb[0].mxu0
        %v1148 = vadd.f32 0.0, %v1147
        %v1149 = vpop.f32.mrb[0].mxu0
        %1150 = vmatprep.mubr.bf16.mxu0 0
        %1151 = vmatmul.mubr.bf16.gmra.mrb[0].mxu0 %v788
        %v1152 = vpop.f32.mrb[0].mxu0
        %v1153 = vadd.f32 0.0, %v1152
        %v1154 = vpop.f32.mrb[0].mxu0
        %v1155 = vpop.f32.mrb[0].mxu0
        %v1156 = vadd.f32 0.0, %v1155
        %v1157 = vpop.f32.mrb[0].mxu0
        %1158 = vmatprep.mubr.bf16.mxu0 0
        %1159 = vmatmul.mubr.bf16.gmra.mrb[0].mxu0 %v791
        %v1160 = vpop.f32.mrb[0].mxu0
        %v1161 = vadd.f32 0.0, %v1160
        %v1162 = vpop.f32.mrb[0].mxu0
        %v1163 = vpop.f32.mrb[0].mxu0
        %v1164 = vadd.f32 0.0, %v1163
        %v1165 = vpop.f32.mrb[0].mxu0
        %1166 = vmatprep.mubr.bf16.mxu0 0
        %1167 = vmatmul.mubr.bf16.gmra.mrb[0].mxu0 %v794
        %v1168 = vpop.f32.mrb[0].mxu0
        %v1169 = vadd.f32 0.0, %v1168
        %v1170 = vpop.f32.mrb[0].mxu0
        %v1171 = vpop.f32.mrb[0].mxu0
        %v1172 = vadd.f32 0.0, %v1171
        %v1173 = vpop.f32.mrb[0].mxu0
        %1174 = vmatprep.mubr.bf16.mxu0 0
        %1175 = vmatmul.mubr.bf16.gmra.mrb[0].mxu0 %v797
        %v1176 = vpop.f32.mrb[0].mxu0
        %v1177 = vadd.f32 0.0, %v1176
        %v1178 = vpop.f32.mrb[0].mxu0
        %v1179 = vpop.f32.mrb[0].mxu0
        %v1180 = vadd.f32 0.0, %v1179
        %v1181 = vpop.f32.mrb[0].mxu0
        %1182 = vmatprep.mubr.bf16.mxu0 0
        %1183 = vmatmul.mubr.bf16.gmra.mrb[0].mxu0 %v800
        %v1184 = vpop.f32.mrb[0].mxu0
        %v1185 = vadd.f32 0.0, %v1184
        %v1186 = vpop.f32.mrb[0].mxu0
        %v1187 = vpop.f32.mrb[0].mxu0
        %v1188 = vadd.f32 0.0, %v1187
        %v1189 = vpop.f32.mrb[0].mxu0
        %1190 = vmatprep.mubr.bf16.mxu0 0
        %1191 = vmatmul.mubr.bf16.gmra.mrb[0].mxu0 %v803
        %v1192 = vpop.f32.mrb[0].mxu0
        %v1193 = vadd.f32 0.0, %v1192
        %v1194 = vpop.f32.mrb[0].mxu0
        %v1195 = vpop.f32.mrb[0].mxu0
        %v1196 = vadd.f32 0.0, %v1195
        %v1197 = vpop.f32.mrb[0].mxu0
        %1198 = vmatprep.mubr.bf16.mxu0 0
        %1199 = vmatmul.mubr.bf16.gmra.mrb[0].mxu0 %v806
        %v1200 = vpop.f32.mrb[0].mxu0
        %v1201 = vadd.f32 0.0, %v1200
        %v1202 = vpop.f32.mrb[0].mxu0
        %v1203 = vpop.f32.mrb[0].mxu0
        %v1204 = vadd.f32 0.0, %v1203
        %v1205 = vpop.f32.mrb[0].mxu0
        %1206 = vmatprep.mubr.bf16.mxu0 0
        %1207 = vmatmul.mubr.bf16.gmra.mrb[0].mxu0 %v809
        %v1208 = vpop.f32.mrb[0].mxu0
        %v1209 = vadd.f32 0.0, %v1208
        %v1210 = vpop.f32.mrb[0].mxu0
        %v1211 = vpop.f32.mrb[0].mxu0
        %v1212 = vadd.f32 0.0, %v1211
        %v1213 = vpop.f32.mrb[0].mxu0
        %1214 = vmatprep.mubr.bf16.mxu0 0
        %1215 = vmatmul.mubr.bf16.gmra.mrb[0].mxu0 %v812
        %v1216 = vpop.f32.mrb[0].mxu0
        %v1217 = vadd.f32 0.0, %v1216
        %v1218 = vpop.f32.mrb[0].mxu0
        %v1219 = vpop.f32.mrb[0].mxu0
        %v1220 = vadd.f32 0.0, %v1219
        %v1221 = vpop.f32.mrb[0].mxu0
        %1222 = vmatprep.mubr.bf16.mxu0 0
        %1223 = vmatmul.mubr.bf16.gmra.mrb[0].mxu0 %v815
        %v1224 = vpop.f32.mrb[0].mxu0
        %v1225 = vadd.f32 0.0, %v1224
        %v1226 = vpop.f32.mrb[0].mxu0
        %v1227 = vpop.f32.mrb[0].mxu0
        %v1228 = vadd.f32 0.0, %v1227
        %v1229 = vpop.f32.mrb[0].mxu0
        %1230 = vmatprep.mubr.bf16.mxu0 0
        %1231 = vmatmul.mubr.bf16.gmra.mrb[0].mxu0 %v818
        %v1232 = vpop.f32.mrb[0].mxu0
        %v1233 = vadd.f32 0.0, %v1232
        %v1234 = vpop.f32.mrb[0].mxu0
        %v1235 = vpop.f32.mrb[0].mxu0
        %v1236 = vadd.f32 0.0, %v1235
        %v1237 = vpop.f32.mrb[0].mxu0
        %1238 = vmatprep.mubr.bf16.mxu0 0
        %1239 = vmatmul.mubr.bf16.gmra.mrb[0].mxu0 %v821
        %v1240 = vpop.f32.mrb[0].mxu0
        %v1241 = vadd.f32 0.0, %v1240
        %v1242 = vpop.f32.mrb[0].mxu0
        %v1243 = vpop.f32.mrb[0].mxu0
        %v1244 = vadd.f32 0.0, %v1243
        %v1245 = vpop.f32.mrb[0].mxu0
        %1246 = vmatprep.mubr.bf16.mxu0 0
        %1247 = vmatmul.mubr.bf16.gmra.mrb[0].mxu0 %v824
        %v1248 = vpop.f32.mrb[0].mxu0
        %v1249 = vadd.f32 0.0, %v1248
        %v1250 = vpop.f32.mrb[0].mxu0
        %v1251 = vpop.f32.mrb[0].mxu0
        %v1252 = vadd.f32 0.0, %v1251
        %v1253 = vpop.f32.mrb[0].mxu0
        %1254 = vmatprep.mubr.bf16.mxu0 0
        %1255 = vmatmul.mubr.bf16.gmra.mrb[0].mxu0 %v827
        %v1256 = vpop.f32.mrb[0].mxu0
        %v1257 = vadd.f32 0.0, %v1256
        %v1258 = vpop.f32.mrb[0].mxu0
        %v1259 = vpop.f32.mrb[0].mxu0
        %v1260 = vadd.f32 0.0, %v1259
        %v1261 = vpop.f32.mrb[0].mxu0
        %1262 = vmatprep.mubr.bf16.mxu0 0
        %1263 = vmatmul.mubr.bf16.gmra.mrb[0].mxu0 %v830
        %v1264 = vpop.f32.mrb[0].mxu0
        %v1265 = vadd.f32 0.0, %v1264
        %v1266 = vpop.f32.mrb[0].mxu0
        %v1267 = vpop.f32.mrb[0].mxu0
        %v1268 = vadd.f32 0.0, %v1267
        %v1269 = vpop.f32.mrb[0].mxu0
        %1270 = vmatprep.mubr.bf16.mxu0 0
        %1271 = vmatmul.mubr.bf16.gmra.mrb[0].mxu0 %v833
        %v1272 = vpop.f32.mrb[0].mxu0
        %v1273 = vadd.f32 0.0, %v1272
        %v1274 = vpop.f32.mrb[0].mxu0
        %v1275 = vpop.f32.mrb[0].mxu0
        %v1276 = vadd.f32 0.0, %v1275
        %v1277 = vpop.f32.mrb[0].mxu0
        %1278 = vmatprep.mubr.bf16.mxu0 0
        %1279 = vmatmul.mubr.bf16.gmra.mrb[0].mxu0 %v836
        %v1280 = vpop.f32.mrb[0].mxu0
        %v1281 = vadd.f32 0.0, %v1280
        %v1282 = vpop.f32.mrb[0].mxu0
        %v1283 = vpop.f32.mrb[0].mxu0
        %v1284 = vadd.f32 0.0, %v1283
        %v1285 = vpop.f32.mrb[0].mxu0
        %1286 = vmatprep.mubr.bf16.mxu0 0
        %1287 = vmatmul.mubr.bf16.gmra.mrb[0].mxu0 %v839
        %v1288 = vpop.f32.mrb[0].mxu0
        %v1289 = vadd.f32 0.0, %v1288
        %v1290 = vpop.f32.mrb[0].mxu0
        %v1291 = vpop.f32.mrb[0].mxu0
        %v1292 = vadd.f32 0.0, %v1291
        %v1293 = vpop.f32.mrb[0].mxu0
        %1294 = vmatprep.mubr.bf16.mxu0 0
        %1295 = vmatmul.mubr.bf16.gmra.mrb[0].mxu0 %v842
        %v1296 = vpop.f32.mrb[0].mxu0
        %v1297 = vadd.f32 0.0, %v1296
        %v1298 = vpop.f32.mrb[0].mxu0
        %v1299 = vpop.f32.mrb[0].mxu0
        %v1300 = vadd.f32 0.0, %v1299
        %v1301 = vpop.f32.mrb[0].mxu0
        %1302 = vmatprep.mubr.bf16.mxu0 0
        %1303 = vmatmul.mubr.bf16.gmra.mrb[0].mxu0 %v845
        %v1304 = vpop.f32.mrb[0].mxu0
        %v1305 = vadd.f32 0.0, %v1304
        %v1306 = vpop.f32.mrb[0].mxu0
        %v1307 = vpop.f32.mrb[0].mxu0
        %v1308 = vadd.f32 0.0, %v1307
        %v1309 = vpop.f32.mrb[0].mxu0
        %1310 = vmatprep.mubr.bf16.mxu0 0
        %1311 = vmatmul.mubr.bf16.gmra.mrb[0].mxu0 %v848
        %v1312 = vpop.f32.mrb[0].mxu0
        %v1313 = vadd.f32 0.0, %v1312
        %v1314 = vpop.f32.mrb[0].mxu0
        %v1315 = vpop.f32.mrb[0].mxu0
        %v1316 = vadd.f32 0.0, %v1315
        %v1317 = vpop.f32.mrb[0].mxu0
        %1318 = vmatprep.mubr.bf16.mxu0 0
        %1319 = vmatmul.mubr.bf16.gmra.mrb[0].mxu0 %v851
        %v1320 = vpop.f32.mrb[0].mxu0
        %v1321 = vadd.f32 0.0, %v1320
        %v1322 = vpop.f32.mrb[0].mxu0
        %v1323 = vpop.f32.mrb[0].mxu0
        %v1324 = vadd.f32 0.0, %v1323
        %v1325 = vpop.f32.mrb[0].mxu0
        %1326 = vmatprep.mubr.bf16.mxu0 0
        %1327 = vmatmul.mubr.bf16.gmra.mrb[0].mxu0 %v854
        %v1328 = vpop.f32.mrb[0].mxu0
        %v1329 = vadd.f32 0.0, %v1328
        %v1330 = vpop.f32.mrb[0].mxu0
        %v1331 = vpop.f32.mrb[0].mxu0
        %v1332 = vadd.f32 0.0, %v1331
        %v1333 = vpop.f32.mrb[0].mxu0
        %1334 = vmatprep.mubr.bf16.mxu0 0
        %1335 = vmatmul.mubr.bf16.gmra.mrb[0].mxu0 %v857
        %v1336 = vpop.f32.mrb[0].mxu0
        %v1337 = vadd.f32 0.0, %v1336
        %v1338 = vpop.f32.mrb[0].mxu0
        %v1339 = vpop.f32.mrb[0].mxu0
        %v1340 = vadd.f32 0.0, %v1339
        %v1341 = vpop.f32.mrb[0].mxu0
        %1342 = vmatprep.mubr.bf16.mxu0 0
        %1343 = vmatmul.mubr.bf16.gmra.mrb[0].mxu0 %v860
        %v1344 = vpop.f32.mrb[0].mxu0
        %v1345 = vadd.f32 0.0, %v1344
        %v1346 = vpop.f32.mrb[0].mxu0
        %v1347 = vpop.f32.mrb[0].mxu0
        %v1348 = vadd.f32 0.0, %v1347
        %v1349 = vpop.f32.mrb[0].mxu0
        %1350 = vmatprep.mubr.bf16.mxu0 0
        %1351 = vmatmul.mubr.bf16.gmra.mrb[0].mxu0 %v863
        %v1352 = vpop.f32.mrb[0].mxu0
        %v1353 = vadd.f32 0.0, %v1352
        %v1354 = vpop.f32.mrb[0].mxu0
        %v1355 = vpop.f32.mrb[0].mxu0
        %v1356 = vadd.f32 0.0, %v1355
        %v1357 = vpop.f32.mrb[0].mxu0
        %1358 = vmatprep.mubr.bf16.mxu0 0
        %1359 = vmatmul.mubr.bf16.gmra.mrb[0].mxu0 %v866
        %v1360 = vpop.f32.mrb[0].mxu0
        %v1361 = vadd.f32 0.0, %v1360
        %v1362 = vpop.f32.mrb[0].mxu0
        %v1363 = vpop.f32.mrb[0].mxu0
        %v1364 = vadd.f32 0.0, %v1363
        %v1365 = vpop.f32.mrb[0].mxu0
        %1366 = vmatprep.mubr.bf16.mxu0 0
        %1367 = vmatmul.mubr.bf16.gmra.mrb[0].mxu0 %v869
        %v1368 = vpop.f32.mrb[0].mxu0
        %v1369 = vadd.f32 0.0, %v1368
        %v1370 = vpop.f32.mrb[0].mxu0
        %v1371 = vpop.f32.mrb[0].mxu0
        %v1372 = vadd.f32 0.0, %v1371
        %v1373 = vpop.f32.mrb[0].mxu0
        %1374 = vmatprep.mubr.bf16.mxu0 0
        %1375 = vmatmul.mubr.bf16.gmra.mrb[0].mxu0 %v872
        %v1376 = vpop.f32.mrb[0].mxu0
        %v1377 = vadd.f32 0.0, %v1376
        %v1378 = vpop.f32.mrb[0].mxu0
        %v1379 = vpop.f32.mrb[0].mxu0
        %v1380 = vadd.f32 0.0, %v1379
        %v1381 = vpop.f32.mrb[0].mxu0
        %1382 = vmatprep.mubr.bf16.mxu0 0
        %1383 = vmatmul.mubr.bf16.gmra.mrb[0].mxu0 %v875
        %v1384 = vpop.f32.mrb[0].mxu0
        %v1385 = vadd.f32 0.0, %v1384
        %v1386 = vpop.f32.mrb[0].mxu0
        %v1387 = vpop.f32.mrb[0].mxu0
        %v1388 = vadd.f32 0.0, %v1387
        %v1389 = vpop.f32.mrb[0].mxu0
        %1390 = vmatprep.mubr.bf16.mxu0 0
        %1391 = vmatmul.mubr.bf16.gmra.mrb[0].mxu0 %v878
        %v1392 = vpop.f32.mrb[0].mxu0
        %v1393 = vadd.f32 0.0, %v1392
        %v1394 = vpop.f32.mrb[0].mxu0
        %v1395 = vpop.f32.mrb[0].mxu0
        %v1396 = vadd.f32 0.0, %v1395
        %v1397 = vpop.f32.mrb[0].mxu0
        %1398 = vmatprep.mubr.bf16.mxu0 0
        %1399 = vmatmul.mubr.bf16.gmra.mrb[0].mxu0 %v881
        %v1400 = vpop.f32.mrb[0].mxu0
        %v1401 = vadd.f32 0.0, %v1400
        %v1402 = vpop.f32.mrb[0].mxu0
        %v1403 = vpop.f32.mrb[0].mxu0
        %v1404 = vadd.f32 0.0, %v1403
        %v1405 = vpop.f32.mrb[0].mxu0
        %1406 = vmatprep.mubr.bf16.mxu0 0
        %1407 = vmatmul.mubr.bf16.gmra.mrb[0].mxu0 %v884
        %v1408 = vpop.f32.mrb[0].mxu0
        %v1409 = vadd.f32 0.0, %v1408
        %v1410 = vpop.f32.mrb[0].mxu0
        %v1411 = vpop.f32.mrb[0].mxu0
        %v1412 = vadd.f32 0.0, %v1411
        %v1413 = vpop.f32.mrb[0].mxu0
        %1414 = vmatprep.mubr.bf16.mxu0 0
        %1415 = vmatmul.mubr.bf16.gmra.mrb[0].mxu0 %v887
        %v1416 = vpop.f32.mrb[0].mxu0
        %v1417 = vadd.f32 0.0, %v1416
        %v1418 = vpop.f32.mrb[0].mxu0
        %v1419 = vpop.f32.mrb[0].mxu0
        %v1420 = vadd.f32 0.0, %v1419
        %v1421 = vpop.f32.mrb[0].mxu0
        %1422 = vmatprep.mubr.bf16.mxu0 0
        %1423 = vmatmul.mubr.bf16.gmra.mrb[0].mxu0 %v890
        %v1424 = vpop.f32.mrb[0].mxu0
        %v1425 = vadd.f32 0.0, %v1424
        %v1426 = vpop.f32.mrb[0].mxu0
        %v1427 = vpop.f32.mrb[0].mxu0
        %v1428 = vadd.f32 0.0, %v1427
        %v1429 = vpop.f32.mrb[0].mxu0
        %1430 = vmatprep.mubr.bf16.mxu0 0
        %1431 = vmatmul.mubr.bf16.gmra.mrb[0].mxu0 %v893
        %v1432 = vpop.f32.mrb[0].mxu0
        %v1433 = vadd.f32 0.0, %v1432
        %v1434 = vpop.f32.mrb[0].mxu0
        %v1435 = vpop.f32.mrb[0].mxu0
        %v1436 = vadd.f32 0.0, %v1435
        %v1437 = vpop.f32.mrb[0].mxu0
        %1438 = vmatprep.mubr.bf16.mxu0 0
        %1439 = vmatmul.mubr.bf16.gmra.mrb[0].mxu0 %v896
        %v1440 = vpop.f32.mrb[0].mxu0
        %v1441 = vadd.f32 0.0, %v1440
        %v1442 = vpop.f32.mrb[0].mxu0
        %v1443 = vpop.f32.mrb[0].mxu0
        %v1444 = vadd.f32 0.0, %v1443
        %v1445 = vpop.f32.mrb[0].mxu0
        %1446 = vdwg.mxu0
        %v1447 = vadd.f32 %v937, %v940
        %v1448 = vadd.f32 %v1447, %v945
        %v1449 = vadd.f32 %v1448, %v948
        %v1450 = vadd.f32 %v1449, %v953
        %v1451 = vadd.f32 %v1450, %v956
        %v1452 = vadd.f32 %v1451, %v961
        %v1453 = vadd.f32 %v1452, %v964
        %v1454 = vadd.f32 %v1453, %v969
        %v1455 = vadd.f32 %v1454, %v972
        %v1456 = vadd.f32 %v1455, %v977
        %v1457 = vadd.f32 %v1456, %v980
        %v1458 = vadd.f32 %v1457, %v985
        %v1459 = vadd.f32 %v1458, %v988
        %v1460 = vadd.f32 %v1459, %v993
        %v1461 = vadd.f32 %v1460, %v996
        %v1462 = vadd.f32 %v1461, %v1001
        %v1463 = vadd.f32 %v1462, %v1004
        %v1464 = vadd.f32 %v1463, %v1009
        %v1465 = vadd.f32 %v1464, %v1012
        %v1466 = vadd.f32 %v1465, %v1017
        %v1467 = vadd.f32 %v1466, %v1020
        %v1468 = vadd.f32 %v1467, %v1025
        %v1469 = vadd.f32 %v1468, %v1028
        %v1470 = vadd.f32 %v1469, %v1033
        %v1471 = vadd.f32 %v1470, %v1036
        %v1472 = vadd.f32 %v1471, %v1041
        %v1473 = vadd.f32 %v1472, %v1044
        %v1474 = vadd.f32 %v1473, %v1049
        %v1475 = vadd.f32 %v1474, %v1052
        %v1476 = vadd.f32 %v1475, %v1057
        %v1477 = vadd.f32 %v1476, %v1060
        %v1478 = vadd.f32 %v1477, %v1065
        %v1479 = vadd.f32 %v1478, %v1068
        %v1480 = vadd.f32 %v1479, %v1073
        %v1481 = vadd.f32 %v1480, %v1076
        %v1482 = vadd.f32 %v1481, %v1081
        %v1483 = vadd.f32 %v1482, %v1084
        %v1484 = vadd.f32 %v1483, %v1089
        %v1485 = vadd.f32 %v1484, %v1092
        %v1486 = vadd.f32 %v1485, %v1097
        %v1487 = vadd.f32 %v1486, %v1100
        %v1488 = vadd.f32 %v1487, %v1105
        %v1489 = vadd.f32 %v1488, %v1108
        %v1490 = vadd.f32 %v1489, %v1113
        %v1491 = vadd.f32 %v1490, %v1116
        %v1492 = vadd.f32 %v1491, %v1121
        %v1493 = vadd.f32 %v1492, %v1124
        %v1494 = vadd.f32 %v1493, %v1129
        %v1495 = vadd.f32 %v1494, %v1132
        %v1496 = vadd.f32 %v1495, %v1137
        %v1497 = vadd.f32 %v1496, %v1140
        %v1498 = vadd.f32 %v1497, %v1145
        %v1499 = vadd.f32 %v1498, %v1148
        %v1500 = vadd.f32 %v1499, %v1153
        %v1501 = vadd.f32 %v1500, %v1156
        %v1502 = vadd.f32 %v1501, %v1161
        %v1503 = vadd.f32 %v1502, %v1164
        %v1504 = vadd.f32 %v1503, %v1169
        %v1505 = vadd.f32 %v1504, %v1172
        %v1506 = vadd.f32 %v1505, %v1177
        %v1507 = vadd.f32 %v1506, %v1180
        %v1508 = vadd.f32 %v1507, %v1185
        %v1509 = vadd.f32 %v1508, %v1188
        %v1510 = vadd.f32 %v1509, %v1193
        %v1511 = vadd.f32 %v1510, %v1196
        %v1512 = vadd.f32 %v1511, %v1201
        %v1513 = vadd.f32 %v1512, %v1204
        %v1514 = vadd.f32 %v1513, %v1209
        %v1515 = vadd.f32 %v1514, %v1212
        %v1516 = vadd.f32 %v1515, %v1217
        %v1517 = vadd.f32 %v1516, %v1220
        %v1518 = vadd.f32 %v1517, %v1225
        %v1519 = vadd.f32 %v1518, %v1228
        %v1520 = vadd.f32 %v1519, %v1233
        %v1521 = vadd.f32 %v1520, %v1236
        %v1522 = vadd.f32 %v1521, %v1241
        %v1523 = vadd.f32 %v1522, %v1244
        %v1524 = vadd.f32 %v1523, %v1249
        %v1525 = vadd.f32 %v1524, %v1252
        %v1526 = vadd.f32 %v1525, %v1257
        %v1527 = vadd.f32 %v1526, %v1260
        %v1528 = vadd.f32 %v1527, %v1265
        %v1529 = vadd.f32 %v1528, %v1268
        %v1530 = vadd.f32 %v1529, %v1273
        %v1531 = vadd.f32 %v1530, %v1276
        %v1532 = vadd.f32 %v1531, %v1281
        %v1533 = vadd.f32 %v1532, %v1284
        %v1534 = vadd.f32 %v1533, %v1289
        %v1535 = vadd.f32 %v1534, %v1292
        %v1536 = vadd.f32 %v1535, %v1297
        %v1537 = vadd.f32 %v1536, %v1300
        %v1538 = vadd.f32 %v1537, %v1305
        %v1539 = vadd.f32 %v1538, %v1308
        %v1540 = vadd.f32 %v1539, %v1313
        %v1541 = vadd.f32 %v1540, %v1316
        %v1542 = vadd.f32 %v1541, %v1321
        %v1543 = vadd.f32 %v1542, %v1324
        %v1544 = vadd.f32 %v1543, %v1329
        %v1545 = vadd.f32 %v1544, %v1332
        %v1546 = vadd.f32 %v1545, %v1337
        %v1547 = vadd.f32 %v1546, %v1340
        %v1548 = vadd.f32 %v1547, %v1345
        %v1549 = vadd.f32 %v1548, %v1348
        %v1550 = vadd.f32 %v1549, %v1353
        %v1551 = vadd.f32 %v1550, %v1356
        %v1552 = vadd.f32 %v1551, %v1361
        %v1553 = vadd.f32 %v1552, %v1364
        %v1554 = vadd.f32 %v1553, %v1369
        %v1555 = vadd.f32 %v1554, %v1372
        %v1556 = vadd.f32 %v1555, %v1377
        %v1557 = vadd.f32 %v1556, %v1380
        %v1558 = vadd.f32 %v1557, %v1385
        %v1559 = vadd.f32 %v1558, %v1388
        %v1560 = vadd.f32 %v1559, %v1393
        %v1561 = vadd.f32 %v1560, %v1396
        %v1562 = vadd.f32 %v1561, %v1401
        %v1563 = vadd.f32 %v1562, %v1404
        %v1564 = vadd.f32 %v1563, %v1409
        %v1565 = vadd.f32 %v1564, %v1412
        %v1566 = vadd.f32 %v1565, %v1417
        %v1567 = vadd.f32 %v1566, %v1420
        %v1568 = vadd.f32 %v1567, %v1425
        %v1569 = vadd.f32 %v1568, %v1428
        %v1570 = vadd.f32 %v1569, %v1433
        %v1571 = vadd.f32 %v1570, %v1436
        %v1572 = vadd.f32 %v1571, %v1441
        %v1573 = vadd.f32 %v1572, %v1444
        %v1574 = vrot.slane %v1573, 4
        %v1575 = vadd.f32 %v1573, %v1574
        %v1576 = vrot.slane %v1575, 2
        %v1577 = vadd.f32 %v1575, %v1576
        %v1578 = vrot.slane %v1577, 1
        %v1579 = vadd.f32 %v1577, %v1578
        %1580 = vst [vmem:[%s227] sm:$0xff] %v1579
        %v1581 = vmul.f32 %v937, %v937
        %v1582 = vmul.f32 %v940, %v940
        %v1583 = vmul.f32 %v945, %v945
        %v1584 = vmul.f32 %v948, %v948
        %v1585 = vmul.f32 %v953, %v953
        %v1586 = vmul.f32 %v956, %v956
        %v1587 = vmul.f32 %v961, %v961
        %v1588 = vmul.f32 %v964, %v964
        %v1589 = vmul.f32 %v969, %v969
        %v1590 = vmul.f32 %v972, %v972
        %v1591 = vmul.f32 %v977, %v977
        %v1592 = vmul.f32 %v980, %v980
        %v1593 = vmul.f32 %v985, %v985
        %v1594 = vmul.f32 %v988, %v988
        %v1595 = vmul.f32 %v993, %v993
        %v1596 = vmul.f32 %v996, %v996
        %v1597 = vmul.f32 %v1001, %v1001
        %v1598 = vmul.f32 %v1004, %v1004
        %v1599 = vmul.f32 %v1009, %v1009
        %v1600 = vmul.f32 %v1012, %v1012
        %v1601 = vmul.f32 %v1017, %v1017
        %v1602 = vmul.f32 %v1020, %v1020
        %v1603 = vmul.f32 %v1025, %v1025
        %v1604 = vmul.f32 %v1028, %v1028
        %v1605 = vmul.f32 %v1033, %v1033
        %v1606 = vmul.f32 %v1036, %v1036
        %v1607 = vmul.f32 %v1041, %v1041
        %v1608 = vmul.f32 %v1044, %v1044
        %v1609 = vmul.f32 %v1049, %v1049
        %v1610 = vmul.f32 %v1052, %v1052
        %v1611 = vmul.f32 %v1057, %v1057
        %v1612 = vmul.f32 %v1060, %v1060
        %v1613 = vmul.f32 %v1065, %v1065
        %v1614 = vmul.f32 %v1068, %v1068
        %v1615 = vmul.f32 %v1073, %v1073
        %v1616 = vmul.f32 %v1076, %v1076
        %v1617 = vmul.f32 %v1081, %v1081
        %v1618 = vmul.f32 %v1084, %v1084
        %v1619 = vmul.f32 %v1089, %v1089
        %v1620 = vmul.f32 %v1092, %v1092
        %v1621 = vmul.f32 %v1097, %v1097
        %v1622 = vmul.f32 %v1100, %v1100
        %v1623 = vmul.f32 %v1105, %v1105
        %v1624 = vmul.f32 %v1108, %v1108
        %v1625 = vmul.f32 %v1113, %v1113
        %v1626 = vmul.f32 %v1116, %v1116
        %v1627 = vmul.f32 %v1121, %v1121
        %v1628 = vmul.f32 %v1124, %v1124
        %v1629 = vmul.f32 %v1129, %v1129
        %v1630 = vmul.f32 %v1132, %v1132
        %v1631 = vmul.f32 %v1137, %v1137
        %v1632 = vmul.f32 %v1140, %v1140
        %v1633 = vmul.f32 %v1145, %v1145
        %v1634 = vmul.f32 %v1148, %v1148
        %v1635 = vmul.f32 %v1153, %v1153
        %v1636 = vmul.f32 %v1156, %v1156
        %v1637 = vmul.f32 %v1161, %v1161
        %v1638 = vmul.f32 %v1164, %v1164
        %v1639 = vmul.f32 %v1169, %v1169
        %v1640 = vmul.f32 %v1172, %v1172
        %v1641 = vmul.f32 %v1177, %v1177
        %v1642 = vmul.f32 %v1180, %v1180
        %v1643 = vmul.f32 %v1185, %v1185
        %v1644 = vmul.f32 %v1188, %v1188
        %v1645 = vmul.f32 %v1193, %v1193
        %v1646 = vmul.f32 %v1196, %v1196
        %v1647 = vmul.f32 %v1201, %v1201
        %v1648 = vmul.f32 %v1204, %v1204
        %v1649 = vmul.f32 %v1209, %v1209
        %v1650 = vmul.f32 %v1212, %v1212
        %v1651 = vmul.f32 %v1217, %v1217
        %v1652 = vmul.f32 %v1220, %v1220
        %v1653 = vmul.f32 %v1225, %v1225
        %v1654 = vmul.f32 %v1228, %v1228
        %v1655 = vmul.f32 %v1233, %v1233
        %v1656 = vmul.f32 %v1236, %v1236
        %v1657 = vmul.f32 %v1241, %v1241
        %v1658 = vmul.f32 %v1244, %v1244
        %v1659 = vmul.f32 %v1249, %v1249
        %v1660 = vmul.f32 %v1252, %v1252
        %v1661 = vmul.f32 %v1257, %v1257
        %v1662 = vmul.f32 %v1260, %v1260
        %v1663 = vmul.f32 %v1265, %v1265
        %v1664 = vmul.f32 %v1268, %v1268
        %v1665 = vmul.f32 %v1273, %v1273
        %v1666 = vmul.f32 %v1276, %v1276
        %v1667 = vmul.f32 %v1281, %v1281
        %v1668 = vmul.f32 %v1284, %v1284
        %v1669 = vmul.f32 %v1289, %v1289
        %v1670 = vmul.f32 %v1292, %v1292
        %v1671 = vmul.f32 %v1297, %v1297
        %v1672 = vmul.f32 %v1300, %v1300
        %v1673 = vmul.f32 %v1305, %v1305
        %v1674 = vmul.f32 %v1308, %v1308
        %v1675 = vmul.f32 %v1313, %v1313
        %v1676 = vmul.f32 %v1316, %v1316
        %v1677 = vmul.f32 %v1321, %v1321
        %v1678 = vmul.f32 %v1324, %v1324
        %v1679 = vmul.f32 %v1329, %v1329
        %v1680 = vmul.f32 %v1332, %v1332
        %v1681 = vmul.f32 %v1337, %v1337
        %v1682 = vmul.f32 %v1340, %v1340
        %v1683 = vmul.f32 %v1345, %v1345
        %v1684 = vmul.f32 %v1348, %v1348
        %v1685 = vmul.f32 %v1353, %v1353
        %v1686 = vmul.f32 %v1356, %v1356
        %v1687 = vmul.f32 %v1361, %v1361
        %v1688 = vmul.f32 %v1364, %v1364
        %v1689 = vmul.f32 %v1369, %v1369
        %v1690 = vmul.f32 %v1372, %v1372
        %v1691 = vmul.f32 %v1377, %v1377
        %v1692 = vmul.f32 %v1380, %v1380
        %v1693 = vmul.f32 %v1385, %v1385
        %v1694 = vmul.f32 %v1388, %v1388
        %v1695 = vmul.f32 %v1393, %v1393
        %v1696 = vmul.f32 %v1396, %v1396
        %v1697 = vmul.f32 %v1401, %v1401
        %v1698 = vmul.f32 %v1404, %v1404
        %v1699 = vmul.f32 %v1409, %v1409
        %v1700 = vmul.f32 %v1412, %v1412
        %v1701 = vmul.f32 %v1417, %v1417
        %v1702 = vmul.f32 %v1420, %v1420
        %v1703 = vmul.f32 %v1425, %v1425
        %v1704 = vmul.f32 %v1428, %v1428
        %v1705 = vmul.f32 %v1433, %v1433
        %v1706 = vmul.f32 %v1436, %v1436
        %v1707 = vmul.f32 %v1441, %v1441
        %v1708 = vmul.f32 %v1444, %v1444
        %v1709 = vadd.f32 %v1581, %v1582
        %v1710 = vadd.f32 %v1709, %v1583
        %v1711 = vadd.f32 %v1710, %v1584
        %v1712 = vadd.f32 %v1711, %v1585
        %v1713 = vadd.f32 %v1712, %v1586
        %v1714 = vadd.f32 %v1713, %v1587
        %v1715 = vadd.f32 %v1714, %v1588
        %v1716 = vadd.f32 %v1715, %v1589
        %v1717 = vadd.f32 %v1716, %v1590
        %v1718 = vadd.f32 %v1717, %v1591
        %v1719 = vadd.f32 %v1718, %v1592
        %v1720 = vadd.f32 %v1719, %v1593
        %v1721 = vadd.f32 %v1720, %v1594
        %v1722 = vadd.f32 %v1721, %v1595
        %v1723 = vadd.f32 %v1722, %v1596
        %v1724 = vadd.f32 %v1723, %v1597
        %v1725 = vadd.f32 %v1724, %v1598
        %v1726 = vadd.f32 %v1725, %v1599
        %v1727 = vadd.f32 %v1726, %v1600
        %v1728 = vadd.f32 %v1727, %v1601
        %v1729 = vadd.f32 %v1728, %v1602
        %v1730 = vadd.f32 %v1729, %v1603
        %v1731 = vadd.f32 %v1730, %v1604
        %v1732 = vadd.f32 %v1731, %v1605
        %v1733 = vadd.f32 %v1732, %v1606
        %v1734 = vadd.f32 %v1733, %v1607
        %v1735 = vadd.f32 %v1734, %v1608
        %v1736 = vadd.f32 %v1735, %v1609
        %v1737 = vadd.f32 %v1736, %v1610
        %v1738 = vadd.f32 %v1737, %v1611
        %v1739 = vadd.f32 %v1738, %v1612
        %v1740 = vadd.f32 %v1739, %v1613
        %v1741 = vadd.f32 %v1740, %v1614
        %v1742 = vadd.f32 %v1741, %v1615
        %v1743 = vadd.f32 %v1742, %v1616
        %v1744 = vadd.f32 %v1743, %v1617
        %v1745 = vadd.f32 %v1744, %v1618
        %v1746 = vadd.f32 %v1745, %v1619
        %v1747 = vadd.f32 %v1746, %v1620
        %v1748 = vadd.f32 %v1747, %v1621
        %v1749 = vadd.f32 %v1748, %v1622
        %v1750 = vadd.f32 %v1749, %v1623
        %v1751 = vadd.f32 %v1750, %v1624
        %v1752 = vadd.f32 %v1751, %v1625
        %v1753 = vadd.f32 %v1752, %v1626
        %v1754 = vadd.f32 %v1753, %v1627
        %v1755 = vadd.f32 %v1754, %v1628
        %v1756 = vadd.f32 %v1755, %v1629
        %v1757 = vadd.f32 %v1756, %v1630
        %v1758 = vadd.f32 %v1757, %v1631
        %v1759 = vadd.f32 %v1758, %v1632
        %v1760 = vadd.f32 %v1759, %v1633
        %v1761 = vadd.f32 %v1760, %v1634
        %v1762 = vadd.f32 %v1761, %v1635
        %v1763 = vadd.f32 %v1762, %v1636
        %v1764 = vadd.f32 %v1763, %v1637
        %v1765 = vadd.f32 %v1764, %v1638
        %v1766 = vadd.f32 %v1765, %v1639
        %v1767 = vadd.f32 %v1766, %v1640
        %v1768 = vadd.f32 %v1767, %v1641
        %v1769 = vadd.f32 %v1768, %v1642
        %v1770 = vadd.f32 %v1769, %v1643
        %v1771 = vadd.f32 %v1770, %v1644
        %v1772 = vadd.f32 %v1771, %v1645
        %v1773 = vadd.f32 %v1772, %v1646
        %v1774 = vadd.f32 %v1773, %v1647
        %v1775 = vadd.f32 %v1774, %v1648
        %v1776 = vadd.f32 %v1775, %v1649
        %v1777 = vadd.f32 %v1776, %v1650
        %v1778 = vadd.f32 %v1777, %v1651
        %v1779 = vadd.f32 %v1778, %v1652
        %v1780 = vadd.f32 %v1779, %v1653
        %v1781 = vadd.f32 %v1780, %v1654
        %v1782 = vadd.f32 %v1781, %v1655
        %v1783 = vadd.f32 %v1782, %v1656
        %v1784 = vadd.f32 %v1783, %v1657
        %v1785 = vadd.f32 %v1784, %v1658
        %v1786 = vadd.f32 %v1785, %v1659
        %v1787 = vadd.f32 %v1786, %v1660
        %v1788 = vadd.f32 %v1787, %v1661
        %v1789 = vadd.f32 %v1788, %v1662
        %v1790 = vadd.f32 %v1789, %v1663
        %v1791 = vadd.f32 %v1790, %v1664
        %v1792 = vadd.f32 %v1791, %v1665
        %v1793 = vadd.f32 %v1792, %v1666
        %v1794 = vadd.f32 %v1793, %v1667
        %v1795 = vadd.f32 %v1794, %v1668
        %v1796 = vadd.f32 %v1795, %v1669
        %v1797 = vadd.f32 %v1796, %v1670
        %v1798 = vadd.f32 %v1797, %v1671
        %v1799 = vadd.f32 %v1798, %v1672
        %v1800 = vadd.f32 %v1799, %v1673
        %v1801 = vadd.f32 %v1800, %v1674
        %v1802 = vadd.f32 %v1801, %v1675
        %v1803 = vadd.f32 %v1802, %v1676
        %v1804 = vadd.f32 %v1803, %v1677
        %v1805 = vadd.f32 %v1804, %v1678
        %v1806 = vadd.f32 %v1805, %v1679
        %v1807 = vadd.f32 %v1806, %v1680
        %v1808 = vadd.f32 %v1807, %v1681
        %v1809 = vadd.f32 %v1808, %v1682
        %v1810 = vadd.f32 %v1809, %v1683
        %v1811 = vadd.f32 %v1810, %v1684
        %v1812 = vadd.f32 %v1811, %v1685
        %v1813 = vadd.f32 %v1812, %v1686
        %v1814 = vadd.f32 %v1813, %v1687
        %v1815 = vadd.f32 %v1814, %v1688
        %v1816 = vadd.f32 %v1815, %v1689
        %v1817 = vadd.f32 %v1816, %v1690
        %v1818 = vadd.f32 %v1817, %v1691
        %v1819 = vadd.f32 %v1818, %v1692
        %v1820 = vadd.f32 %v1819, %v1693
        %v1821 = vadd.f32 %v1820, %v1694
        %v1822 = vadd.f32 %v1821, %v1695
        %v1823 = vadd.f32 %v1822, %v1696
        %v1824 = vadd.f32 %v1823, %v1697
        %v1825 = vadd.f32 %v1824, %v1698
        %v1826 = vadd.f32 %v1825, %v1699
        %v1827 = vadd.f32 %v1826, %v1700
        %v1828 = vadd.f32 %v1827, %v1701
        %v1829 = vadd.f32 %v1828, %v1702
        %v1830 = vadd.f32 %v1829, %v1703
        %v1831 = vadd.f32 %v1830, %v1704
        %v1832 = vadd.f32 %v1831, %v1705
        %v1833 = vadd.f32 %v1832, %v1706
        %v1834 = vadd.f32 %v1833, %v1707
        %v1835 = vadd.f32 %v1834, %v1708
        %v1836 = vrot.slane %v1835, 4
        %v1837 = vadd.f32 %v1835, %v1836
        %v1838 = vrot.slane %v1837, 2
        %v1839 = vadd.f32 %v1837, %v1838
        %v1840 = vrot.slane %v1839, 1
        %v1841 = vadd.f32 %v1839, %v1840
        %1842 = vst [vmem:[%s234] sm:$0xff] %v1841
        %s1843 = sand.u32 %s96, 1
        %s1844 = scalar_lea.sflag [#allocation4], %s1843
        %s1845 = sand.u32 %s96, 1
        %s1846 = smul.addr %s1845, 8
        %s1847 = scalar_lea.vmem [#allocation7], %s1846
        %s1848 = sand.u32 %s124, 1
        %s1849 = scalar_lea.sflag [#allocation9], %s1848
        %s1850 = sand.u32 %s124, 1
        %s1851 = smul.addr %s1850, 8
        %s1852 = scalar_lea.vmem [#allocation8], %s1851
        // Predicated region
        $region37: #{up_conv_forward.2} parent=27 // pred_check
          %p1853 = pneg %p106
        $region38: #{up_conv_forward.2} parent=27 // pred_check_branch
          %1855 = sbr.rel (%p1853) target = $region40
        $region39: #{up_conv_forward.2} parent=27 // pred_region
          %s1857 = ssub.s32 128, 128
          %1858 = vsyncadd %s1844, %s1857
          %s1859 = sadd.s32 %s30, %s29
          %s1860 = smul.addr %s1859, 128
          %s1861 = scalar_lea.hbm %s2, %s1860
          %s1863 = sshll.u32 %s1847, 4
          %s1864 = int_to_ptr.vmem [resolvable:$true] %s1863
          %1866 = dma.vmem_to_hbm [thread:$0]  %s1864, 128, %s1861, %s1844
        $region40: #{up_conv_forward.2} parent=27 // pred_fallthru
          _
        // Predicated region
        $region41: #{up_conv_forward.2} parent=27 // pred_check
          %p1867 = pneg %p134
        $region42: #{up_conv_forward.2} parent=27 // pred_check_branch
          %1869 = sbr.rel (%p1867) target = $region44
        $region43: #{up_conv_forward.2} parent=27 // pred_region
          %s1871 = ssub.s32 128, 128
          %1872 = vsyncadd %s1849, %s1871
          %s1873 = sadd.s32 %s30, %s29
          %s1874 = smul.addr %s1873, 128
          %s1875 = scalar_lea.hbm %s3, %s1874
          %s1877 = sshll.u32 %s1852, 4
          %s1878 = int_to_ptr.vmem [resolvable:$true] %s1877
          %1880 = dma.vmem_to_hbm [thread:$0]  %s1878, 128, %s1875, %s1849
        $region44: #{up_conv_forward.2} parent=27 // pred_fallthru
          _
      $region28: #{up_conv_forward.2} parent=5 // pred_fallthru
        _
      %p1881 = scmp.le.s32.totalorder 2, %s20
      // Predicated region
      $region45: #{up_conv_forward.2} parent=5 // pred_check
        %p1882 = pneg %p1881
      $region46: #{up_conv_forward.2} parent=5 // pred_check_branch
        %1884 = sbr.rel (%p1882) target = $region48
      $region47: #{up_conv_forward.2} parent=5 // pred_region
        %s1885 = ssub.s32 %s20, 2
        // Predicated region
        $region49: #{up_conv_forward.2} parent=47 // pred_check
          %p1886 = pneg %p112
        $region50: #{up_conv_forward.2} parent=47 // pred_check_branch
          %1888 = sbr.rel (%p1886) target = $region52
        $region51: #{up_conv_forward.2} parent=47 // pred_region
          %s1889 = sand.u32 %s97, 1
          %s1890 = scalar_lea.sflag [#allocation4], %s1889
          %s1891 = sand.u32 %s97, 1
          %s1892 = smul.addr %s1891, 8
          %s1893 = scalar_lea.vmem [#allocation7], %s1892
          %1894 = dma.done %s1890, 128
        $region52: #{up_conv_forward.2} parent=47 // pred_fallthru
          _
        // Predicated region
        $region53: #{up_conv_forward.2} parent=47 // pred_check
          %p1895 = pneg %p140
        $region54: #{up_conv_forward.2} parent=47 // pred_check_branch
          %1897 = sbr.rel (%p1895) target = $region56
        $region55: #{up_conv_forward.2} parent=47 // pred_region
          %s1898 = sand.u32 %s125, 1
          %s1899 = scalar_lea.sflag [#allocation9], %s1898
          %s1900 = sand.u32 %s125, 1
          %s1901 = smul.addr %s1900, 8
          %s1902 = scalar_lea.vmem [#allocation8], %s1901
          %1903 = dma.done %s1899, 128
        $region56: #{up_conv_forward.2} parent=47 // pred_fallthru
          _
      $region48: #{up_conv_forward.2} parent=5 // pred_fallthru
        _
    $region6: #{up_conv_forward.2} parent=1 // loop_footer
      %s24 = sadd.s32 1, %s20
    $region7: #{up_conv_forward.2} parent=1 // loop_footer_branch
      %19 = sbr.rel target = $region3
    $region8: #{up_conv_forward.2} parent=1 // loop_exit
      _
    %1904 = vsyncpa [#allocation3], 1
    %s1905 = scalar_lea.sflag [#allocation3], 1
    %1906 = vsyncpa %s1905, 1
    %1907 = vsyncpa [#allocation6], 1
    %1908 = vsyncpa [#allocation4], 1
    %s1909 = scalar_lea.sflag [#allocation4], 1
    %1910 = vsyncpa %s1909, 1
    %1911 = vsyncpa [#allocation9], 1
    %s1912 = scalar_lea.sflag [#allocation9], 1
    %1913 = vsyncpa %s1912, 1

// kernel: up_conv_forward.3
$region0: #{up_conv_forward.3}
  #allocation0 [shape = 'u32[]', space=smem, size = 0x4, offset = 0x4, fixed_abs, tag = 'smem constant byte address 0x4 - core index']
  #allocation1 [shape = 'u32[144,128]{1,0:T(1,128)}', space=vmem, size = 0x12000, scoped, tag = 'internal scratch']
  %s0 = inlined_call_operand.hbm [shape: bf16[2,1024,36], index: 0, kind: input, shape index: {}]
  %s1 = inlined_call_operand.hbm [shape: bf16[36,128], index: 1, kind: input, shape index: {}]
  %s2 = inlined_call_operand.hbm [shape: f32[1,128], index: 2, kind: input, shape index: {}]
  %s3 = inlined_call_operand.hbm [shape: f32[1,128], index: 3, kind: input, shape index: {}]
  %s4 = inlined_call_operand.hbm [shape: f32[2,32,32,8], index: 4, kind: output, shape index: {}]
  %s5 = sld [smem:[#allocation0]]
  $region65: #{up_conv_forward.3} parent=0
    _
  %s7 = ssub.s32 1, %s5
  %s8 = scalar_select 0, %s7, %s5
  $region1: #{up_conv_forward.3} parent=0
    #allocation2 [shape = 'u8[524288]{0}', space=vmem, size = 0x80000, scoped, tag = 'input window, operand 0']
    #allocation3 [shape = 's32[2]{0}', space=sflag, size = 0x8, scoped, tag = 'scoped memory for up_conv_forward.3']
    #allocation4 [shape = 's32[2]{0}', space=sflag, size = 0x8, scoped, tag = 'scoped memory for up_conv_forward.3']
    #allocation5 [shape = 'u8[10240]{0}', space=vmem, size = 0x2800, scoped, tag = 'input window, operand 1, single buffered']
    #allocation6 [shape = 's32[1]{0}', space=sflag, size = 0x4, scoped, tag = 'scoped memory for up_conv_forward.3']
    #allocation7 [shape = 'u8[512]{0}', space=vmem, size = 0x400, scoped, tag = 'input window, operand 2, single buffered']
    #allocation8 [shape = 'u8[512]{0}', space=vmem, size = 0x400, scoped, tag = 'input window, operand 3, single buffered']
    #allocation9 [shape = 's32[1]{0}', space=sflag, size = 0x4, scoped, tag = 'scoped memory for up_conv_forward.3']
    #allocation10 [shape = 'u8[1048576]{0}', space=vmem, size = 0x100000, scoped, tag = 'output window, operand 0']
    %9 = vsyncpa [#allocation3], 0
    %s10 = scalar_lea.sflag [#allocation3], 1
    %11 = vsyncpa %s10, 0
    %12 = vsyncpa [#allocation6], 0
    %13 = vsyncpa [#allocation9], 0
    %14 = vsyncpa [#allocation4], 0
    %s15 = scalar_lea.sflag [#allocation4], 1
    %16 = vsyncpa %s15, 0
    loop: start=0, step=1, limit=4
    $region2: #{up_conv_forward.3} parent=1 // loop_pre_header
      _
    $region3: #{up_conv_forward.3} parent=1 // loop_header
      %s18 = sphi 0, %s22
      %p19 = scmp.ge.s32.totalorder %s18, 4
      %s25 = sphi 0, %s37
      %s26 = sphi 0, %s33
      %s27 = sphi 0, %s25
      %s28 = sphi 0, %s26
      %s29 = sphi 0, %s27
      %s30 = sphi 0, %s28
      %s42 = sphi 0, %s44
      %s45 = sphi 0, %s42
      %s46 = sphi 0, %s45
      %s62 = sphi 0, %s46
      %s66 = sphi 0, %s66
      %s68 = sphi 0, %s66
      %s69 = sphi 0, %s68
      %s83 = sphi 0, %s69
      %s87 = sphi 0, %s87
      %s89 = sphi 0, %s87
      %s90 = sphi 0, %s89
      %s104 = sphi 0, %s90
      %s108 = sphi 0, %s108
      %s110 = sphi 0, %s108
      %s111 = sphi 0, %s110
      %s125 = sphi 0, %s111
      %s133 = sphi 0, %s135
      %s136 = sphi 0, %s133
      %s137 = sphi 0, %s136
      %s153 = sphi 0, %s137
    $region4: #{up_conv_forward.3} parent=1 // loop_header_branch
      %21 = sbr.rel (%p19) target = $region8
    $region5: #{up_conv_forward.3} parent=1 // loop_body
      %s23 = ssub.s32 %s18, 1
      %s24 = ssub.s32 %s18, 2
      %s31 = sadd.s32 1, %s26
      %p32 = scmp.ge.s32.totalorder %s31, 1
      %s33 = scalar_select %p32, 0, %s31
      %s34 = sadd.s32 1, %s25
      %s35 = scalar_select %p32, %s34, %s25
      %p36 = scmp.ge.s32.totalorder %s35, 2
      %s37 = scalar_select %p36, 0, %s35
      %s38 = ssub.s32 %s25, %s37
      %s39 = ssub.s32 %s26, %s33
      %s40 = sor.u32 %s38, %s39
      %p41 = scmp.eq.s32.totalorder %s40, 0
      %s43 = sadd.s32 %s42, 1
      %s44 = scalar_select %p41, %s42, %s43
      %p47 = pneg %p41
      %p48 = scmp.eq.s32.totalorder %s18, 1
      %p49 = por %p47, %p48
      %p50 = scmp.ne.s32.totalorder %s42, %s45
      %p51 = scmp.eq.s32.totalorder %s18, 0
      %p52 = por %p50, %p51
      %p53 = scmp.ne.s32.totalorder %s42, %s45
      %p54 = scmp.eq.s32.totalorder %s23, 1
      %p55 = por %p53, %p54
      %p56 = scmp.ne.s32.totalorder %s45, %s46
      %p57 = scmp.eq.s32.totalorder %s23, 0
      %p58 = por %p56, %p57
      %p59 = scmp.ne.s32.totalorder %s45, %s46
      %p60 = scmp.eq.s32.totalorder %s24, 1
      %p61 = por %p59, %p60
      %p63 = scmp.ne.s32.totalorder %s46, %s62
      %p64 = scmp.eq.s32.totalorder %s24, 0
      %p65 = por %p63, %p64
      %s67 = sadd.s32 %s66, 1
      %p70 = scmp.eq.s32.totalorder %s18, 1
      %p71 = scmp.ne.s32.totalorder %s66, %s68
      %p72 = scmp.eq.s32.totalorder %s18, 0
      %p73 = por %p71, %p72
      %p74 = scmp.ne.s32.totalorder %s66, %s68
      %p75 = scmp.eq.s32.totalorder %s23, 1
      %p76 = por %p74, %p75
      %p77 = scmp.ne.s32.totalorder %s68, %s69
      %p78 = scmp.eq.s32.totalorder %s23, 0
      %p79 = por %p77, %p78
      %p80 = scmp.ne.s32.totalorder %s68, %s69
      %p81 = scmp.eq.s32.totalorder %s24, 1
      %p82 = por %p80, %p81
      %p84 = scmp.ne.s32.totalorder %s69, %s83
      %p85 = scmp.eq.s32.totalorder %s24, 0
      %p86 = por %p84, %p85
      %s88 = sadd.s32 %s87, 1
      %p91 = scmp.eq.s32.totalorder %s18, 1
      %p92 = scmp.ne.s32.totalorder %s87, %s89
      %p93 = scmp.eq.s32.totalorder %s18, 0
      %p94 = por %p92, %p93
      %p95 = scmp.ne.s32.totalorder %s87, %s89
      %p96 = scmp.eq.s32.totalorder %s23, 1
      %p97 = por %p95, %p96
      %p98 = scmp.ne.s32.totalorder %s89, %s90
      %p99 = scmp.eq.s32.totalorder %s23, 0
      %p100 = por %p98, %p99
      %p101 = scmp.ne.s32.totalorder %s89, %s90
      %p102 = scmp.eq.s32.totalorder %s24, 1
      %p103 = por %p101, %p102
      %p105 = scmp.ne.s32.totalorder %s90, %s104
      %p106 = scmp.eq.s32.totalorder %s24, 0
      %p107 = por %p105, %p106
      %s109 = sadd.s32 %s108, 1
      %p112 = scmp.eq.s32.totalorder %s18, 1
      %p113 = scmp.ne.s32.totalorder %s108, %s110
      %p114 = scmp.eq.s32.totalorder %s18, 0
      %p115 = por %p113, %p114
      %p116 = scmp.ne.s32.totalorder %s108, %s110
      %p117 = scmp.eq.s32.totalorder %s23, 1
      %p118 = por %p116, %p117
      %p119 = scmp.ne.s32.totalorder %s110, %s111
      %p120 = scmp.eq.s32.totalorder %s23, 0
      %p121 = por %p119, %p120
      %p122 = scmp.ne.s32.totalorder %s110, %s111
      %p123 = scmp.eq.s32.totalorder %s24, 1
      %p124 = por %p122, %p123
      %p126 = scmp.ne.s32.totalorder %s111, %s125
      %p127 = scmp.eq.s32.totalorder %s24, 0
      %p128 = por %p126, %p127
      %s129 = ssub.s32 %s25, %s37
      %s130 = ssub.s32 %s26, %s33
      %s131 = sor.u32 %s129, %s130
      %p132 = scmp.eq.s32.totalorder %s131, 0
      %s134 = sadd.s32 %s133, 1
      %s135 = scalar_select %p132, %s133, %s134
      %p138 = pneg %p132
      %p139 = scmp.eq.s32.totalorder %s18, 1
      %p140 = por %p138, %p139
      %p141 = scmp.ne.s32.totalorder %s133, %s136
      %p142 = scmp.eq.s32.totalorder %s18, 0
      %p143 = por %p141, %p142
      %p144 = scmp.ne.s32.totalorder %s133, %s136
      %p145 = scmp.eq.s32.totalorder %s23, 1
      %p146 = por %p144, %p145
      %p147 = scmp.ne.s32.totalorder %s136, %s137
      %p148 = scmp.eq.s32.totalorder %s23, 0
      %p149 = por %p147, %p148
      %p150 = scmp.ne.s32.totalorder %s136, %s137
      %p151 = scmp.eq.s32.totalorder %s24, 1
      %p152 = por %p150, %p151
      %p154 = scmp.ne.s32.totalorder %s137, %s153
      %p155 = scmp.eq.s32.totalorder %s24, 0
      %p156 = por %p154, %p155
      %p157 = scmp.le.s32.totalorder 1, %s18
      %p158 = scmp.lt.s32.totalorder %s18, 3
      %p159 = pnand %p157, %p158
      %p160 = pneg %p159
      // Predicated region
      $region9: #{up_conv_forward.3} parent=5 // pred_check
        _
      $region10: #{up_conv_forward.3} parent=5 // pred_check_branch
        %162 = sbr.rel (%p159) target = $region12
      $region11: #{up_conv_forward.3} parent=5 // pred_region
        %s163 = ssub.s32 %s18, 1
        // Predicated region
        $region13: #{up_conv_forward.3} parent=11 // pred_check
          %p164 = pneg %p79
        $region14: #{up_conv_forward.3} parent=11 // pred_check_branch
          %166 = sbr.rel (%p164) target = $region16
        $region15: #{up_conv_forward.3} parent=11 // pred_region
          %s168 = ssub.s32 320, 320
          %169 = vsyncadd [#allocation6], %s168
          %s170 = sshll.u32 [#allocation5], 4
          %s171 = int_to_ptr.vmem [resolvable:$true] %s170
          %176 = dma.hbm_to_vmem [thread:$0]  %s1, 320, %s171, [#allocation6], 64, 64, 4
        $region16: #{up_conv_forward.3} parent=11 // pred_fallthru
          _
        // Predicated region
        $region17: #{up_conv_forward.3} parent=11 // pred_check
          %p177 = pneg %p100
        $region18: #{up_conv_forward.3} parent=11 // pred_check_branch
          %179 = sbr.rel (%p177) target = $region20
        $region19: #{up_conv_forward.3} parent=11 // pred_region
          %s181 = ssub.s32 16, 16
          %182 = vsyncadd [#allocation6], %s181
          %s184 = sshll.u32 [#allocation7], 4
          %s185 = int_to_ptr.vmem [resolvable:$true] %s184
          %187 = dma.hbm_to_vmem [thread:$0]  %s2, 16, %s185, [#allocation6]
        $region20: #{up_conv_forward.3} parent=11 // pred_fallthru
          _
        // Predicated region
        $region21: #{up_conv_forward.3} parent=11 // pred_check
          %p188 = pneg %p121
        $region22: #{up_conv_forward.3} parent=11 // pred_check_branch
          %190 = sbr.rel (%p188) target = $region24
        $region23: #{up_conv_forward.3} parent=11 // pred_region
          %s192 = ssub.s32 16, 16
          %193 = vsyncadd [#allocation9], %s192
          %s195 = sshll.u32 [#allocation8], 4
          %s196 = int_to_ptr.vmem [resolvable:$true] %s195
          %198 = dma.hbm_to_vmem [thread:$0]  %s3, 16, %s196, [#allocation9]
        $region24: #{up_conv_forward.3} parent=11 // pred_fallthru
          _
      $region12: #{up_conv_forward.3} parent=5 // pred_fallthru
        _
      %p199 = scmp.lt.s32.totalorder %s18, 2
      // Predicated region
      $region25: #{up_conv_forward.3} parent=5 // pred_check
        %p200 = pneg %p199
      $region26: #{up_conv_forward.3} parent=5 // pred_check_branch
        %202 = sbr.rel (%p200) target = $region28
      $region27: #{up_conv_forward.3} parent=5 // pred_region
        // Predicated region
        $region29: #{up_conv_forward.3} parent=27 // pred_check
          %p203 = pneg %p52
        $region30: #{up_conv_forward.3} parent=27 // pred_check_branch
          %205 = sbr.rel (%p203) target = $region32
        $region31: #{up_conv_forward.3} parent=27 // pred_region
          %s206 = sand.u32 %s42, 1
          %s207 = scalar_lea.sflag [#allocation3], %s206
          %s208 = sand.u32 %s42, 1
          %s209 = smul.addr %s208, 512
          %s210 = scalar_lea.vmem [#allocation2], %s209
          %s211 = smul.u32 128, %s26
          %s213 = ssub.s32 8192, 8192
          %214 = vsyncadd %s207, %s213
          %s215 = smul.addr %s25, 128
          %s216 = sadd.s32 %s211, %s215
          %s217 = smul.addr %s216, 64
          %s218 = scalar_lea.hbm %s0, %s217
          %s219 = sshll.u32 %s210, 4
          %s220 = int_to_ptr.vmem [resolvable:$true] %s219
          %225 = dma.hbm_to_vmem [thread:$0]  %s218, 8192, %s220, %s207, 64, 64, 4
        $region32: #{up_conv_forward.3} parent=27 // pred_fallthru
          _
      $region28: #{up_conv_forward.3} parent=5 // pred_fallthru
        _
      %p226 = scmp.le.s32.totalorder 1, %s18
      %p227 = scmp.lt.s32.totalorder %s18, 3
      %p228 = pnand %p226, %p227
      %p229 = pneg %p228
      // Predicated region
      $region33: #{up_conv_forward.3} parent=5 // pred_check
        _
      $region34: #{up_conv_forward.3} parent=5 // pred_check_branch
        %231 = sbr.rel (%p228) target = $region36
      $region35: #{up_conv_forward.3} parent=5 // pred_region
        %s232 = ssub.s32 %s18, 1
        %s233 = sand.u32 %s45, 1
        %s234 = scalar_lea.sflag [#allocation3], %s233
        %s235 = sand.u32 %s45, 1
        %s236 = smul.addr %s235, 512
        %s237 = scalar_lea.vmem [#allocation2], %s236
        // Predicated region
        $region37: #{up_conv_forward.3} parent=35 // pred_check
          %p238 = pneg %p58
        $region38: #{up_conv_forward.3} parent=35 // pred_check_branch
          %240 = sbr.rel (%p238) target = $region40
        $region39: #{up_conv_forward.3} parent=35 // pred_region
          %241 = dma.done %s234, 8192
        $region40: #{up_conv_forward.3} parent=35 // pred_fallthru
          _
        // Predicated region
        $region41: #{up_conv_forward.3} parent=35 // pred_check
          %p242 = pneg %p79
        $region42: #{up_conv_forward.3} parent=35 // pred_check_branch
          %244 = sbr.rel (%p242) target = $region44
        $region43: #{up_conv_forward.3} parent=35 // pred_region
          %245 = dma.done [#allocation6], 320
        $region44: #{up_conv_forward.3} parent=35 // pred_fallthru
          _
        // Predicated region
        $region45: #{up_conv_forward.3} parent=35 // pred_check
          %p246 = pneg %p100
        $region46: #{up_conv_forward.3} parent=35 // pred_check_branch
          %248 = sbr.rel (%p246) target = $region48
        $region47: #{up_conv_forward.3} parent=35 // pred_region
          %249 = dma.done [#allocation6], 16
        $region48: #{up_conv_forward.3} parent=35 // pred_fallthru
          _
        // Predicated region
        $region49: #{up_conv_forward.3} parent=35 // pred_check
          %p250 = pneg %p121
        $region50: #{up_conv_forward.3} parent=35 // pred_check_branch
          %252 = sbr.rel (%p250) target = $region52
        $region51: #{up_conv_forward.3} parent=35 // pred_region
          %253 = dma.done [#allocation9], 16
        $region52: #{up_conv_forward.3} parent=35 // pred_fallthru
          _
        %s254 = sand.u32 %s45, 1
        %s255 = scalar_lea.sflag [#allocation3], %s254
        %s256 = sand.u32 %s45, 1
        %s257 = smul.addr %s256, 512
        %s258 = scalar_lea.vmem [#allocation2], %s257
        %p259 = pneg %p58
        %p260 = pneg %p55
        %p261 = pneg %p79
        %p262 = pneg %p76
        %p263 = pneg %p100
        %p264 = pneg %p97
        %p265 = pneg %p121
        %p266 = pneg %p118
        %p267 = pneg %p149
        %p268 = pneg %p146
        %s269 = sand.u32 %s136, 1
        %s270 = scalar_lea.sflag [#allocation4], %s269
        %s271 = sand.u32 %s136, 1
        %s272 = smul.addr %s271, 1024
        %s273 = scalar_lea.vmem [#allocation10], %s272
        %s274 = smul.u32 128, %s28
        %s275 = smul.u32 32, %s28
        %v277 = vld [vmem:[%s237] sm:$0xf]
        %v278 = vld [vmem:[%s237 + $0x4] sm:$0xf]
        %v279 = vld [vmem:[%s237 + $0x8] sm:$0xf]
        %v280 = vld [vmem:[%s237 + $0xc] sm:$0xf]
        %v281 = vld [vmem:[%s237 + $0x10] sm:$0xf]
        %v282 = vld [vmem:[%s237 + $0x14] sm:$0xf]
        %v283 = vld [vmem:[%s237 + $0x18] sm:$0xf]
        %v284 = vld [vmem:[%s237 + $0x1c] sm:$0xf]
        %v285 = vld [vmem:[%s237 + $0x20] sm:$0xf]
        %v286 = vld [vmem:[%s237 + $0x24] sm:$0xf]
        %v287 = vld [vmem:[%s237 + $0x28] sm:$0xf]
        %v288 = vld [vmem:[%s237 + $0x2c] sm:$0xf]
        %v289 = vld [vmem:[%s237 + $0x30] sm:$0xf]
        %v290 = vld [vmem:[%s237 + $0x34] sm:$0xf]
        %v291 = vld [vmem:[%s237 + $0x38] sm:$0xf]
        %v292 = vld [vmem:[%s237 + $0x3c] sm:$0xf]
        %v293 = vld [vmem:[%s237 + $0x40] sm:$0xf]
        %v294 = vld [vmem:[%s237 + $0x44] sm:$0xf]
        %v295 = vld [vmem:[%s237 + $0x48] sm:$0xf]
        %v296 = vld [vmem:[%s237 + $0x4c] sm:$0xf]
        %v297 = vld [vmem:[%s237 + $0x50] sm:$0xf]
        %v298 = vld [vmem:[%s237 + $0x54] sm:$0xf]
        %v299 = vld [vmem:[%s237 + $0x58] sm:$0xf]
        %v300 = vld [vmem:[%s237 + $0x5c] sm:$0xf]
        %v301 = vld [vmem:[%s237 + $0x60] sm:$0xf]
        %v302 = vld [vmem:[%s237 + $0x64] sm:$0xf]
        %v303 = vld [vmem:[%s237 + $0x68] sm:$0xf]
        %v304 = vld [vmem:[%s237 + $0x6c] sm:$0xf]
        %v305 = vld [vmem:[%s237 + $0x70] sm:$0xf]
        %v306 = vld [vmem:[%s237 + $0x74] sm:$0xf]
        %v307 = vld [vmem:[%s237 + $0x78] sm:$0xf]
        %v308 = vld [vmem:[%s237 + $0x7c] sm:$0xf]
        %v309 = vld [vmem:[%s237 + $0x80] sm:$0xf]
        %v310 = vld [vmem:[%s237 + $0x84] sm:$0xf]
        %v311 = vld [vmem:[%s237 + $0x88] sm:$0xf]
        %v312 = vld [vmem:[%s237 + $0x8c] sm:$0xf]
        %v313 = vld [vmem:[%s237 + $0x90] sm:$0xf]
        %v314 = vld [vmem:[%s237 + $0x94] sm:$0xf]
        %v315 = vld [vmem:[%s237 + $0x98] sm:$0xf]
        %v316 = vld [vmem:[%s237 + $0x9c] sm:$0xf]
        %v317 = vld [vmem:[%s237 + $0xa0] sm:$0xf]
        %v318 = vld [vmem:[%s237 + $0xa4] sm:$0xf]
        %v319 = vld [vmem:[%s237 + $0xa8] sm:$0xf]
        %v320 = vld [vmem:[%s237 + $0xac] sm:$0xf]
        %v321 = vld [vmem:[%s237 + $0xb0] sm:$0xf]
        %v322 = vld [vmem:[%s237 + $0xb4] sm:$0xf]
        %v323 = vld [vmem:[%s237 + $0xb8] sm:$0xf]
        %v324 = vld [vmem:[%s237 + $0xbc] sm:$0xf]
        %v325 = vld [vmem:[%s237 + $0xc0] sm:$0xf]
        %v326 = vld [vmem:[%s237 + $0xc4] sm:$0xf]
        %v327 = vld [vmem:[%s237 + $0xc8] sm:$0xf]
        %v328 = vld [vmem:[%s237 + $0xcc] sm:$0xf]
        %v329 = vld [vmem:[%s237 + $0xd0] sm:$0xf]
        %v330 = vld [vmem:[%s237 + $0xd4] sm:$0xf]
        %v331 = vld [vmem:[%s237 + $0xd8] sm:$0xf]
        %v332 = vld [vmem:[%s237 + $0xdc] sm:$0xf]
        %v333 = vld [vmem:[%s237 + $0xe0] sm:$0xf]
        %v334 = vld [vmem:[%s237 + $0xe4] sm:$0xf]
        %v335 = vld [vmem:[%s237 + $0xe8] sm:$0xf]
        %v336 = vld [vmem:[%s237 + $0xec] sm:$0xf]
        %v337 = vld [vmem:[%s237 + $0xf0] sm:$0xf]
        %v338 = vld [vmem:[%s237 + $0xf4] sm:$0xf]
        %v339 = vld [vmem:[%s237 + $0xf8] sm:$0xf]
        %v340 = vld [vmem:[%s237 + $0xfc] sm:$0xf]
        %v341 = vld [vmem:[%s237 + $0x100] sm:$0xf]
        %v342 = vld [vmem:[%s237 + $0x104] sm:$0xf]
        %v343 = vld [vmem:[%s237 + $0x108] sm:$0xf]
        %v344 = vld [vmem:[%s237 + $0x10c] sm:$0xf]
        %v345 = vld [vmem:[%s237 + $0x110] sm:$0xf]
        %v346 = vld [vmem:[%s237 + $0x114] sm:$0xf]
        %v347 = vld [vmem:[%s237 + $0x118] sm:$0xf]
        %v348 = vld [vmem:[%s237 + $0x11c] sm:$0xf]
        %v349 = vld [vmem:[%s237 + $0x120] sm:$0xf]
        %v350 = vld [vmem:[%s237 + $0x124] sm:$0xf]
        %v351 = vld [vmem:[%s237 + $0x128] sm:$0xf]
        %v352 = vld [vmem:[%s237 + $0x12c] sm:$0xf]
        %v353 = vld [vmem:[%s237 + $0x130] sm:$0xf]
        %v354 = vld [vmem:[%s237 + $0x134] sm:$0xf]
        %v355 = vld [vmem:[%s237 + $0x138] sm:$0xf]
        %v356 = vld [vmem:[%s237 + $0x13c] sm:$0xf]
        %v357 = vld [vmem:[%s237 + $0x140] sm:$0xf]
        %v358 = vld [vmem:[%s237 + $0x144] sm:$0xf]
        %v359 = vld [vmem:[%s237 + $0x148] sm:$0xf]
        %v360 = vld [vmem:[%s237 + $0x14c] sm:$0xf]
        %v361 = vld [vmem:[%s237 + $0x150] sm:$0xf]
        %v362 = vld [vmem:[%s237 + $0x154] sm:$0xf]
        %v363 = vld [vmem:[%s237 + $0x158] sm:$0xf]
        %v364 = vld [vmem:[%s237 + $0x15c] sm:$0xf]
        %v365 = vld [vmem:[%s237 + $0x160] sm:$0xf]
        %v366 = vld [vmem:[%s237 + $0x164] sm:$0xf]
        %v367 = vld [vmem:[%s237 + $0x168] sm:$0xf]
        %v368 = vld [vmem:[%s237 + $0x16c] sm:$0xf]
        %v369 = vld [vmem:[%s237 + $0x170] sm:$0xf]
        %v370 = vld [vmem:[%s237 + $0x174] sm:$0xf]
        %v371 = vld [vmem:[%s237 + $0x178] sm:$0xf]
        %v372 = vld [vmem:[%s237 + $0x17c] sm:$0xf]
        %v373 = vld [vmem:[%s237 + $0x180] sm:$0xf]
        %v374 = vld [vmem:[%s237 + $0x184] sm:$0xf]
        %v375 = vld [vmem:[%s237 + $0x188] sm:$0xf]
        %v376 = vld [vmem:[%s237 + $0x18c] sm:$0xf]
        %v377 = vld [vmem:[%s237 + $0x190] sm:$0xf]
        %v378 = vld [vmem:[%s237 + $0x194] sm:$0xf]
        %v379 = vld [vmem:[%s237 + $0x198] sm:$0xf]
        %v380 = vld [vmem:[%s237 + $0x19c] sm:$0xf]
        %v381 = vld [vmem:[%s237 + $0x1a0] sm:$0xf]
        %v382 = vld [vmem:[%s237 + $0x1a4] sm:$0xf]
        %v383 = vld [vmem:[%s237 + $0x1a8] sm:$0xf]
        %v384 = vld [vmem:[%s237 + $0x1ac] sm:$0xf]
        %v385 = vld [vmem:[%s237 + $0x1b0] sm:$0xf]
        %v386 = vld [vmem:[%s237 + $0x1b4] sm:$0xf]
        %v387 = vld [vmem:[%s237 + $0x1b8] sm:$0xf]
        %v388 = vld [vmem:[%s237 + $0x1bc] sm:$0xf]
        %v389 = vld [vmem:[%s237 + $0x1c0] sm:$0xf]
        %v390 = vld [vmem:[%s237 + $0x1c4] sm:$0xf]
        %v391 = vld [vmem:[%s237 + $0x1c8] sm:$0xf]
        %v392 = vld [vmem:[%s237 + $0x1cc] sm:$0xf]
        %v393 = vld [vmem:[%s237 + $0x1d0] sm:$0xf]
        %v394 = vld [vmem:[%s237 + $0x1d4] sm:$0xf]
        %v395 = vld [vmem:[%s237 + $0x1d8] sm:$0xf]
        %v396 = vld [vmem:[%s237 + $0x1dc] sm:$0xf]
        %v397 = vld [vmem:[%s237 + $0x1e0] sm:$0xf]
        %v398 = vld [vmem:[%s237 + $0x1e4] sm:$0xf]
        %v399 = vld [vmem:[%s237 + $0x1e8] sm:$0xf]
        %v400 = vld [vmem:[%s237 + $0x1ec] sm:$0xf]
        %v401 = vld [vmem:[%s237 + $0x1f0] sm:$0xf]
        %v402 = vld [vmem:[%s237 + $0x1f4] sm:$0xf]
        %v403 = vld [vmem:[%s237 + $0x1f8] sm:$0xf]
        %v404 = vld [vmem:[%s237 + $0x1fc] sm:$0xf]
        %v405 = vld [vmem:[#allocation5] sm:$0xf]
        %v406 = vld [vmem:[#allocation5 + $0x4] sm:$0xf]
        %v407 = vld [vmem:[#allocation5 + $0x8] sm:$0xf]
        %v408 = vld [vmem:[#allocation5 + $0xc] sm:$0xf]
        %v409 = vld [vmem:[#allocation5 + $0x10] sm:$0x3]
        %v538 = vunpack.c.l.b16 %v277
        %v539 = vunpack.c.l.b16 %v278
        %v540 = vunpack.c.l.b16 %v279
        %v541 = vunpack.c.l.b16 %v280
        %v542 = vunpack.c.l.b16 %v281
        %v543 = vunpack.c.l.b16 %v282
        %v544 = vunpack.c.l.b16 %v283
        %v545 = vunpack.c.l.b16 %v284
        %v546 = vunpack.c.l.b16 %v285
        %v547 = vunpack.c.l.b16 %v286
        %v548 = vunpack.c.l.b16 %v287
        %v549 = vunpack.c.l.b16 %v288
        %v550 = vunpack.c.l.b16 %v289
        %v551 = vunpack.c.l.b16 %v290
        %v552 = vunpack.c.l.b16 %v291
        %v553 = vunpack.c.l.b16 %v292
        %v554 = vunpack.c.l.b16 %v293
        %v555 = vunpack.c.l.b16 %v294
        %v556 = vunpack.c.l.b16 %v295
        %v557 = vunpack.c.l.b16 %v296
        %v558 = vunpack.c.l.b16 %v297
        %v559 = vunpack.c.l.b16 %v298
        %v560 = vunpack.c.l.b16 %v299
        %v561 = vunpack.c.l.b16 %v300
        %v562 = vunpack.c.l.b16 %v301
        %v563 = vunpack.c.l.b16 %v302
        %v564 = vunpack.c.l.b16 %v303
        %v565 = vunpack.c.l.b16 %v304
        %v566 = vunpack.c.l.b16 %v305
        %v567 = vunpack.c.l.b16 %v306
        %v568 = vunpack.c.l.b16 %v307
        %v569 = vunpack.c.l.b16 %v308
        %v570 = vunpack.c.l.b16 %v309
        %v571 = vunpack.c.l.b16 %v310
        %v572 = vunpack.c.l.b16 %v311
        %v573 = vunpack.c.l.b16 %v312
        %v574 = vunpack.c.l.b16 %v313
        %v575 = vunpack.c.l.b16 %v314
        %v576 = vunpack.c.l.b16 %v315
        %v577 = vunpack.c.l.b16 %v316
        %v578 = vunpack.c.l.b16 %v317
        %v579 = vunpack.c.l.b16 %v318
        %v580 = vunpack.c.l.b16 %v319
        %v581 = vunpack.c.l.b16 %v320
        %v582 = vunpack.c.l.b16 %v321
        %v583 = vunpack.c.l.b16 %v322
        %v584 = vunpack.c.l.b16 %v323
        %v585 = vunpack.c.l.b16 %v324
        %v586 = vunpack.c.l.b16 %v325
        %v587 = vunpack.c.l.b16 %v326
        %v588 = vunpack.c.l.b16 %v327
        %v589 = vunpack.c.l.b16 %v328
        %v590 = vunpack.c.l.b16 %v329
        %v591 = vunpack.c.l.b16 %v330
        %v592 = vunpack.c.l.b16 %v331
        %v593 = vunpack.c.l.b16 %v332
        %v594 = vunpack.c.l.b16 %v333
        %v595 = vunpack.c.l.b16 %v334
        %v596 = vunpack.c.l.b16 %v335
        %v597 = vunpack.c.l.b16 %v336
        %v598 = vunpack.c.l.b16 %v337
        %v599 = vunpack.c.l.b16 %v338
        %v600 = vunpack.c.l.b16 %v339
        %v601 = vunpack.c.l.b16 %v340
        %v602 = vunpack.c.l.b16 %v341
        %v603 = vunpack.c.l.b16 %v342
        %v604 = vunpack.c.l.b16 %v343
        %v605 = vunpack.c.l.b16 %v344
        %v606 = vunpack.c.l.b16 %v345
        %v607 = vunpack.c.l.b16 %v346
        %v608 = vunpack.c.l.b16 %v347
        %v609 = vunpack.c.l.b16 %v348
        %v610 = vunpack.c.l.b16 %v349
        %v611 = vunpack.c.l.b16 %v350
        %v612 = vunpack.c.l.b16 %v351
        %v613 = vunpack.c.l.b16 %v352
        %v614 = vunpack.c.l.b16 %v353
        %v615 = vunpack.c.l.b16 %v354
        %v616 = vunpack.c.l.b16 %v355
        %v617 = vunpack.c.l.b16 %v356
        %v618 = vunpack.c.l.b16 %v357
        %v619 = vunpack.c.l.b16 %v358
        %v620 = vunpack.c.l.b16 %v359
        %v621 = vunpack.c.l.b16 %v360
        %v622 = vunpack.c.l.b16 %v361
        %v623 = vunpack.c.l.b16 %v362
        %v624 = vunpack.c.l.b16 %v363
        %v625 = vunpack.c.l.b16 %v364
        %v626 = vunpack.c.l.b16 %v365
        %v627 = vunpack.c.l.b16 %v366
        %v628 = vunpack.c.l.b16 %v367
        %v629 = vunpack.c.l.b16 %v368
        %v630 = vunpack.c.l.b16 %v369
        %v631 = vunpack.c.l.b16 %v370
        %v632 = vunpack.c.l.b16 %v371
        %v633 = vunpack.c.l.b16 %v372
        %v634 = vunpack.c.l.b16 %v373
        %v635 = vunpack.c.l.b16 %v374
        %v636 = vunpack.c.l.b16 %v375
        %v637 = vunpack.c.l.b16 %v376
        %v638 = vunpack.c.l.b16 %v377
        %v639 = vunpack.c.l.b16 %v378
        %v640 = vunpack.c.l.b16 %v379
        %v641 = vunpack.c.l.b16 %v380
        %v642 = vunpack.c.l.b16 %v381
        %v643 = vunpack.c.l.b16 %v382
        %v644 = vunpack.c.l.b16 %v383
        %v645 = vunpack.c.l.b16 %v384
        %v646 = vunpack.c.l.b16 %v385
        %v647 = vunpack.c.l.b16 %v386
        %v648 = vunpack.c.l.b16 %v387
        %v649 = vunpack.c.l.b16 %v388
        %v650 = vunpack.c.l.b16 %v389
        %v651 = vunpack.c.l.b16 %v390
        %v652 = vunpack.c.l.b16 %v391
        %v653 = vunpack.c.l.b16 %v392
        %v654 = vunpack.c.l.b16 %v393
        %v655 = vunpack.c.l.b16 %v394
        %v656 = vunpack.c.l.b16 %v395
        %v657 = vunpack.c.l.b16 %v396
        %v658 = vunpack.c.l.b16 %v397
        %v659 = vunpack.c.l.b16 %v398
        %v660 = vunpack.c.l.b16 %v399
        %v661 = vunpack.c.l.b16 %v400
        %v662 = vunpack.c.l.b16 %v401
        %v663 = vunpack.c.l.b16 %v402
        %v664 = vunpack.c.l.b16 %v403
        %v665 = vunpack.c.l.b16 %v404
        %v666 = vpack.c.b16 %v539, %v538
        %v667 = vpack.c.b16 %v541, %v540
        %v668 = vpack.c.b16 %v543, %v542
        %v669 = vpack.c.b16 %v545, %v544
        %v670 = vpack.c.b16 %v547, %v546
        %v671 = vpack.c.b16 %v549, %v548
        %v672 = vpack.c.b16 %v551, %v550
        %v673 = vpack.c.b16 %v553, %v552
        %v674 = vpack.c.b16 %v555, %v554
        %v675 = vpack.c.b16 %v557, %v556
        %v676 = vpack.c.b16 %v559, %v558
        %v677 = vpack.c.b16 %v561, %v560
        %v678 = vpack.c.b16 %v563, %v562
        %v679 = vpack.c.b16 %v565, %v564
        %v680 = vpack.c.b16 %v567, %v566
        %v681 = vpack.c.b16 %v569, %v568
        %v682 = vpack.c.b16 %v571, %v570
        %v683 = vpack.c.b16 %v573, %v572
        %v684 = vpack.c.b16 %v575, %v574
        %v685 = vpack.c.b16 %v577, %v576
        %v686 = vpack.c.b16 %v579, %v578
        %v687 = vpack.c.b16 %v581, %v580
        %v688 = vpack.c.b16 %v583, %v582
        %v689 = vpack.c.b16 %v585, %v584
        %v690 = vpack.c.b16 %v587, %v586
        %v691 = vpack.c.b16 %v589, %v588
        %v692 = vpack.c.b16 %v591, %v590
        %v693 = vpack.c.b16 %v593, %v592
        %v694 = vpack.c.b16 %v595, %v594
        %v695 = vpack.c.b16 %v597, %v596
        %v696 = vpack.c.b16 %v599, %v598
        %v697 = vpack.c.b16 %v601, %v600
        %v698 = vpack.c.b16 %v603, %v602
        %v699 = vpack.c.b16 %v605, %v604
        %v700 = vpack.c.b16 %v607, %v606
        %v701 = vpack.c.b16 %v609, %v608
        %v702 = vpack.c.b16 %v611, %v610
        %v703 = vpack.c.b16 %v613, %v612
        %v704 = vpack.c.b16 %v615, %v614
        %v705 = vpack.c.b16 %v617, %v616
        %v706 = vpack.c.b16 %v619, %v618
        %v707 = vpack.c.b16 %v621, %v620
        %v708 = vpack.c.b16 %v623, %v622
        %v709 = vpack.c.b16 %v625, %v624
        %v710 = vpack.c.b16 %v627, %v626
        %v711 = vpack.c.b16 %v629, %v628
        %v712 = vpack.c.b16 %v631, %v630
        %v713 = vpack.c.b16 %v633, %v632
        %v714 = vpack.c.b16 %v635, %v634
        %v715 = vpack.c.b16 %v637, %v636
        %v716 = vpack.c.b16 %v639, %v638
        %v717 = vpack.c.b16 %v641, %v640
        %v718 = vpack.c.b16 %v643, %v642
        %v719 = vpack.c.b16 %v645, %v644
        %v720 = vpack.c.b16 %v647, %v646
        %v721 = vpack.c.b16 %v649, %v648
        %v722 = vpack.c.b16 %v651, %v650
        %v723 = vpack.c.b16 %v653, %v652
        %v724 = vpack.c.b16 %v655, %v654
        %v725 = vpack.c.b16 %v657, %v656
        %v726 = vpack.c.b16 %v659, %v658
        %v727 = vpack.c.b16 %v661, %v660
        %v728 = vpack.c.b16 %v663, %v662
        %v729 = vpack.c.b16 %v665, %v664
        %v735 = vunpack.c.l.b16 %v405
        %v736 = vunpack.c.l.b16 %v406
        %v737 = vunpack.c.l.b16 %v407
        %v738 = vunpack.c.l.b16 %v408
        %v739 = vunpack.c.l.b16 %v409
        %v740 = vpack.c.b16 %v736, %v735
        %v741 = vpack.c.b16 %v738, %v737
        %v742 = vpack.c.b16 %v739, %v739
        %vm745 = vcmask 293888
        %v747 = vsel %vm745, %v666, 0
        %v750 = vsel %vm745, %v667, 0
        %v753 = vsel %vm745, %v668, 0
        %v756 = vsel %vm745, %v669, 0
        %v759 = vsel %vm745, %v670, 0
        %v762 = vsel %vm745, %v671, 0
        %v765 = vsel %vm745, %v672, 0
        %v768 = vsel %vm745, %v673, 0
        %v771 = vsel %vm745, %v674, 0
        %v774 = vsel %vm745, %v675, 0
        %v777 = vsel %vm745, %v676, 0
        %v780 = vsel %vm745, %v677, 0
        %v783 = vsel %vm745, %v678, 0
        %v786 = vsel %vm745, %v679, 0
        %v789 = vsel %vm745, %v680, 0
        %v792 = vsel %vm745, %v681, 0
        %v795 = vsel %vm745, %v682, 0
        %v798 = vsel %vm745, %v683, 0
        %v801 = vsel %vm745, %v684, 0
        %v804 = vsel %vm745, %v685, 0
        %v807 = vsel %vm745, %v686, 0
        %v810 = vsel %vm745, %v687, 0
        %v813 = vsel %vm745, %v688, 0
        %v816 = vsel %vm745, %v689, 0
        %v819 = vsel %vm745, %v690, 0
        %v822 = vsel %vm745, %v691, 0
        %v825 = vsel %vm745, %v692, 0
        %v828 = vsel %vm745, %v693, 0
        %v831 = vsel %vm745, %v694, 0
        %v834 = vsel %vm745, %v695, 0
        %v837 = vsel %vm745, %v696, 0
        %v840 = vsel %vm745, %v697, 0
        %v843 = vsel %vm745, %v698, 0
        %v846 = vsel %vm745, %v699, 0
        %v849 = vsel %vm745, %v700, 0
        %v852 = vsel %vm745, %v701, 0
        %v855 = vsel %vm745, %v702, 0
        %v858 = vsel %vm745, %v703, 0
        %v861 = vsel %vm745, %v704, 0
        %v864 = vsel %vm745, %v705, 0
        %v867 = vsel %vm745, %v706, 0
        %v870 = vsel %vm745, %v707, 0
        %v873 = vsel %vm745, %v708, 0
        %v876 = vsel %vm745, %v709, 0
        %v879 = vsel %vm745, %v710, 0
        %v882 = vsel %vm745, %v711, 0
        %v885 = vsel %vm745, %v712, 0
        %v888 = vsel %vm745, %v713, 0
        %v891 = vsel %vm745, %v714, 0
        %v894 = vsel %vm745, %v715, 0
        %v897 = vsel %vm745, %v716, 0
        %v900 = vsel %vm745, %v717, 0
        %v903 = vsel %vm745, %v718, 0
        %v906 = vsel %vm745, %v719, 0
        %v909 = vsel %vm745, %v720, 0
        %v912 = vsel %vm745, %v721, 0
        %v915 = vsel %vm745, %v722, 0
        %v918 = vsel %vm745, %v723, 0
        %v921 = vsel %vm745, %v724, 0
        %v924 = vsel %vm745, %v725, 0
        %v927 = vsel %vm745, %v726, 0
        %v930 = vsel %vm745, %v727, 0
        %v933 = vsel %vm745, %v728, 0
        %v936 = vsel %vm745, %v729, 0
        %vm938 = vcmask 1041408
        %v940 = vsel %vm938, %v742, 0
        %942 = vmatprep.subr.bf16.mxu0 0
        %943 = vmatpush1.bf16.msra.mxu0 %v740
        %944 = vmatprep.subr.bf16.mxu0 0
        %945 = vmatpush1.bf16.msra.mxu0 %v741
        %946 = vmatprep.subr.bf16.mxu0 0
        %947 = vmatpush1.bf16.msra.mxu0 %v940
        %948 = vmatprep.subr.bf16.mxu0 0
        %949 = vmatpush1.bf16.msra.mxu0 0
        %950 = vmatprep.subr.bf16.mxu0 0
        %951 = vmatpush1.bf16.msra.mxu0 0
        %952 = vmatprep.subr.bf16.mxu0 0
        %953 = vmatpush1.bf16.msra.mxu0 0
        %954 = vmatprep.subr.bf16.mxu0 0
        %955 = vmatpush1.bf16.msra.mxu0 0
        %956 = vmatprep.subr.bf16.mxu0 0
        %957 = vmatpush1.bf16.msra.mxu0 0
        %958 = vmatprep.subr.bf16.mxu0 0
        %959 = vmatpush1.bf16.msra.mxu0 0
        %960 = vmatprep.subr.bf16.mxu0 0
        %961 = vmatpush1.bf16.msra.mxu0 0
        %962 = vmatprep.subr.bf16.mxu0 0
        %963 = vmatpush1.bf16.msra.mxu0 0
        %964 = vmatprep.subr.bf16.mxu0 0
        %965 = vmatpush1.bf16.msra.mxu0 0
        %966 = vmatprep.subr.bf16.mxu0 0
        %967 = vmatpush1.bf16.msra.mxu0 0
        %968 = vmatprep.subr.bf16.mxu0 0
        %969 = vmatpush1.bf16.msra.mxu0 0
        %970 = vmatprep.subr.bf16.mxu0 0
        %971 = vmatpush1.bf16.msra.mxu0 0
        %972 = vmatprep.subr.bf16.mxu0 0
        %973 = vmatpush1.bf16.msra.mxu0 0
        %974 = vmatprep.mubr.bf16.mxu0 0
        %975 = vmatmul.mubr.bf16.gmra.mrb[0].mxu0 %v747
        %v976 = vpop.f32.mrb[0].mxu0
        %v977 = vadd.f32 0.0, %v976
        %v978 = vpop.f32.mrb[0].mxu0
        %v979 = vpop.f32.mrb[0].mxu0
        %v980 = vadd.f32 0.0, %v979
        %v981 = vpop.f32.mrb[0].mxu0
        %982 = vmatprep.mubr.bf16.mxu0 0
        %983 = vmatmul.mubr.bf16.gmra.mrb[0].mxu0 %v750
        %v984 = vpop.f32.mrb[0].mxu0
        %v985 = vadd.f32 0.0, %v984
        %v986 = vpop.f32.mrb[0].mxu0
        %v987 = vpop.f32.mrb[0].mxu0
        %v988 = vadd.f32 0.0, %v987
        %v989 = vpop.f32.mrb[0].mxu0
        %990 = vmatprep.mubr.bf16.mxu0 0
        %991 = vmatmul.mubr.bf16.gmra.mrb[0].mxu0 %v753
        %v992 = vpop.f32.mrb[0].mxu0
        %v993 = vadd.f32 0.0, %v992
        %v994 = vpop.f32.mrb[0].mxu0
        %v995 = vpop.f32.mrb[0].mxu0
        %v996 = vadd.f32 0.0, %v995
        %v997 = vpop.f32.mrb[0].mxu0
        %998 = vmatprep.mubr.bf16.mxu0 0
        %999 = vmatmul.mubr.bf16.gmra.mrb[0].mxu0 %v756
        %v1000 = vpop.f32.mrb[0].mxu0
        %v1001 = vadd.f32 0.0, %v1000
        %v1002 = vpop.f32.mrb[0].mxu0
        %v1003 = vpop.f32.mrb[0].mxu0
        %v1004 = vadd.f32 0.0, %v1003
        %v1005 = vpop.f32.mrb[0].mxu0
        %1006 = vmatprep.mubr.bf16.mxu0 0
        %1007 = vmatmul.mubr.bf16.gmra.mrb[0].mxu0 %v759
        %v1008 = vpop.f32.mrb[0].mxu0
        %v1009 = vadd.f32 0.0, %v1008
        %v1010 = vpop.f32.mrb[0].mxu0
        %v1011 = vpop.f32.mrb[0].mxu0
        %v1012 = vadd.f32 0.0, %v1011
        %v1013 = vpop.f32.mrb[0].mxu0
        %1014 = vmatprep.mubr.bf16.mxu0 0
        %1015 = vmatmul.mubr.bf16.gmra.mrb[0].mxu0 %v762
        %v1016 = vpop.f32.mrb[0].mxu0
        %v1017 = vadd.f32 0.0, %v1016
        %v1018 = vpop.f32.mrb[0].mxu0
        %v1019 = vpop.f32.mrb[0].mxu0
        %v1020 = vadd.f32 0.0, %v1019
        %v1021 = vpop.f32.mrb[0].mxu0
        %1022 = vmatprep.mubr.bf16.mxu0 0
        %1023 = vmatmul.mubr.bf16.gmra.mrb[0].mxu0 %v765
        %v1024 = vpop.f32.mrb[0].mxu0
        %v1025 = vadd.f32 0.0, %v1024
        %v1026 = vpop.f32.mrb[0].mxu0
        %v1027 = vpop.f32.mrb[0].mxu0
        %v1028 = vadd.f32 0.0, %v1027
        %v1029 = vpop.f32.mrb[0].mxu0
        %1030 = vmatprep.mubr.bf16.mxu0 0
        %1031 = vmatmul.mubr.bf16.gmra.mrb[0].mxu0 %v768
        %v1032 = vpop.f32.mrb[0].mxu0
        %v1033 = vadd.f32 0.0, %v1032
        %v1034 = vpop.f32.mrb[0].mxu0
        %v1035 = vpop.f32.mrb[0].mxu0
        %v1036 = vadd.f32 0.0, %v1035
        %v1037 = vpop.f32.mrb[0].mxu0
        %1038 = vmatprep.mubr.bf16.mxu0 0
        %1039 = vmatmul.mubr.bf16.gmra.mrb[0].mxu0 %v771
        %v1040 = vpop.f32.mrb[0].mxu0
        %v1041 = vadd.f32 0.0, %v1040
        %v1042 = vpop.f32.mrb[0].mxu0
        %v1043 = vpop.f32.mrb[0].mxu0
        %v1044 = vadd.f32 0.0, %v1043
        %v1045 = vpop.f32.mrb[0].mxu0
        %1046 = vmatprep.mubr.bf16.mxu0 0
        %1047 = vmatmul.mubr.bf16.gmra.mrb[0].mxu0 %v774
        %v1048 = vpop.f32.mrb[0].mxu0
        %v1049 = vadd.f32 0.0, %v1048
        %v1050 = vpop.f32.mrb[0].mxu0
        %v1051 = vpop.f32.mrb[0].mxu0
        %v1052 = vadd.f32 0.0, %v1051
        %v1053 = vpop.f32.mrb[0].mxu0
        %1054 = vmatprep.mubr.bf16.mxu0 0
        %1055 = vmatmul.mubr.bf16.gmra.mrb[0].mxu0 %v777
        %v1056 = vpop.f32.mrb[0].mxu0
        %v1057 = vadd.f32 0.0, %v1056
        %v1058 = vpop.f32.mrb[0].mxu0
        %v1059 = vpop.f32.mrb[0].mxu0
        %v1060 = vadd.f32 0.0, %v1059
        %v1061 = vpop.f32.mrb[0].mxu0
        %1062 = vmatprep.mubr.bf16.mxu0 0
        %1063 = vmatmul.mubr.bf16.gmra.mrb[0].mxu0 %v780
        %v1064 = vpop.f32.mrb[0].mxu0
        %v1065 = vadd.f32 0.0, %v1064
        %v1066 = vpop.f32.mrb[0].mxu0
        %v1067 = vpop.f32.mrb[0].mxu0
        %v1068 = vadd.f32 0.0, %v1067
        %v1069 = vpop.f32.mrb[0].mxu0
        %1070 = vmatprep.mubr.bf16.mxu0 0
        %1071 = vmatmul.mubr.bf16.gmra.mrb[0].mxu0 %v783
        %v1072 = vpop.f32.mrb[0].mxu0
        %v1073 = vadd.f32 0.0, %v1072
        %v1074 = vpop.f32.mrb[0].mxu0
        %v1075 = vpop.f32.mrb[0].mxu0
        %v1076 = vadd.f32 0.0, %v1075
        %v1077 = vpop.f32.mrb[0].mxu0
        %1078 = vmatprep.mubr.bf16.mxu0 0
        %1079 = vmatmul.mubr.bf16.gmra.mrb[0].mxu0 %v786
        %v1080 = vpop.f32.mrb[0].mxu0
        %v1081 = vadd.f32 0.0, %v1080
        %v1082 = vpop.f32.mrb[0].mxu0
        %v1083 = vpop.f32.mrb[0].mxu0
        %v1084 = vadd.f32 0.0, %v1083
        %v1085 = vpop.f32.mrb[0].mxu0
        %1086 = vmatprep.mubr.bf16.mxu0 0
        %1087 = vmatmul.mubr.bf16.gmra.mrb[0].mxu0 %v789
        %v1088 = vpop.f32.mrb[0].mxu0
        %v1089 = vadd.f32 0.0, %v1088
        %v1090 = vpop.f32.mrb[0].mxu0
        %v1091 = vpop.f32.mrb[0].mxu0
        %v1092 = vadd.f32 0.0, %v1091
        %v1093 = vpop.f32.mrb[0].mxu0
        %1094 = vmatprep.mubr.bf16.mxu0 0
        %1095 = vmatmul.mubr.bf16.gmra.mrb[0].mxu0 %v792
        %v1096 = vpop.f32.mrb[0].mxu0
        %v1097 = vadd.f32 0.0, %v1096
        %v1098 = vpop.f32.mrb[0].mxu0
        %v1099 = vpop.f32.mrb[0].mxu0
        %v1100 = vadd.f32 0.0, %v1099
        %v1101 = vpop.f32.mrb[0].mxu0
        %1102 = vmatprep.mubr.bf16.mxu0 0
        %1103 = vmatmul.mubr.bf16.gmra.mrb[0].mxu0 %v795
        %v1104 = vpop.f32.mrb[0].mxu0
        %v1105 = vadd.f32 0.0, %v1104
        %v1106 = vpop.f32.mrb[0].mxu0
        %v1107 = vpop.f32.mrb[0].mxu0
        %v1108 = vadd.f32 0.0, %v1107
        %v1109 = vpop.f32.mrb[0].mxu0
        %1110 = vmatprep.mubr.bf16.mxu0 0
        %1111 = vmatmul.mubr.bf16.gmra.mrb[0].mxu0 %v798
        %v1112 = vpop.f32.mrb[0].mxu0
        %v1113 = vadd.f32 0.0, %v1112
        %v1114 = vpop.f32.mrb[0].mxu0
        %v1115 = vpop.f32.mrb[0].mxu0
        %v1116 = vadd.f32 0.0, %v1115
        %v1117 = vpop.f32.mrb[0].mxu0
        %1118 = vmatprep.mubr.bf16.mxu0 0
        %1119 = vmatmul.mubr.bf16.gmra.mrb[0].mxu0 %v801
        %v1120 = vpop.f32.mrb[0].mxu0
        %v1121 = vadd.f32 0.0, %v1120
        %v1122 = vpop.f32.mrb[0].mxu0
        %v1123 = vpop.f32.mrb[0].mxu0
        %v1124 = vadd.f32 0.0, %v1123
        %v1125 = vpop.f32.mrb[0].mxu0
        %1126 = vmatprep.mubr.bf16.mxu0 0
        %1127 = vmatmul.mubr.bf16.gmra.mrb[0].mxu0 %v804
        %v1128 = vpop.f32.mrb[0].mxu0
        %v1129 = vadd.f32 0.0, %v1128
        %v1130 = vpop.f32.mrb[0].mxu0
        %v1131 = vpop.f32.mrb[0].mxu0
        %v1132 = vadd.f32 0.0, %v1131
        %v1133 = vpop.f32.mrb[0].mxu0
        %1134 = vmatprep.mubr.bf16.mxu0 0
        %1135 = vmatmul.mubr.bf16.gmra.mrb[0].mxu0 %v807
        %v1136 = vpop.f32.mrb[0].mxu0
        %v1137 = vadd.f32 0.0, %v1136
        %v1138 = vpop.f32.mrb[0].mxu0
        %v1139 = vpop.f32.mrb[0].mxu0
        %v1140 = vadd.f32 0.0, %v1139
        %v1141 = vpop.f32.mrb[0].mxu0
        %1142 = vmatprep.mubr.bf16.mxu0 0
        %1143 = vmatmul.mubr.bf16.gmra.mrb[0].mxu0 %v810
        %v1144 = vpop.f32.mrb[0].mxu0
        %v1145 = vadd.f32 0.0, %v1144
        %v1146 = vpop.f32.mrb[0].mxu0
        %v1147 = vpop.f32.mrb[0].mxu0
        %v1148 = vadd.f32 0.0, %v1147
        %v1149 = vpop.f32.mrb[0].mxu0
        %1150 = vmatprep.mubr.bf16.mxu0 0
        %1151 = vmatmul.mubr.bf16.gmra.mrb[0].mxu0 %v813
        %v1152 = vpop.f32.mrb[0].mxu0
        %v1153 = vadd.f32 0.0, %v1152
        %v1154 = vpop.f32.mrb[0].mxu0
        %v1155 = vpop.f32.mrb[0].mxu0
        %v1156 = vadd.f32 0.0, %v1155
        %v1157 = vpop.f32.mrb[0].mxu0
        %1158 = vmatprep.mubr.bf16.mxu0 0
        %1159 = vmatmul.mubr.bf16.gmra.mrb[0].mxu0 %v816
        %v1160 = vpop.f32.mrb[0].mxu0
        %v1161 = vadd.f32 0.0, %v1160
        %v1162 = vpop.f32.mrb[0].mxu0
        %v1163 = vpop.f32.mrb[0].mxu0
        %v1164 = vadd.f32 0.0, %v1163
        %v1165 = vpop.f32.mrb[0].mxu0
        %1166 = vmatprep.mubr.bf16.mxu0 0
        %1167 = vmatmul.mubr.bf16.gmra.mrb[0].mxu0 %v819
        %v1168 = vpop.f32.mrb[0].mxu0
        %v1169 = vadd.f32 0.0, %v1168
        %v1170 = vpop.f32.mrb[0].mxu0
        %v1171 = vpop.f32.mrb[0].mxu0
        %v1172 = vadd.f32 0.0, %v1171
        %v1173 = vpop.f32.mrb[0].mxu0
        %1174 = vmatprep.mubr.bf16.mxu0 0
        %1175 = vmatmul.mubr.bf16.gmra.mrb[0].mxu0 %v822
        %v1176 = vpop.f32.mrb[0].mxu0
        %v1177 = vadd.f32 0.0, %v1176
        %v1178 = vpop.f32.mrb[0].mxu0
        %v1179 = vpop.f32.mrb[0].mxu0
        %v1180 = vadd.f32 0.0, %v1179
        %v1181 = vpop.f32.mrb[0].mxu0
        %1182 = vmatprep.mubr.bf16.mxu0 0
        %1183 = vmatmul.mubr.bf16.gmra.mrb[0].mxu0 %v825
        %v1184 = vpop.f32.mrb[0].mxu0
        %v1185 = vadd.f32 0.0, %v1184
        %v1186 = vpop.f32.mrb[0].mxu0
        %v1187 = vpop.f32.mrb[0].mxu0
        %v1188 = vadd.f32 0.0, %v1187
        %v1189 = vpop.f32.mrb[0].mxu0
        %1190 = vmatprep.mubr.bf16.mxu0 0
        %1191 = vmatmul.mubr.bf16.gmra.mrb[0].mxu0 %v828
        %v1192 = vpop.f32.mrb[0].mxu0
        %v1193 = vadd.f32 0.0, %v1192
        %v1194 = vpop.f32.mrb[0].mxu0
        %v1195 = vpop.f32.mrb[0].mxu0
        %v1196 = vadd.f32 0.0, %v1195
        %v1197 = vpop.f32.mrb[0].mxu0
        %1198 = vmatprep.mubr.bf16.mxu0 0
        %1199 = vmatmul.mubr.bf16.gmra.mrb[0].mxu0 %v831
        %v1200 = vpop.f32.mrb[0].mxu0
        %v1201 = vadd.f32 0.0, %v1200
        %v1202 = vpop.f32.mrb[0].mxu0
        %v1203 = vpop.f32.mrb[0].mxu0
        %v1204 = vadd.f32 0.0, %v1203
        %v1205 = vpop.f32.mrb[0].mxu0
        %1206 = vmatprep.mubr.bf16.mxu0 0
        %1207 = vmatmul.mubr.bf16.gmra.mrb[0].mxu0 %v834
        %v1208 = vpop.f32.mrb[0].mxu0
        %v1209 = vadd.f32 0.0, %v1208
        %v1210 = vpop.f32.mrb[0].mxu0
        %v1211 = vpop.f32.mrb[0].mxu0
        %v1212 = vadd.f32 0.0, %v1211
        %v1213 = vpop.f32.mrb[0].mxu0
        %1214 = vmatprep.mubr.bf16.mxu0 0
        %1215 = vmatmul.mubr.bf16.gmra.mrb[0].mxu0 %v837
        %v1216 = vpop.f32.mrb[0].mxu0
        %v1217 = vadd.f32 0.0, %v1216
        %v1218 = vpop.f32.mrb[0].mxu0
        %v1219 = vpop.f32.mrb[0].mxu0
        %v1220 = vadd.f32 0.0, %v1219
        %v1221 = vpop.f32.mrb[0].mxu0
        %1222 = vmatprep.mubr.bf16.mxu0 0
        %1223 = vmatmul.mubr.bf16.gmra.mrb[0].mxu0 %v840
        %v1224 = vpop.f32.mrb[0].mxu0
        %v1225 = vadd.f32 0.0, %v1224
        %v1226 = vpop.f32.mrb[0].mxu0
        %v1227 = vpop.f32.mrb[0].mxu0
        %v1228 = vadd.f32 0.0, %v1227
        %v1229 = vpop.f32.mrb[0].mxu0
        %1230 = vmatprep.mubr.bf16.mxu0 0
        %1231 = vmatmul.mubr.bf16.gmra.mrb[0].mxu0 %v843
        %v1232 = vpop.f32.mrb[0].mxu0
        %v1233 = vadd.f32 0.0, %v1232
        %v1234 = vpop.f32.mrb[0].mxu0
        %v1235 = vpop.f32.mrb[0].mxu0
        %v1236 = vadd.f32 0.0, %v1235
        %v1237 = vpop.f32.mrb[0].mxu0
        %1238 = vmatprep.mubr.bf16.mxu0 0
        %1239 = vmatmul.mubr.bf16.gmra.mrb[0].mxu0 %v846
        %v1240 = vpop.f32.mrb[0].mxu0
        %v1241 = vadd.f32 0.0, %v1240
        %v1242 = vpop.f32.mrb[0].mxu0
        %v1243 = vpop.f32.mrb[0].mxu0
        %v1244 = vadd.f32 0.0, %v1243
        %v1245 = vpop.f32.mrb[0].mxu0
        %1246 = vmatprep.mubr.bf16.mxu0 0
        %1247 = vmatmul.mubr.bf16.gmra.mrb[0].mxu0 %v849
        %v1248 = vpop.f32.mrb[0].mxu0
        %v1249 = vadd.f32 0.0, %v1248
        %v1250 = vpop.f32.mrb[0].mxu0
        %v1251 = vpop.f32.mrb[0].mxu0
        %v1252 = vadd.f32 0.0, %v1251
        %v1253 = vpop.f32.mrb[0].mxu0
        %1254 = vmatprep.mubr.bf16.mxu0 0
        %1255 = vmatmul.mubr.bf16.gmra.mrb[0].mxu0 %v852
        %v1256 = vpop.f32.mrb[0].mxu0
        %v1257 = vadd.f32 0.0, %v1256
        %v1258 = vpop.f32.mrb[0].mxu0
        %v1259 = vpop.f32.mrb[0].mxu0
        %v1260 = vadd.f32 0.0, %v1259
        %v1261 = vpop.f32.mrb[0].mxu0
        %1262 = vmatprep.mubr.bf16.mxu0 0
        %1263 = vmatmul.mubr.bf16.gmra.mrb[0].mxu0 %v855
        %v1264 = vpop.f32.mrb[0].mxu0
        %v1265 = vadd.f32 0.0, %v1264
        %v1266 = vpop.f32.mrb[0].mxu0
        %v1267 = vpop.f32.mrb[0].mxu0
        %v1268 = vadd.f32 0.0, %v1267
        %v1269 = vpop.f32.mrb[0].mxu0
        %1270 = vmatprep.mubr.bf16.mxu0 0
        %1271 = vmatmul.mubr.bf16.gmra.mrb[0].mxu0 %v858
        %v1272 = vpop.f32.mrb[0].mxu0
        %v1273 = vadd.f32 0.0, %v1272
        %v1274 = vpop.f32.mrb[0].mxu0
        %v1275 = vpop.f32.mrb[0].mxu0
        %v1276 = vadd.f32 0.0, %v1275
        %v1277 = vpop.f32.mrb[0].mxu0
        %1278 = vmatprep.mubr.bf16.mxu0 0
        %1279 = vmatmul.mubr.bf16.gmra.mrb[0].mxu0 %v861
        %v1280 = vpop.f32.mrb[0].mxu0
        %v1281 = vadd.f32 0.0, %v1280
        %v1282 = vpop.f32.mrb[0].mxu0
        %v1283 = vpop.f32.mrb[0].mxu0
        %v1284 = vadd.f32 0.0, %v1283
        %v1285 = vpop.f32.mrb[0].mxu0
        %1286 = vmatprep.mubr.bf16.mxu0 0
        %1287 = vmatmul.mubr.bf16.gmra.mrb[0].mxu0 %v864
        %v1288 = vpop.f32.mrb[0].mxu0
        %v1289 = vadd.f32 0.0, %v1288
        %v1290 = vpop.f32.mrb[0].mxu0
        %v1291 = vpop.f32.mrb[0].mxu0
        %v1292 = vadd.f32 0.0, %v1291
        %v1293 = vpop.f32.mrb[0].mxu0
        %1294 = vmatprep.mubr.bf16.mxu0 0
        %1295 = vmatmul.mubr.bf16.gmra.mrb[0].mxu0 %v867
        %v1296 = vpop.f32.mrb[0].mxu0
        %v1297 = vadd.f32 0.0, %v1296
        %v1298 = vpop.f32.mrb[0].mxu0
        %v1299 = vpop.f32.mrb[0].mxu0
        %v1300 = vadd.f32 0.0, %v1299
        %v1301 = vpop.f32.mrb[0].mxu0
        %1302 = vmatprep.mubr.bf16.mxu0 0
        %1303 = vmatmul.mubr.bf16.gmra.mrb[0].mxu0 %v870
        %v1304 = vpop.f32.mrb[0].mxu0
        %v1305 = vadd.f32 0.0, %v1304
        %v1306 = vpop.f32.mrb[0].mxu0
        %v1307 = vpop.f32.mrb[0].mxu0
        %v1308 = vadd.f32 0.0, %v1307
        %v1309 = vpop.f32.mrb[0].mxu0
        %1310 = vmatprep.mubr.bf16.mxu0 0
        %1311 = vmatmul.mubr.bf16.gmra.mrb[0].mxu0 %v873
        %v1312 = vpop.f32.mrb[0].mxu0
        %v1313 = vadd.f32 0.0, %v1312
        %v1314 = vpop.f32.mrb[0].mxu0
        %v1315 = vpop.f32.mrb[0].mxu0
        %v1316 = vadd.f32 0.0, %v1315
        %v1317 = vpop.f32.mrb[0].mxu0
        %1318 = vmatprep.mubr.bf16.mxu0 0
        %1319 = vmatmul.mubr.bf16.gmra.mrb[0].mxu0 %v876
        %v1320 = vpop.f32.mrb[0].mxu0
        %v1321 = vadd.f32 0.0, %v1320
        %v1322 = vpop.f32.mrb[0].mxu0
        %v1323 = vpop.f32.mrb[0].mxu0
        %v1324 = vadd.f32 0.0, %v1323
        %v1325 = vpop.f32.mrb[0].mxu0
        %1326 = vmatprep.mubr.bf16.mxu0 0
        %1327 = vmatmul.mubr.bf16.gmra.mrb[0].mxu0 %v879
        %v1328 = vpop.f32.mrb[0].mxu0
        %v1329 = vadd.f32 0.0, %v1328
        %v1330 = vpop.f32.mrb[0].mxu0
        %v1331 = vpop.f32.mrb[0].mxu0
        %v1332 = vadd.f32 0.0, %v1331
        %v1333 = vpop.f32.mrb[0].mxu0
        %1334 = vmatprep.mubr.bf16.mxu0 0
        %1335 = vmatmul.mubr.bf16.gmra.mrb[0].mxu0 %v882
        %v1336 = vpop.f32.mrb[0].mxu0
        %v1337 = vadd.f32 0.0, %v1336
        %v1338 = vpop.f32.mrb[0].mxu0
        %v1339 = vpop.f32.mrb[0].mxu0
        %v1340 = vadd.f32 0.0, %v1339
        %v1341 = vpop.f32.mrb[0].mxu0
        %1342 = vmatprep.mubr.bf16.mxu0 0
        %1343 = vmatmul.mubr.bf16.gmra.mrb[0].mxu0 %v885
        %v1344 = vpop.f32.mrb[0].mxu0
        %v1345 = vadd.f32 0.0, %v1344
        %v1346 = vpop.f32.mrb[0].mxu0
        %v1347 = vpop.f32.mrb[0].mxu0
        %v1348 = vadd.f32 0.0, %v1347
        %v1349 = vpop.f32.mrb[0].mxu0
        %1350 = vmatprep.mubr.bf16.mxu0 0
        %1351 = vmatmul.mubr.bf16.gmra.mrb[0].mxu0 %v888
        %v1352 = vpop.f32.mrb[0].mxu0
        %v1353 = vadd.f32 0.0, %v1352
        %v1354 = vpop.f32.mrb[0].mxu0
        %v1355 = vpop.f32.mrb[0].mxu0
        %v1356 = vadd.f32 0.0, %v1355
        %v1357 = vpop.f32.mrb[0].mxu0
        %1358 = vmatprep.mubr.bf16.mxu0 0
        %1359 = vmatmul.mubr.bf16.gmra.mrb[0].mxu0 %v891
        %v1360 = vpop.f32.mrb[0].mxu0
        %v1361 = vadd.f32 0.0, %v1360
        %v1362 = vpop.f32.mrb[0].mxu0
        %v1363 = vpop.f32.mrb[0].mxu0
        %v1364 = vadd.f32 0.0, %v1363
        %v1365 = vpop.f32.mrb[0].mxu0
        %1366 = vmatprep.mubr.bf16.mxu0 0
        %1367 = vmatmul.mubr.bf16.gmra.mrb[0].mxu0 %v894
        %v1368 = vpop.f32.mrb[0].mxu0
        %v1369 = vadd.f32 0.0, %v1368
        %v1370 = vpop.f32.mrb[0].mxu0
        %v1371 = vpop.f32.mrb[0].mxu0
        %v1372 = vadd.f32 0.0, %v1371
        %v1373 = vpop.f32.mrb[0].mxu0
        %1374 = vmatprep.mubr.bf16.mxu0 0
        %1375 = vmatmul.mubr.bf16.gmra.mrb[0].mxu0 %v897
        %v1376 = vpop.f32.mrb[0].mxu0
        %v1377 = vadd.f32 0.0, %v1376
        %v1378 = vpop.f32.mrb[0].mxu0
        %v1379 = vpop.f32.mrb[0].mxu0
        %v1380 = vadd.f32 0.0, %v1379
        %v1381 = vpop.f32.mrb[0].mxu0
        %1382 = vmatprep.mubr.bf16.mxu0 0
        %1383 = vmatmul.mubr.bf16.gmra.mrb[0].mxu0 %v900
        %v1384 = vpop.f32.mrb[0].mxu0
        %v1385 = vadd.f32 0.0, %v1384
        %v1386 = vpop.f32.mrb[0].mxu0
        %v1387 = vpop.f32.mrb[0].mxu0
        %v1388 = vadd.f32 0.0, %v1387
        %v1389 = vpop.f32.mrb[0].mxu0
        %1390 = vmatprep.mubr.bf16.mxu0 0
        %1391 = vmatmul.mubr.bf16.gmra.mrb[0].mxu0 %v903
        %v1392 = vpop.f32.mrb[0].mxu0
        %v1393 = vadd.f32 0.0, %v1392
        %v1394 = vpop.f32.mrb[0].mxu0
        %v1395 = vpop.f32.mrb[0].mxu0
        %v1396 = vadd.f32 0.0, %v1395
        %v1397 = vpop.f32.mrb[0].mxu0
        %1398 = vmatprep.mubr.bf16.mxu0 0
        %1399 = vmatmul.mubr.bf16.gmra.mrb[0].mxu0 %v906
        %v1400 = vpop.f32.mrb[0].mxu0
        %v1401 = vadd.f32 0.0, %v1400
        %v1402 = vpop.f32.mrb[0].mxu0
        %v1403 = vpop.f32.mrb[0].mxu0
        %v1404 = vadd.f32 0.0, %v1403
        %v1405 = vpop.f32.mrb[0].mxu0
        %1406 = vmatprep.mubr.bf16.mxu0 0
        %1407 = vmatmul.mubr.bf16.gmra.mrb[0].mxu0 %v909
        %v1408 = vpop.f32.mrb[0].mxu0
        %v1409 = vadd.f32 0.0, %v1408
        %v1410 = vpop.f32.mrb[0].mxu0
        %v1411 = vpop.f32.mrb[0].mxu0
        %v1412 = vadd.f32 0.0, %v1411
        %v1413 = vpop.f32.mrb[0].mxu0
        %1414 = vmatprep.mubr.bf16.mxu0 0
        %1415 = vmatmul.mubr.bf16.gmra.mrb[0].mxu0 %v912
        %v1416 = vpop.f32.mrb[0].mxu0
        %v1417 = vadd.f32 0.0, %v1416
        %v1418 = vpop.f32.mrb[0].mxu0
        %v1419 = vpop.f32.mrb[0].mxu0
        %v1420 = vadd.f32 0.0, %v1419
        %v1421 = vpop.f32.mrb[0].mxu0
        %1422 = vmatprep.mubr.bf16.mxu0 0
        %1423 = vmatmul.mubr.bf16.gmra.mrb[0].mxu0 %v915
        %v1424 = vpop.f32.mrb[0].mxu0
        %v1425 = vadd.f32 0.0, %v1424
        %v1426 = vpop.f32.mrb[0].mxu0
        %v1427 = vpop.f32.mrb[0].mxu0
        %v1428 = vadd.f32 0.0, %v1427
        %v1429 = vpop.f32.mrb[0].mxu0
        %1430 = vmatprep.mubr.bf16.mxu0 0
        %1431 = vmatmul.mubr.bf16.gmra.mrb[0].mxu0 %v918
        %v1432 = vpop.f32.mrb[0].mxu0
        %v1433 = vadd.f32 0.0, %v1432
        %v1434 = vpop.f32.mrb[0].mxu0
        %v1435 = vpop.f32.mrb[0].mxu0
        %v1436 = vadd.f32 0.0, %v1435
        %v1437 = vpop.f32.mrb[0].mxu0
        %1438 = vmatprep.mubr.bf16.mxu0 0
        %1439 = vmatmul.mubr.bf16.gmra.mrb[0].mxu0 %v921
        %v1440 = vpop.f32.mrb[0].mxu0
        %v1441 = vadd.f32 0.0, %v1440
        %v1442 = vpop.f32.mrb[0].mxu0
        %v1443 = vpop.f32.mrb[0].mxu0
        %v1444 = vadd.f32 0.0, %v1443
        %v1445 = vpop.f32.mrb[0].mxu0
        %1446 = vmatprep.mubr.bf16.mxu0 0
        %1447 = vmatmul.mubr.bf16.gmra.mrb[0].mxu0 %v924
        %v1448 = vpop.f32.mrb[0].mxu0
        %v1449 = vadd.f32 0.0, %v1448
        %v1450 = vpop.f32.mrb[0].mxu0
        %v1451 = vpop.f32.mrb[0].mxu0
        %v1452 = vadd.f32 0.0, %v1451
        %v1453 = vpop.f32.mrb[0].mxu0
        %1454 = vmatprep.mubr.bf16.mxu0 0
        %1455 = vmatmul.mubr.bf16.gmra.mrb[0].mxu0 %v927
        %v1456 = vpop.f32.mrb[0].mxu0
        %v1457 = vadd.f32 0.0, %v1456
        %v1458 = vpop.f32.mrb[0].mxu0
        %v1459 = vpop.f32.mrb[0].mxu0
        %v1460 = vadd.f32 0.0, %v1459
        %v1461 = vpop.f32.mrb[0].mxu0
        %1462 = vmatprep.mubr.bf16.mxu0 0
        %1463 = vmatmul.mubr.bf16.gmra.mrb[0].mxu0 %v930
        %v1464 = vpop.f32.mrb[0].mxu0
        %v1465 = vadd.f32 0.0, %v1464
        %v1466 = vpop.f32.mrb[0].mxu0
        %v1467 = vpop.f32.mrb[0].mxu0
        %v1468 = vadd.f32 0.0, %v1467
        %v1469 = vpop.f32.mrb[0].mxu0
        %1470 = vmatprep.mubr.bf16.mxu0 0
        %1471 = vmatmul.mubr.bf16.gmra.mrb[0].mxu0 %v933
        %v1472 = vpop.f32.mrb[0].mxu0
        %v1473 = vadd.f32 0.0, %v1472
        %v1474 = vpop.f32.mrb[0].mxu0
        %v1475 = vpop.f32.mrb[0].mxu0
        %v1476 = vadd.f32 0.0, %v1475
        %v1477 = vpop.f32.mrb[0].mxu0
        %1478 = vmatprep.mubr.bf16.mxu0 0
        %1479 = vmatmul.mubr.bf16.gmra.mrb[0].mxu0 %v936
        %v1480 = vpop.f32.mrb[0].mxu0
        %v1481 = vadd.f32 0.0, %v1480
        %v1482 = vpop.f32.mrb[0].mxu0
        %v1483 = vpop.f32.mrb[0].mxu0
        %v1484 = vadd.f32 0.0, %v1483
        %v1485 = vpop.f32.mrb[0].mxu0
        %1486 = vdwg.mxu0
        %v1487 = vld [vmem:[#allocation7] sm:$0x1]
        %v1489 = vlaneseq
        %v1490 = vshrl.u32 %v1489, 7
        %v1491 = vsub.s32 0, %v1490
        %v1492 = vrot.slane %v1487, %v1491
        %v1494 = vmul.f32 %v977, %v1492
        %v1495 = vmul.f32 %v980, %v1492
        %v1496 = vmul.f32 %v985, %v1492
        %v1497 = vmul.f32 %v988, %v1492
        %v1498 = vmul.f32 %v993, %v1492
        %v1499 = vmul.f32 %v996, %v1492
        %v1500 = vmul.f32 %v1001, %v1492
        %v1501 = vmul.f32 %v1004, %v1492
        %v1502 = vmul.f32 %v1009, %v1492
        %v1503 = vmul.f32 %v1012, %v1492
        %v1504 = vmul.f32 %v1017, %v1492
        %v1505 = vmul.f32 %v1020, %v1492
        %v1506 = vmul.f32 %v1025, %v1492
        %v1507 = vmul.f32 %v1028, %v1492
        %v1508 = vmul.f32 %v1033, %v1492
        %v1509 = vmul.f32 %v1036, %v1492
        %v1510 = vmul.f32 %v1041, %v1492
        %v1511 = vmul.f32 %v1044, %v1492
        %v1512 = vmul.f32 %v1049, %v1492
        %v1513 = vmul.f32 %v1052, %v1492
        %v1514 = vmul.f32 %v1057, %v1492
        %v1515 = vmul.f32 %v1060, %v1492
        %v1516 = vmul.f32 %v1065, %v1492
        %v1517 = vmul.f32 %v1068, %v1492
        %v1518 = vmul.f32 %v1073, %v1492
        %v1519 = vmul.f32 %v1076, %v1492
        %v1520 = vmul.f32 %v1081, %v1492
        %v1521 = vmul.f32 %v1084, %v1492
        %v1522 = vmul.f32 %v1089, %v1492
        %v1523 = vmul.f32 %v1092, %v1492
        %v1524 = vmul.f32 %v1097, %v1492
        %v1525 = vmul.f32 %v1100, %v1492
        %v1526 = vmul.f32 %v1105, %v1492
        %v1527 = vmul.f32 %v1108, %v1492
        %v1528 = vmul.f32 %v1113, %v1492
        %v1529 = vmul.f32 %v1116, %v1492
        %v1530 = vmul.f32 %v1121, %v1492
        %v1531 = vmul.f32 %v1124, %v1492
        %v1532 = vmul.f32 %v1129, %v1492
        %v1533 = vmul.f32 %v1132, %v1492
        %v1534 = vmul.f32 %v1137, %v1492
        %v1535 = vmul.f32 %v1140, %v1492
        %v1536 = vmul.f32 %v1145, %v1492
        %v1537 = vmul.f32 %v1148, %v1492
        %v1538 = vmul.f32 %v1153, %v1492
        %v1539 = vmul.f32 %v1156, %v1492
        %v1540 = vmul.f32 %v1161, %v1492
        %v1541 = vmul.f32 %v1164, %v1492
        %v1542 = vmul.f32 %v1169, %v1492
        %v1543 = vmul.f32 %v1172, %v1492
        %v1544 = vmul.f32 %v1177, %v1492
        %v1545 = vmul.f32 %v1180, %v1492
        %v1546 = vmul.f32 %v1185, %v1492
        %v1547 = vmul.f32 %v1188, %v1492
        %v1548 = vmul.f32 %v1193, %v1492
        %v1549 = vmul.f32 %v1196, %v1492
        %v1550 = vmul.f32 %v1201, %v1492
        %v1551 = vmul.f32 %v1204, %v1492
        %v1552 = vmul.f32 %v1209, %v1492
        %v1553 = vmul.f32 %v1212, %v1492
        %v1554 = vmul.f32 %v1217, %v1492
        %v1555 = vmul.f32 %v1220, %v1492
        %v1556 = vmul.f32 %v1225, %v1492
        %v1557 = vmul.f32 %v1228, %v1492
        %v1558 = vmul.f32 %v1233, %v1492
        %v1559 = vmul.f32 %v1236, %v1492
        %v1560 = vmul.f32 %v1241, %v1492
        %v1561 = vmul.f32 %v1244, %v1492
        %v1562 = vmul.f32 %v1249, %v1492
        %v1563 = vmul.f32 %v1252, %v1492
        %v1564 = vmul.f32 %v1257, %v1492
        %v1565 = vmul.f32 %v1260, %v1492
        %v1566 = vmul.f32 %v1265, %v1492
        %v1567 = vmul.f32 %v1268, %v1492
        %v1568 = vmul.f32 %v1273, %v1492
        %v1569 = vmul.f32 %v1276, %v1492
        %v1570 = vmul.f32 %v1281, %v1492
        %v1571 = vmul.f32 %v1284, %v1492
        %v1572 = vmul.f32 %v1289, %v1492
        %v1573 = vmul.f32 %v1292, %v1492
        %v1574 = vmul.f32 %v1297, %v1492
        %v1575 = vmul.f32 %v1300, %v1492
        %v1576 = vmul.f32 %v1305, %v1492
        %v1577 = vmul.f32 %v1308, %v1492
        %v1578 = vmul.f32 %v1313, %v1492
        %v1579 = vmul.f32 %v1316, %v1492
        %v1580 = vmul.f32 %v1321, %v1492
        %v1581 = vmul.f32 %v1324, %v1492
        %v1582 = vmul.f32 %v1329, %v1492
        %v1583 = vmul.f32 %v1332, %v1492
        %v1584 = vmul.f32 %v1337, %v1492
        %v1585 = vmul.f32 %v1340, %v1492
        %v1586 = vmul.f32 %v1345, %v1492
        %v1587 = vmul.f32 %v1348, %v1492
        %v1588 = vmul.f32 %v1353, %v1492
        %v1589 = vmul.f32 %v1356, %v1492
        %v1590 = vmul.f32 %v1361, %v1492
        %v1591 = vmul.f32 %v1364, %v1492
        %v1592 = vmul.f32 %v1369, %v1492
        %v1593 = vmul.f32 %v1372, %v1492
        %v1594 = vmul.f32 %v1377, %v1492
        %v1595 = vmul.f32 %v1380, %v1492
        %v1596 = vmul.f32 %v1385, %v1492
        %v1597 = vmul.f32 %v1388, %v1492
        %v1598 = vmul.f32 %v1393, %v1492
        %v1599 = vmul.f32 %v1396, %v1492
        %v1600 = vmul.f32 %v1401, %v1492
        %v1601 = vmul.f32 %v1404, %v1492
        %v1602 = vmul.f32 %v1409, %v1492
        %v1603 = vmul.f32 %v1412, %v1492
        %v1604 = vmul.f32 %v1417, %v1492
        %v1605 = vmul.f32 %v1420, %v1492
        %v1606 = vmul.f32 %v1425, %v1492
        %v1607 = vmul.f32 %v1428, %v1492
        %v1608 = vmul.f32 %v1433, %v1492
        %v1609 = vmul.f32 %v1436, %v1492
        %v1610 = vmul.f32 %v1441, %v1492
        %v1611 = vmul.f32 %v1444, %v1492
        %v1612 = vmul.f32 %v1449, %v1492
        %v1613 = vmul.f32 %v1452, %v1492
        %v1614 = vmul.f32 %v1457, %v1492
        %v1615 = vmul.f32 %v1460, %v1492
        %v1616 = vmul.f32 %v1465, %v1492
        %v1617 = vmul.f32 %v1468, %v1492
        %v1618 = vmul.f32 %v1473, %v1492
        %v1619 = vmul.f32 %v1476, %v1492
        %v1620 = vmul.f32 %v1481, %v1492
        %v1621 = vmul.f32 %v1484, %v1492
        %v1622 = vld [vmem:[#allocation8] sm:$0x1]
        %v1624 = vlaneseq
        %v1625 = vshrl.u32 %v1624, 7
        %v1626 = vsub.s32 0, %v1625
        %v1627 = vrot.slane %v1622, %v1626
        %v1629 = vadd.f32 %v1494, %v1627
        %v1630 = vadd.f32 %v1495, %v1627
        %v1631 = vadd.f32 %v1496, %v1627
        %v1632 = vadd.f32 %v1497, %v1627
        %v1633 = vadd.f32 %v1498, %v1627
        %v1634 = vadd.f32 %v1499, %v1627
        %v1635 = vadd.f32 %v1500, %v1627
        %v1636 = vadd.f32 %v1501, %v1627
        %v1637 = vadd.f32 %v1502, %v1627
        %v1638 = vadd.f32 %v1503, %v1627
        %v1639 = vadd.f32 %v1504, %v1627
        %v1640 = vadd.f32 %v1505, %v1627
        %v1641 = vadd.f32 %v1506, %v1627
        %v1642 = vadd.f32 %v1507, %v1627
        %v1643 = vadd.f32 %v1508, %v1627
        %v1644 = vadd.f32 %v1509, %v1627
        %v1645 = vadd.f32 %v1510, %v1627
        %v1646 = vadd.f32 %v1511, %v1627
        %v1647 = vadd.f32 %v1512, %v1627
        %v1648 = vadd.f32 %v1513, %v1627
        %v1649 = vadd.f32 %v1514, %v1627
        %v1650 = vadd.f32 %v1515, %v1627
        %v1651 = vadd.f32 %v1516, %v1627
        %v1652 = vadd.f32 %v1517, %v1627
        %v1653 = vadd.f32 %v1518, %v1627
        %v1654 = vadd.f32 %v1519, %v1627
        %v1655 = vadd.f32 %v1520, %v1627
        %v1656 = vadd.f32 %v1521, %v1627
        %v1657 = vadd.f32 %v1522, %v1627
        %v1658 = vadd.f32 %v1523, %v1627
        %v1659 = vadd.f32 %v1524, %v1627
        %v1660 = vadd.f32 %v1525, %v1627
        %v1661 = vadd.f32 %v1526, %v1627
        %v1662 = vadd.f32 %v1527, %v1627
        %v1663 = vadd.f32 %v1528, %v1627
        %v1664 = vadd.f32 %v1529, %v1627
        %v1665 = vadd.f32 %v1530, %v1627
        %v1666 = vadd.f32 %v1531, %v1627
        %v1667 = vadd.f32 %v1532, %v1627
        %v1668 = vadd.f32 %v1533, %v1627
        %v1669 = vadd.f32 %v1534, %v1627
        %v1670 = vadd.f32 %v1535, %v1627
        %v1671 = vadd.f32 %v1536, %v1627
        %v1672 = vadd.f32 %v1537, %v1627
        %v1673 = vadd.f32 %v1538, %v1627
        %v1674 = vadd.f32 %v1539, %v1627
        %v1675 = vadd.f32 %v1540, %v1627
        %v1676 = vadd.f32 %v1541, %v1627
        %v1677 = vadd.f32 %v1542, %v1627
        %v1678 = vadd.f32 %v1543, %v1627
        %v1679 = vadd.f32 %v1544, %v1627
        %v1680 = vadd.f32 %v1545, %v1627
        %v1681 = vadd.f32 %v1546, %v1627
        %v1682 = vadd.f32 %v1547, %v1627
        %v1683 = vadd.f32 %v1548, %v1627
        %v1684 = vadd.f32 %v1549, %v1627
        %v1685 = vadd.f32 %v1550, %v1627
        %v1686 = vadd.f32 %v1551, %v1627
        %v1687 = vadd.f32 %v1552, %v1627
        %v1688 = vadd.f32 %v1553, %v1627
        %v1689 = vadd.f32 %v1554, %v1627
        %v1690 = vadd.f32 %v1555, %v1627
        %v1691 = vadd.f32 %v1556, %v1627
        %v1692 = vadd.f32 %v1557, %v1627
        %v1693 = vadd.f32 %v1558, %v1627
        %v1694 = vadd.f32 %v1559, %v1627
        %v1695 = vadd.f32 %v1560, %v1627
        %v1696 = vadd.f32 %v1561, %v1627
        %v1697 = vadd.f32 %v1562, %v1627
        %v1698 = vadd.f32 %v1563, %v1627
        %v1699 = vadd.f32 %v1564, %v1627
        %v1700 = vadd.f32 %v1565, %v1627
        %v1701 = vadd.f32 %v1566, %v1627
        %v1702 = vadd.f32 %v1567, %v1627
        %v1703 = vadd.f32 %v1568, %v1627
        %v1704 = vadd.f32 %v1569, %v1627
        %v1705 = vadd.f32 %v1570, %v1627
        %v1706 = vadd.f32 %v1571, %v1627
        %v1707 = vadd.f32 %v1572, %v1627
        %v1708 = vadd.f32 %v1573, %v1627
        %v1709 = vadd.f32 %v1574, %v1627
        %v1710 = vadd.f32 %v1575, %v1627
        %v1711 = vadd.f32 %v1576, %v1627
        %v1712 = vadd.f32 %v1577, %v1627
        %v1713 = vadd.f32 %v1578, %v1627
        %v1714 = vadd.f32 %v1579, %v1627
        %v1715 = vadd.f32 %v1580, %v1627
        %v1716 = vadd.f32 %v1581, %v1627
        %v1717 = vadd.f32 %v1582, %v1627
        %v1718 = vadd.f32 %v1583, %v1627
        %v1719 = vadd.f32 %v1584, %v1627
        %v1720 = vadd.f32 %v1585, %v1627
        %v1721 = vadd.f32 %v1586, %v1627
        %v1722 = vadd.f32 %v1587, %v1627
        %v1723 = vadd.f32 %v1588, %v1627
        %v1724 = vadd.f32 %v1589, %v1627
        %v1725 = vadd.f32 %v1590, %v1627
        %v1726 = vadd.f32 %v1591, %v1627
        %v1727 = vadd.f32 %v1592, %v1627
        %v1728 = vadd.f32 %v1593, %v1627
        %v1729 = vadd.f32 %v1594, %v1627
        %v1730 = vadd.f32 %v1595, %v1627
        %v1731 = vadd.f32 %v1596, %v1627
        %v1732 = vadd.f32 %v1597, %v1627
        %v1733 = vadd.f32 %v1598, %v1627
        %v1734 = vadd.f32 %v1599, %v1627
        %v1735 = vadd.f32 %v1600, %v1627
        %v1736 = vadd.f32 %v1601, %v1627
        %v1737 = vadd.f32 %v1602, %v1627
        %v1738 = vadd.f32 %v1603, %v1627
        %v1739 = vadd.f32 %v1604, %v1627
        %v1740 = vadd.f32 %v1605, %v1627
        %v1741 = vadd.f32 %v1606, %v1627
        %v1742 = vadd.f32 %v1607, %v1627
        %v1743 = vadd.f32 %v1608, %v1627
        %v1744 = vadd.f32 %v1609, %v1627
        %v1745 = vadd.f32 %v1610, %v1627
        %v1746 = vadd.f32 %v1611, %v1627
        %v1747 = vadd.f32 %v1612, %v1627
        %v1748 = vadd.f32 %v1613, %v1627
        %v1749 = vadd.f32 %v1614, %v1627
        %v1750 = vadd.f32 %v1615, %v1627
        %v1751 = vadd.f32 %v1616, %v1627
        %v1752 = vadd.f32 %v1617, %v1627
        %v1753 = vadd.f32 %v1618, %v1627
        %v1754 = vadd.f32 %v1619, %v1627
        %v1755 = vadd.f32 %v1620, %v1627
        %v1756 = vadd.f32 %v1621, %v1627
        %v1757 = vmax.f32 %v1629, 0.0
        %v1758 = vmax.f32 %v1630, 0.0
        %v1759 = vmax.f32 %v1631, 0.0
        %v1760 = vmax.f32 %v1632, 0.0
        %v1761 = vmax.f32 %v1633, 0.0
        %v1762 = vmax.f32 %v1634, 0.0
        %v1763 = vmax.f32 %v1635, 0.0
        %v1764 = vmax.f32 %v1636, 0.0
        %v1765 = vmax.f32 %v1637, 0.0
        %v1766 = vmax.f32 %v1638, 0.0
        %v1767 = vmax.f32 %v1639, 0.0
        %v1768 = vmax.f32 %v1640, 0.0
        %v1769 = vmax.f32 %v1641, 0.0
        %v1770 = vmax.f32 %v1642, 0.0
        %v1771 = vmax.f32 %v1643, 0.0
        %v1772 = vmax.f32 %v1644, 0.0
        %v1773 = vmax.f32 %v1645, 0.0
        %v1774 = vmax.f32 %v1646, 0.0
        %v1775 = vmax.f32 %v1647, 0.0
        %v1776 = vmax.f32 %v1648, 0.0
        %v1777 = vmax.f32 %v1649, 0.0
        %v1778 = vmax.f32 %v1650, 0.0
        %v1779 = vmax.f32 %v1651, 0.0
        %v1780 = vmax.f32 %v1652, 0.0
        %v1781 = vmax.f32 %v1653, 0.0
        %v1782 = vmax.f32 %v1654, 0.0
        %v1783 = vmax.f32 %v1655, 0.0
        %v1784 = vmax.f32 %v1656, 0.0
        %v1785 = vmax.f32 %v1657, 0.0
        %v1786 = vmax.f32 %v1658, 0.0
        %v1787 = vmax.f32 %v1659, 0.0
        %v1788 = vmax.f32 %v1660, 0.0
        %v1789 = vmax.f32 %v1661, 0.0
        %v1790 = vmax.f32 %v1662, 0.0
        %v1791 = vmax.f32 %v1663, 0.0
        %v1792 = vmax.f32 %v1664, 0.0
        %v1793 = vmax.f32 %v1665, 0.0
        %v1794 = vmax.f32 %v1666, 0.0
        %v1795 = vmax.f32 %v1667, 0.0
        %v1796 = vmax.f32 %v1668, 0.0
        %v1797 = vmax.f32 %v1669, 0.0
        %v1798 = vmax.f32 %v1670, 0.0
        %v1799 = vmax.f32 %v1671, 0.0
        %v1800 = vmax.f32 %v1672, 0.0
        %v1801 = vmax.f32 %v1673, 0.0
        %v1802 = vmax.f32 %v1674, 0.0
        %v1803 = vmax.f32 %v1675, 0.0
        %v1804 = vmax.f32 %v1676, 0.0
        %v1805 = vmax.f32 %v1677, 0.0
        %v1806 = vmax.f32 %v1678, 0.0
        %v1807 = vmax.f32 %v1679, 0.0
        %v1808 = vmax.f32 %v1680, 0.0
        %v1809 = vmax.f32 %v1681, 0.0
        %v1810 = vmax.f32 %v1682, 0.0
        %v1811 = vmax.f32 %v1683, 0.0
        %v1812 = vmax.f32 %v1684, 0.0
        %v1813 = vmax.f32 %v1685, 0.0
        %v1814 = vmax.f32 %v1686, 0.0
        %v1815 = vmax.f32 %v1687, 0.0
        %v1816 = vmax.f32 %v1688, 0.0
        %v1817 = vmax.f32 %v1689, 0.0
        %v1818 = vmax.f32 %v1690, 0.0
        %v1819 = vmax.f32 %v1691, 0.0
        %v1820 = vmax.f32 %v1692, 0.0
        %v1821 = vmax.f32 %v1693, 0.0
        %v1822 = vmax.f32 %v1694, 0.0
        %v1823 = vmax.f32 %v1695, 0.0
        %v1824 = vmax.f32 %v1696, 0.0
        %v1825 = vmax.f32 %v1697, 0.0
        %v1826 = vmax.f32 %v1698, 0.0
        %v1827 = vmax.f32 %v1699, 0.0
        %v1828 = vmax.f32 %v1700, 0.0
        %v1829 = vmax.f32 %v1701, 0.0
        %v1830 = vmax.f32 %v1702, 0.0
        %v1831 = vmax.f32 %v1703, 0.0
        %v1832 = vmax.f32 %v1704, 0.0
        %v1833 = vmax.f32 %v1705, 0.0
        %v1834 = vmax.f32 %v1706, 0.0
        %v1835 = vmax.f32 %v1707, 0.0
        %v1836 = vmax.f32 %v1708, 0.0
        %v1837 = vmax.f32 %v1709, 0.0
        %v1838 = vmax.f32 %v1710, 0.0
        %v1839 = vmax.f32 %v1711, 0.0
        %v1840 = vmax.f32 %v1712, 0.0
        %v1841 = vmax.f32 %v1713, 0.0
        %v1842 = vmax.f32 %v1714, 0.0
        %v1843 = vmax.f32 %v1715, 0.0
        %v1844 = vmax.f32 %v1716, 0.0
        %v1845 = vmax.f32 %v1717, 0.0
        %v1846 = vmax.f32 %v1718, 0.0
        %v1847 = vmax.f32 %v1719, 0.0
        %v1848 = vmax.f32 %v1720, 0.0
        %v1849 = vmax.f32 %v1721, 0.0
        %v1850 = vmax.f32 %v1722, 0.0
        %v1851 = vmax.f32 %v1723, 0.0
        %v1852 = vmax.f32 %v1724, 0.0
        %v1853 = vmax.f32 %v1725, 0.0
        %v1854 = vmax.f32 %v1726, 0.0
        %v1855 = vmax.f32 %v1727, 0.0
        %v1856 = vmax.f32 %v1728, 0.0
        %v1857 = vmax.f32 %v1729, 0.0
        %v1858 = vmax.f32 %v1730, 0.0
        %v1859 = vmax.f32 %v1731, 0.0
        %v1860 = vmax.f32 %v1732, 0.0
        %v1861 = vmax.f32 %v1733, 0.0
        %v1862 = vmax.f32 %v1734, 0.0
        %v1863 = vmax.f32 %v1735, 0.0
        %v1864 = vmax.f32 %v1736, 0.0
        %v1865 = vmax.f32 %v1737, 0.0
        %v1866 = vmax.f32 %v1738, 0.0
        %v1867 = vmax.f32 %v1739, 0.0
        %v1868 = vmax.f32 %v1740, 0.0
        %v1869 = vmax.f32 %v1741, 0.0
        %v1870 = vmax.f32 %v1742, 0.0
        %v1871 = vmax.f32 %v1743, 0.0
        %v1872 = vmax.f32 %v1744, 0.0
        %v1873 = vmax.f32 %v1745, 0.0
        %v1874 = vmax.f32 %v1746, 0.0
        %v1875 = vmax.f32 %v1747, 0.0
        %v1876 = vmax.f32 %v1748, 0.0
        %v1877 = vmax.f32 %v1749, 0.0
        %v1878 = vmax.f32 %v1750, 0.0
        %v1879 = vmax.f32 %v1751, 0.0
        %v1880 = vmax.f32 %v1752, 0.0
        %v1881 = vmax.f32 %v1753, 0.0
        %v1882 = vmax.f32 %v1754, 0.0
        %v1883 = vmax.f32 %v1755, 0.0
        %v1884 = vmax.f32 %v1756, 0.0
        %vm1885 = vcmask 64512
        %1886 = vst.msk [vmem:[%s273] sm:$0xff] %vm1885, %v1757
        %1887 = vst.msk [vmem:[%s273 + $0x8] sm:$0xff] %vm1885, %v1758
        %1888 = vst.msk [vmem:[%s273 + $0x10] sm:$0xff] %vm1885, %v1759
        %1889 = vst.msk [vmem:[%s273 + $0x18] sm:$0xff] %vm1885, %v1760
        %1890 = vst.msk [vmem:[%s273 + $0x20] sm:$0xff] %vm1885, %v1761
        %1891 = vst.msk [vmem:[%s273 + $0x28] sm:$0xff] %vm1885, %v1762
        %1892 = vst.msk [vmem:[%s273 + $0x30] sm:$0xff] %vm1885, %v1763
        %1893 = vst.msk [vmem:[%s273 + $0x38] sm:$0xff] %vm1885, %v1764
        %1894 = vst.msk [vmem:[%s273 + $0x40] sm:$0xff] %vm1885, %v1765
        %1895 = vst.msk [vmem:[%s273 + $0x48] sm:$0xff] %vm1885, %v1766
        %1896 = vst.msk [vmem:[%s273 + $0x50] sm:$0xff] %vm1885, %v1767
        %1897 = vst.msk [vmem:[%s273 + $0x58] sm:$0xff] %vm1885, %v1768
        %1898 = vst.msk [vmem:[%s273 + $0x60] sm:$0xff] %vm1885, %v1769
        %1899 = vst.msk [vmem:[%s273 + $0x68] sm:$0xff] %vm1885, %v1770
        %1900 = vst.msk [vmem:[%s273 + $0x70] sm:$0xff] %vm1885, %v1771
        %1901 = vst.msk [vmem:[%s273 + $0x78] sm:$0xff] %vm1885, %v1772
        %1902 = vst.msk [vmem:[%s273 + $0x80] sm:$0xff] %vm1885, %v1773
        %1903 = vst.msk [vmem:[%s273 + $0x88] sm:$0xff] %vm1885, %v1774
        %1904 = vst.msk [vmem:[%s273 + $0x90] sm:$0xff] %vm1885, %v1775
        %1905 = vst.msk [vmem:[%s273 + $0x98] sm:$0xff] %vm1885, %v1776
        %1906 = vst.msk [vmem:[%s273 + $0xa0] sm:$0xff] %vm1885, %v1777
        %1907 = vst.msk [vmem:[%s273 + $0xa8] sm:$0xff] %vm1885, %v1778
        %1908 = vst.msk [vmem:[%s273 + $0xb0] sm:$0xff] %vm1885, %v1779
        %1909 = vst.msk [vmem:[%s273 + $0xb8] sm:$0xff] %vm1885, %v1780
        %1910 = vst.msk [vmem:[%s273 + $0xc0] sm:$0xff] %vm1885, %v1781
        %1911 = vst.msk [vmem:[%s273 + $0xc8] sm:$0xff] %vm1885, %v1782
        %1912 = vst.msk [vmem:[%s273 + $0xd0] sm:$0xff] %vm1885, %v1783
        %1913 = vst.msk [vmem:[%s273 + $0xd8] sm:$0xff] %vm1885, %v1784
        %1914 = vst.msk [vmem:[%s273 + $0xe0] sm:$0xff] %vm1885, %v1785
        %1915 = vst.msk [vmem:[%s273 + $0xe8] sm:$0xff] %vm1885, %v1786
        %1916 = vst.msk [vmem:[%s273 + $0xf0] sm:$0xff] %vm1885, %v1787
        %1917 = vst.msk [vmem:[%s273 + $0xf8] sm:$0xff] %vm1885, %v1788
        %1918 = vst.msk [vmem:[%s273 + $0x100] sm:$0xff] %vm1885, %v1789
        %1919 = vst.msk [vmem:[%s273 + $0x108] sm:$0xff] %vm1885, %v1790
        %1920 = vst.msk [vmem:[%s273 + $0x110] sm:$0xff] %vm1885, %v1791
        %1921 = vst.msk [vmem:[%s273 + $0x118] sm:$0xff] %vm1885, %v1792
        %1922 = vst.msk [vmem:[%s273 + $0x120] sm:$0xff] %vm1885, %v1793
        %1923 = vst.msk [vmem:[%s273 + $0x128] sm:$0xff] %vm1885, %v1794
        %1924 = vst.msk [vmem:[%s273 + $0x130] sm:$0xff] %vm1885, %v1795
        %1925 = vst.msk [vmem:[%s273 + $0x138] sm:$0xff] %vm1885, %v1796
        %1926 = vst.msk [vmem:[%s273 + $0x140] sm:$0xff] %vm1885, %v1797
        %1927 = vst.msk [vmem:[%s273 + $0x148] sm:$0xff] %vm1885, %v1798
        %1928 = vst.msk [vmem:[%s273 + $0x150] sm:$0xff] %vm1885, %v1799
        %1929 = vst.msk [vmem:[%s273 + $0x158] sm:$0xff] %vm1885, %v1800
        %1930 = vst.msk [vmem:[%s273 + $0x160] sm:$0xff] %vm1885, %v1801
        %1931 = vst.msk [vmem:[%s273 + $0x168] sm:$0xff] %vm1885, %v1802
        %1932 = vst.msk [vmem:[%s273 + $0x170] sm:$0xff] %vm1885, %v1803
        %1933 = vst.msk [vmem:[%s273 + $0x178] sm:$0xff] %vm1885, %v1804
        %1934 = vst.msk [vmem:[%s273 + $0x180] sm:$0xff] %vm1885, %v1805
        %1935 = vst.msk [vmem:[%s273 + $0x188] sm:$0xff] %vm1885, %v1806
        %1936 = vst.msk [vmem:[%s273 + $0x190] sm:$0xff] %vm1885, %v1807
        %1937 = vst.msk [vmem:[%s273 + $0x198] sm:$0xff] %vm1885, %v1808
        %1938 = vst.msk [vmem:[%s273 + $0x1a0] sm:$0xff] %vm1885, %v1809
        %1939 = vst.msk [vmem:[%s273 + $0x1a8] sm:$0xff] %vm1885, %v1810
        %1940 = vst.msk [vmem:[%s273 + $0x1b0] sm:$0xff] %vm1885, %v1811
        %1941 = vst.msk [vmem:[%s273 + $0x1b8] sm:$0xff] %vm1885, %v1812
        %1942 = vst.msk [vmem:[%s273 + $0x1c0] sm:$0xff] %vm1885, %v1813
        %1943 = vst.msk [vmem:[%s273 + $0x1c8] sm:$0xff] %vm1885, %v1814
        %1944 = vst.msk [vmem:[%s273 + $0x1d0] sm:$0xff] %vm1885, %v1815
        %1945 = vst.msk [vmem:[%s273 + $0x1d8] sm:$0xff] %vm1885, %v1816
        %1946 = vst.msk [vmem:[%s273 + $0x1e0] sm:$0xff] %vm1885, %v1817
        %1947 = vst.msk [vmem:[%s273 + $0x1e8] sm:$0xff] %vm1885, %v1818
        %1948 = vst.msk [vmem:[%s273 + $0x1f0] sm:$0xff] %vm1885, %v1819
        %1949 = vst.msk [vmem:[%s273 + $0x1f8] sm:$0xff] %vm1885, %v1820
        %1950 = vst.msk [vmem:[%s273 + $0x200] sm:$0xff] %vm1885, %v1821
        %1951 = vst.msk [vmem:[%s273 + $0x208] sm:$0xff] %vm1885, %v1822
        %1952 = vst.msk [vmem:[%s273 + $0x210] sm:$0xff] %vm1885, %v1823
        %1953 = vst.msk [vmem:[%s273 + $0x218] sm:$0xff] %vm1885, %v1824
        %1954 = vst.msk [vmem:[%s273 + $0x220] sm:$0xff] %vm1885, %v1825
        %1955 = vst.msk [vmem:[%s273 + $0x228] sm:$0xff] %vm1885, %v1826
        %1956 = vst.msk [vmem:[%s273 + $0x230] sm:$0xff] %vm1885, %v1827
        %1957 = vst.msk [vmem:[%s273 + $0x238] sm:$0xff] %vm1885, %v1828
        %1958 = vst.msk [vmem:[%s273 + $0x240] sm:$0xff] %vm1885, %v1829
        %1959 = vst.msk [vmem:[%s273 + $0x248] sm:$0xff] %vm1885, %v1830
        %1960 = vst.msk [vmem:[%s273 + $0x250] sm:$0xff] %vm1885, %v1831
        %1961 = vst.msk [vmem:[%s273 + $0x258] sm:$0xff] %vm1885, %v1832
        %1962 = vst.msk [vmem:[%s273 + $0x260] sm:$0xff] %vm1885, %v1833
        %1963 = vst.msk [vmem:[%s273 + $0x268] sm:$0xff] %vm1885, %v1834
        %1964 = vst.msk [vmem:[%s273 + $0x270] sm:$0xff] %vm1885, %v1835
        %1965 = vst.msk [vmem:[%s273 + $0x278] sm:$0xff] %vm1885, %v1836
        %1966 = vst.msk [vmem:[%s273 + $0x280] sm:$0xff] %vm1885, %v1837
        %1967 = vst.msk [vmem:[%s273 + $0x288] sm:$0xff] %vm1885, %v1838
        %1968 = vst.msk [vmem:[%s273 + $0x290] sm:$0xff] %vm1885, %v1839
        %1969 = vst.msk [vmem:[%s273 + $0x298] sm:$0xff] %vm1885, %v1840
        %1970 = vst.msk [vmem:[%s273 + $0x2a0] sm:$0xff] %vm1885, %v1841
        %1971 = vst.msk [vmem:[%s273 + $0x2a8] sm:$0xff] %vm1885, %v1842
        %1972 = vst.msk [vmem:[%s273 + $0x2b0] sm:$0xff] %vm1885, %v1843
        %1973 = vst.msk [vmem:[%s273 + $0x2b8] sm:$0xff] %vm1885, %v1844
        %1974 = vst.msk [vmem:[%s273 + $0x2c0] sm:$0xff] %vm1885, %v1845
        %1975 = vst.msk [vmem:[%s273 + $0x2c8] sm:$0xff] %vm1885, %v1846
        %1976 = vst.msk [vmem:[%s273 + $0x2d0] sm:$0xff] %vm1885, %v1847
        %1977 = vst.msk [vmem:[%s273 + $0x2d8] sm:$0xff] %vm1885, %v1848
        %1978 = vst.msk [vmem:[%s273 + $0x2e0] sm:$0xff] %vm1885, %v1849
        %1979 = vst.msk [vmem:[%s273 + $0x2e8] sm:$0xff] %vm1885, %v1850
        %1980 = vst.msk [vmem:[%s273 + $0x2f0] sm:$0xff] %vm1885, %v1851
        %1981 = vst.msk [vmem:[%s273 + $0x2f8] sm:$0xff] %vm1885, %v1852
        %1982 = vst.msk [vmem:[%s273 + $0x300] sm:$0xff] %vm1885, %v1853
        %1983 = vst.msk [vmem:[%s273 + $0x308] sm:$0xff] %vm1885, %v1854
        %1984 = vst.msk [vmem:[%s273 + $0x310] sm:$0xff] %vm1885, %v1855
        %1985 = vst.msk [vmem:[%s273 + $0x318] sm:$0xff] %vm1885, %v1856
        %1986 = vst.msk [vmem:[%s273 + $0x320] sm:$0xff] %vm1885, %v1857
        %1987 = vst.msk [vmem:[%s273 + $0x328] sm:$0xff] %vm1885, %v1858
        %1988 = vst.msk [vmem:[%s273 + $0x330] sm:$0xff] %vm1885, %v1859
        %1989 = vst.msk [vmem:[%s273 + $0x338] sm:$0xff] %vm1885, %v1860
        %1990 = vst.msk [vmem:[%s273 + $0x340] sm:$0xff] %vm1885, %v1861
        %1991 = vst.msk [vmem:[%s273 + $0x348] sm:$0xff] %vm1885, %v1862
        %1992 = vst.msk [vmem:[%s273 + $0x350] sm:$0xff] %vm1885, %v1863
        %1993 = vst.msk [vmem:[%s273 + $0x358] sm:$0xff] %vm1885, %v1864
        %1994 = vst.msk [vmem:[%s273 + $0x360] sm:$0xff] %vm1885, %v1865
        %1995 = vst.msk [vmem:[%s273 + $0x368] sm:$0xff] %vm1885, %v1866
        %1996 = vst.msk [vmem:[%s273 + $0x370] sm:$0xff] %vm1885, %v1867
        %1997 = vst.msk [vmem:[%s273 + $0x378] sm:$0xff] %vm1885, %v1868
        %1998 = vst.msk [vmem:[%s273 + $0x380] sm:$0xff] %vm1885, %v1869
        %1999 = vst.msk [vmem:[%s273 + $0x388] sm:$0xff] %vm1885, %v1870
        %2000 = vst.msk [vmem:[%s273 + $0x390] sm:$0xff] %vm1885, %v1871
        %2001 = vst.msk [vmem:[%s273 + $0x398] sm:$0xff] %vm1885, %v1872
        %2002 = vst.msk [vmem:[%s273 + $0x3a0] sm:$0xff] %vm1885, %v1873
        %2003 = vst.msk [vmem:[%s273 + $0x3a8] sm:$0xff] %vm1885, %v1874
        %2004 = vst.msk [vmem:[%s273 + $0x3b0] sm:$0xff] %vm1885, %v1875
        %2005 = vst.msk [vmem:[%s273 + $0x3b8] sm:$0xff] %vm1885, %v1876
        %2006 = vst.msk [vmem:[%s273 + $0x3c0] sm:$0xff] %vm1885, %v1877
        %2007 = vst.msk [vmem:[%s273 + $0x3c8] sm:$0xff] %vm1885, %v1878
        %2008 = vst.msk [vmem:[%s273 + $0x3d0] sm:$0xff] %vm1885, %v1879
        %2009 = vst.msk [vmem:[%s273 + $0x3d8] sm:$0xff] %vm1885, %v1880
        %2010 = vst.msk [vmem:[%s273 + $0x3e0] sm:$0xff] %vm1885, %v1881
        %2011 = vst.msk [vmem:[%s273 + $0x3e8] sm:$0xff] %vm1885, %v1882
        %2012 = vst.msk [vmem:[%s273 + $0x3f0] sm:$0xff] %vm1885, %v1883
        %2013 = vst.msk [vmem:[%s273 + $0x3f8] sm:$0xff] %vm1885, %v1884
        %s2014 = sand.u32 %s136, 1
        %s2015 = scalar_lea.sflag [#allocation4], %s2014
        %s2016 = sand.u32 %s136, 1
        %s2017 = smul.addr %s2016, 1024
        %s2018 = scalar_lea.vmem [#allocation10], %s2017
        // Predicated region
        $region53: #{up_conv_forward.3} parent=35 // pred_check
          %p2019 = pneg %p146
        $region54: #{up_conv_forward.3} parent=35 // pred_check_branch
          %2021 = sbr.rel (%p2019) target = $region56
        $region55: #{up_conv_forward.3} parent=35 // pred_region
          %s2022 = smul.u32 32, %s28
          %s2024 = ssub.s32 16384, 16384
          %2025 = vsyncadd %s2015, %s2024
          %s2026 = smul.addr %s2022, 4
          %s2027 = smul.addr %s27, 128
          %s2028 = sadd.s32 %s2026, %s2027
          %s2029 = smul.addr %s2028, 128
          %s2030 = scalar_lea.hbm %s4, %s2029
          %s2031 = sshll.u32 %s2018, 4
          %s2032 = int_to_ptr.vmem [resolvable:$true] %s2031
          %2037 = dma.vmem_to_hbm [thread:$0]  %s2032, 16384, %s2030, %s2015, 128, 128, 8
        $region56: #{up_conv_forward.3} parent=35 // pred_fallthru
          _
      $region36: #{up_conv_forward.3} parent=5 // pred_fallthru
        _
      %p2038 = scmp.le.s32.totalorder 2, %s18
      // Predicated region
      $region57: #{up_conv_forward.3} parent=5 // pred_check
        %p2039 = pneg %p2038
      $region58: #{up_conv_forward.3} parent=5 // pred_check_branch
        %2041 = sbr.rel (%p2039) target = $region60
      $region59: #{up_conv_forward.3} parent=5 // pred_region
        %s2042 = ssub.s32 %s18, 2
        // Predicated region
        $region61: #{up_conv_forward.3} parent=59 // pred_check
          %p2043 = pneg %p152
        $region62: #{up_conv_forward.3} parent=59 // pred_check_branch
          %2045 = sbr.rel (%p2043) target = $region64
        $region63: #{up_conv_forward.3} parent=59 // pred_region
          %s2046 = sand.u32 %s137, 1
          %s2047 = scalar_lea.sflag [#allocation4], %s2046
          %s2048 = sand.u32 %s137, 1
          %s2049 = smul.addr %s2048, 1024
          %s2050 = scalar_lea.vmem [#allocation10], %s2049
          %2051 = dma.done %s2047, 16384
        $region64: #{up_conv_forward.3} parent=59 // pred_fallthru
          _
      $region60: #{up_conv_forward.3} parent=5 // pred_fallthru
        _
    $region6: #{up_conv_forward.3} parent=1 // loop_footer
      %s22 = sadd.s32 1, %s18
    $region7: #{up_conv_forward.3} parent=1 // loop_footer_branch
      %17 = sbr.rel target = $region3
    $region8: #{up_conv_forward.3} parent=1 // loop_exit
      _
    %2052 = vsyncpa [#allocation3], 1
    %s2053 = scalar_lea.sflag [#allocation3], 1
    %2054 = vsyncpa %s2053, 1
    %2055 = vsyncpa [#allocation6], 1
    %2056 = vsyncpa [#allocation9], 1
    %2057 = vsyncpa [#allocation4], 1
    %s2058 = scalar_lea.sflag [#allocation4], 1
    %2059 = vsyncpa %s2058, 1

</llo_original>
